<compile_context>
chip_gen: v6e
topology: v6e:2x2x1
jax: 0.10.0
libtpu: 0.0.40
codegen_flags: <defaults>
</compile_context>

<pallas_src>
import functools

import jax
import jax.numpy as jnp
from jax.experimental import pallas as pl
from jax.experimental.pallas import tpu as pltpu

SQRT2 = 1.4142135623730951


def _gelu_exact(x):
    # PyTorch nn.GELU() default = exact (erf-based) GELU, computed in f32.
    return 0.5 * x * (1.0 + jax.lax.erf(x / SQRT2))


def encoder_kernel(x_ref, wqkv_ref, bqkv_ref, wo_ref, bo_ref, w1_ref, b1_ref,
                   w2_ref, b2_ref, o_ref, qh_s, kh_s, vh_s, attn_s, *, head):
    bt, n, d = x_ref.shape
    dh = d // head
    scale = 1.0 / (d ** 0.5)          # PyTorch divides by sqrt(feats), not sqrt(d_head)

    x = x_ref[...]                    # (bt, n, d) f32
    x2 = x.reshape(bt * n, d)         # merge leading dims only (layout-preserving)

    # ---- fused QKV projection: one wide bf16 MXU matmul, f32 accumulate ----
    qkv = jnp.dot(x2.astype(jnp.bfloat16), wqkv_ref[...],
                  preferred_element_type=jnp.float32) + bqkv_ref[...]   # (bt*n, 3d) f32
    qkv = qkv.reshape(bt, n, 3 * d)

    # ---- regroup heads into (head, bt, n, dh) bf16 VMEM scratch (static slices) ----
    # `head` is small and static -> unrolls at trace time; scale folded into Q here.
    for h in range(head):
        off = h * dh
        qh_s[h] = (qkv[:, :, off:off + dh] * scale).astype(jnp.bfloat16)
        kh_s[h] = qkv[:, :, d + off:d + off + dh].astype(jnp.bfloat16)
        vh_s[h] = qkv[:, :, 2 * d + off:2 * d + off + dh].astype(jnp.bfloat16)

    qh = qh_s[...].reshape(head * bt, n, dh)
    kh = kh_s[...].reshape(head * bt, n, dh)
    vh = vh_s[...].reshape(head * bt, n, dh)

    # ---- head-batched attention: two batched MXU matmuls + f32 softmax ----
    s = jnp.einsum('bnd,bmd->bnm', qh, kh,
                   preferred_element_type=jnp.float32)          # (head*bt, n, n) f32
    s = s - jnp.max(s, axis=-1, keepdims=True)
    p = jnp.exp(s)
    p = p * pl.reciprocal(jnp.sum(p, axis=-1, keepdims=True), approx=True)
    attn = jnp.einsum('bnm,bmd->bnd', p.astype(jnp.bfloat16), vh,
                      preferred_element_type=jnp.float32)       # (head*bt, n, dh) f32

    # ---- write heads back once into a (bt, n, head*dh) scratch (no value concat) ----
    attn = attn.reshape(head, bt, n, dh)
    for h in range(head):
        attn_s[:, :, h * dh:(h + 1) * dh] = attn[h].astype(jnp.bfloat16)
    a2 = attn_s[...].reshape(bt * n, d)                         # bf16 (bt*n, d)

    # ---- output projection + residual 1 (f32) ----
    msa = jnp.dot(a2, wo_ref[...], preferred_element_type=jnp.float32) + bo_ref[...]
    out1 = msa + x2

    # ---- 2-layer GELU MLP + residual 2 ----
    hid = _gelu_exact(jnp.dot(out1.astype(jnp.bfloat16), w1_ref[...],
                              preferred_element_type=jnp.float32) + b1_ref[...])
    mlp = _gelu_exact(jnp.dot(hid.astype(jnp.bfloat16), w2_ref[...],
                              preferred_element_type=jnp.float32) + b2_ref[...])
    o_ref[...] = (mlp + out1).reshape(bt, n, d).astype(o_ref.dtype)


def _pick_batch_tile(b, cap=8):
    for bt in range(min(b, cap), 0, -1):
        if b % bt == 0:
            return bt
    return 1


def _vmem_limit_bytes(bt, n, d, hid, head):
    dh = d // head
    f32, bf16 = 4, 2
    act = bt * n * (2 * d * f32 * 2 + 3 * d * f32 + hid * f32 + 3 * d * f32)
    attn = head * bt * n * (3 * dh * bf16 + dh * f32) + 2 * head * bt * n * n * f32
    wts = 2 * bf16 * (3 * d * d + d * d + 2 * d * hid) + 2 * f32 * (5 * d + hid)
    est = 3 * (act + attn + wts) + (4 << 20)
    # Clamp: generous for small/medium shapes, but never above what every chip
    # generation (incl. v7x's 64 MiB physical VMEM) can provide.
    return int(min(max(est, 16 << 20), 48 << 20))


def transformer_encoder(x, params, *, head, batch_tile=None):
    B, N, D = x.shape
    Hm = params["w1"].shape[1]
    assert D % head == 0
    dh = D // head

    bt = batch_tile if batch_tile is not None else _pick_batch_tile(B)
    assert B % bt == 0

    # Weight prep (one-time): fuse QKV, cast weights to bf16 (halves HBM->VMEM
    # traffic and VMEM residency); biases stay f32 (added post-matmul in f32).
    wqkv = jnp.concatenate([params["wq"], params["wk"], params["wv"]],
                           axis=1).astype(jnp.bfloat16)            # (D, 3D)
    bqkv = jnp.concatenate([params["bq"], params["bk"], params["bv"]], axis=1)  # (1, 3D)
    wo = params["wo"].astype(jnp.bfloat16)
    w1 = params["w1"].astype(jnp.bfloat16)
    w2 = params["w2"].astype(jnp.bfloat16)
    weights = [wqkv, bqkv, wo, params["bo"], w1, params["b1"], w2, params["b2"]]

    def wspec(arr):
        rank = arr.ndim
        return pl.BlockSpec(arr.shape, lambda i, _r=rank: (0,) * _r)

    in_specs = [pl.BlockSpec((bt, N, D), lambda i: (i, 0, 0))]
    in_specs += [wspec(w) for w in weights]
    out_spec = pl.BlockSpec((bt, N, D), lambda i: (i, 0, 0))

    scratch_shapes = [
        pltpu.VMEM((head, bt, N, dh), jnp.bfloat16),   # Q, head-major
        pltpu.VMEM((head, bt, N, dh), jnp.bfloat16),   # K
        pltpu.VMEM((head, bt, N, dh), jnp.bfloat16),   # V
        pltpu.VMEM((bt, N, D), jnp.bfloat16),          # attention output, head-concat
    ]

    return pl.pallas_call(
        functools.partial(encoder_kernel, head=head),
        out_shape=jax.ShapeDtypeStruct((B, N, D), x.dtype),
        grid_spec=pltpu.PrefetchScalarGridSpec(
            num_scalar_prefetch=0,
            grid=(B // bt,),
            in_specs=in_specs,
            out_specs=out_spec,
            scratch_shapes=scratch_shapes,
        ),
        compiler_params=pltpu.CompilerParams(
            dimension_semantics=("parallel",),
            vmem_limit_bytes=_vmem_limit_bytes(bt, N, D, Hm, head),
        ),
    )(x, *weights)


def reference(x, p, *, head):
    B, N, D = x.shape
    dh = D // head
    q = x @ p["wq"] + p["bq"][0]
    k = x @ p["wk"] + p["bk"][0]
    v = x @ p["wv"] + p["bv"][0]
    q = q.reshape(B, N, head, dh).transpose(0, 2, 1, 3)
    k = k.reshape(B, N, head, dh).transpose(0, 2, 1, 3)
    v = v.reshape(B, N, head, dh).transpose(0, 2, 1, 3)
    attn_matrix = jnp.einsum("bhnd,bhmd->bhnm", q, k)
    score = jax.nn.softmax(attn_matrix / (D ** 0.5), axis=-1)
    attn = jnp.einsum("bhnm,bhmd->bnhd", score, v).reshape(B, N, D)
    msa = attn @ p["wo"] + p["bo"][0]
    out1 = msa + x
    hid = jax.nn.gelu(out1 @ p["w1"] + p["b1"][0], approximate=False)
    mlp = jax.nn.gelu(hid @ p["w2"] + p["b2"][0], approximate=False)
    return mlp + out1


def init_params(key, feats, mlp_hidden):
    keys = jax.random.split(key, 12)
    s = 0.05

    def lin(kw, kb, fan_in, fan_out):
        w = jax.random.normal(kw, (fan_in, fan_out), jnp.float32) * s
        b = jax.random.normal(kb, (1, fan_out), jnp.float32) * s
        return w, b

    wq, bq = lin(keys[0], keys[1], feats, feats)
    wk, bk = lin(keys[2], keys[3], feats, feats)
    wv, bv = lin(keys[4], keys[5], feats, feats)
    wo, bo = lin(keys[6], keys[7], feats, feats)
    w1, b1 = lin(keys[8], keys[9], feats, mlp_hidden)
    w2, b2 = lin(keys[10], keys[11], mlp_hidden, feats)
    return dict(wq=wq, bq=bq, wk=wk, bk=bk, wv=wv, bv=bv, wo=wo, bo=bo,
                w1=w1, b1=b1, w2=w2, b2=b2)


if __name__ == "__main__":
    B, N, FEATS, HEAD, MLP_HIDDEN = 2, 8, 32, 8, 64

    key = jax.random.PRNGKey(0)
    k_x, k_p = jax.random.split(key)
    x = jax.random.normal(k_x, (B, N, FEATS), jnp.float32)
    params = init_params(k_p, FEATS, MLP_HIDDEN)

    out = transformer_encoder(x, params, head=HEAD)
    out = jax.block_until_ready(out)

    ref = reference(x, params, head=HEAD)
    assert out.shape == (B, N, FEATS)
    # Tolerance widened for bf16 MXU inputs (f32 accumulation) + approx reciprocal.
    assert jnp.allclose(out, ref, atol=2e-2, rtol=2e-2), float(jnp.max(jnp.abs(out - ref)))

    print("KERNEL_OK")
</pallas_src>

<mosaic_0001>
module attributes {stable_mosaic.version = 11 : i64} {
  func.func @encoder_kernel(%arg0: i32, %arg1: memref<2x8x32xf32, #tpu.memory_space<vmem>>, %arg2: memref<32x96xbf16, #tpu.memory_space<vmem>>, %arg3: memref<1x96xf32, #tpu.memory_space<vmem>>, %arg4: memref<32x32xbf16, #tpu.memory_space<vmem>>, %arg5: memref<1x32xf32, #tpu.memory_space<vmem>>, %arg6: memref<32x64xbf16, #tpu.memory_space<vmem>>, %arg7: memref<1x64xf32, #tpu.memory_space<vmem>>, %arg8: memref<64x32xbf16, #tpu.memory_space<vmem>>, %arg9: memref<1x32xf32, #tpu.memory_space<vmem>>, %arg10: memref<2x8x32xf32, #tpu.memory_space<vmem>>, %arg11: memref<8x2x8x4xbf16, #tpu.memory_space<vmem>>, %arg12: memref<8x2x8x4xbf16, #tpu.memory_space<vmem>>, %arg13: memref<8x2x8x4xbf16, #tpu.memory_space<vmem>>, %arg14: memref<2x8x32xbf16, #tpu.memory_space<vmem>>) attributes {dimension_semantics = [#tpu.dimension_semantics<parallel>], iteration_bounds = array<i64: 1>, scalar_prefetch = 0 : i64, scratch_operands = 4 : i64, tpu.core_type = #tpu.core_type<tc>, window_params = [{transform_indices = @transform_0, window_bounds = array<i64: 2, 8, 32>}, {pipeline_mode = #tpu.pipeline_mode<synchronous>, transform_indices = @transform_1, window_bounds = array<i64: 32, 96>}, {pipeline_mode = #tpu.pipeline_mode<synchronous>, transform_indices = @transform_2, window_bounds = array<i64: 1, 96>}, {pipeline_mode = #tpu.pipeline_mode<synchronous>, transform_indices = @transform_3, window_bounds = array<i64: 32, 32>}, {pipeline_mode = #tpu.pipeline_mode<synchronous>, transform_indices = @transform_4, window_bounds = array<i64: 1, 32>}, {pipeline_mode = #tpu.pipeline_mode<synchronous>, transform_indices = @transform_5, window_bounds = array<i64: 32, 64>}, {pipeline_mode = #tpu.pipeline_mode<synchronous>, transform_indices = @transform_6, window_bounds = array<i64: 1, 64>}, {pipeline_mode = #tpu.pipeline_mode<synchronous>, transform_indices = @transform_7, window_bounds = array<i64: 64, 32>}, {pipeline_mode = #tpu.pipeline_mode<synchronous>, transform_indices = @transform_8, window_bounds = array<i64: 1, 32>}, {transform_indices = @transform_9, window_bounds = array<i64: 2, 8, 32>}]} {
    %c0 = arith.constant 0 : index
    %c0_0 = arith.constant 0 : index
    %c0_1 = arith.constant 0 : index
    %0 = vector.load %arg1[%c0, %c0_0, %c0_1] : memref<2x8x32xf32, #tpu.memory_space<vmem>>, vector<2x8x32xf32>
    %1 = vector.shape_cast %0 : vector<2x8x32xf32> to vector<16x32xf32>
    %2 = arith.truncf %1 : vector<16x32xf32> to vector<16x32xbf16>
    %c0_2 = arith.constant 0 : index
    %c0_3 = arith.constant 0 : index
    %3 = vector.load %arg2[%c0_2, %c0_3] : memref<32x96xbf16, #tpu.memory_space<vmem>>, vector<32x96xbf16>
    %cst = arith.constant dense<0.000000e+00> : vector<16x96xf32>
    %4 = tpu.matmul %2, %3, %cst {dimension_numbers = #tpu.dot_dimension_numbers<[1], [0], [0], [1], [0, 0, 1, 1], [], []>} : vector<16x32xbf16>, vector<32x96xbf16>, vector<16x96xf32> -> vector<16x96xf32>
    %c0_4 = arith.constant 0 : index
    %c0_5 = arith.constant 0 : index
    %5 = vector.load %arg3[%c0_4, %c0_5] : memref<1x96xf32, #tpu.memory_space<vmem>>, vector<1x96xf32>
    %6 = vector.broadcast %5 : vector<1x96xf32> to vector<16x96xf32>
    %7 = arith.addf %4, %6 : vector<16x96xf32>
    %8 = vector.shape_cast %7 : vector<16x96xf32> to vector<2x8x96xf32>
    %9 = vector.extract_strided_slice %8 {offsets = [0, 0, 0], sizes = [2, 8, 4], strides = [1, 1, 1]} : vector<2x8x96xf32> to vector<2x8x4xf32>
    %cst_6 = arith.constant 0.176776692 : f32
    %10 = vector.broadcast %cst_6 : f32 to vector<2x8x4xf32>
    %11 = arith.mulf %9, %10 : vector<2x8x4xf32>
    %12 = arith.truncf %11 : vector<2x8x4xf32> to vector<2x8x4xbf16>
    %c0_7 = arith.constant 0 : index
    %c0_8 = arith.constant 0 : index
    %c0_9 = arith.constant 0 : index
    %c0_10 = arith.constant 0 : index
    %13 = vector.load %arg11[%c0_7, %c0_8, %c0_9, %c0_10] : memref<8x2x8x4xbf16, #tpu.memory_space<vmem>>, vector<1x2x8x4xbf16>
    %14 = vector.shape_cast %13 : vector<1x2x8x4xbf16> to vector<2x8x4xbf16>
    %15 = vector.shape_cast %12 : vector<2x8x4xbf16> to vector<1x2x8x4xbf16>
    tpu.vector_store %arg11[%c0_7, %c0_8, %c0_9, %c0_10], %15 {strides = array<i32>} : memref<8x2x8x4xbf16, #tpu.memory_space<vmem>>, vector<1x2x8x4xbf16>,
    %16 = vector.extract_strided_slice %8 {offsets = [0, 0, 32], sizes = [2, 8, 4], strides = [1, 1, 1]} : vector<2x8x96xf32> to vector<2x8x4xf32>
    %17 = arith.truncf %16 : vector<2x8x4xf32> to vector<2x8x4xbf16>
    %c0_11 = arith.constant 0 : index
    %c0_12 = arith.constant 0 : index
    %c0_13 = arith.constant 0 : index
    %c0_14 = arith.constant 0 : index
    %18 = vector.load %arg12[%c0_11, %c0_12, %c0_13, %c0_14] : memref<8x2x8x4xbf16, #tpu.memory_space<vmem>>, vector<1x2x8x4xbf16>
    %19 = vector.shape_cast %18 : vector<1x2x8x4xbf16> to vector<2x8x4xbf16>
    %20 = vector.shape_cast %17 : vector<2x8x4xbf16> to vector<1x2x8x4xbf16>
    tpu.vector_store %arg12[%c0_11, %c0_12, %c0_13, %c0_14], %20 {strides = array<i32>} : memref<8x2x8x4xbf16, #tpu.memory_space<vmem>>, vector<1x2x8x4xbf16>,
    %21 = vector.extract_strided_slice %8 {offsets = [0, 0, 64], sizes = [2, 8, 4], strides = [1, 1, 1]} : vector<2x8x96xf32> to vector<2x8x4xf32>
    %22 = arith.truncf %21 : vector<2x8x4xf32> to vector<2x8x4xbf16>
    %c0_15 = arith.constant 0 : index
    %c0_16 = arith.constant 0 : index
    %c0_17 = arith.constant 0 : index
    %c0_18 = arith.constant 0 : index
    %23 = vector.load %arg13[%c0_15, %c0_16, %c0_17, %c0_18] : memref<8x2x8x4xbf16, #tpu.memory_space<vmem>>, vector<1x2x8x4xbf16>
    %24 = vector.shape_cast %23 : vector<1x2x8x4xbf16> to vector<2x8x4xbf16>
    %25 = vector.shape_cast %22 : vector<2x8x4xbf16> to vector<1x2x8x4xbf16>
    tpu.vector_store %arg13[%c0_15, %c0_16, %c0_17, %c0_18], %25 {strides = array<i32>} : memref<8x2x8x4xbf16, #tpu.memory_space<vmem>>, vector<1x2x8x4xbf16>,
    %26 = vector.extract_strided_slice %8 {offsets = [0, 0, 4], sizes = [2, 8, 4], strides = [1, 1, 1]} : vector<2x8x96xf32> to vector<2x8x4xf32>
    %cst_19 = arith.constant 0.176776692 : f32
    %27 = vector.broadcast %cst_19 : f32 to vector<2x8x4xf32>
    %28 = arith.mulf %26, %27 : vector<2x8x4xf32>
    %29 = arith.truncf %28 : vector<2x8x4xf32> to vector<2x8x4xbf16>
    %c1 = arith.constant 1 : index
    %c0_20 = arith.constant 0 : index
    %c0_21 = arith.constant 0 : index
    %c0_22 = arith.constant 0 : index
    %30 = vector.load %arg11[%c1, %c0_20, %c0_21, %c0_22] : memref<8x2x8x4xbf16, #tpu.memory_space<vmem>>, vector<1x2x8x4xbf16>
    %31 = vector.shape_cast %30 : vector<1x2x8x4xbf16> to vector<2x8x4xbf16>
    %32 = vector.shape_cast %29 : vector<2x8x4xbf16> to vector<1x2x8x4xbf16>
    tpu.vector_store %arg11[%c1, %c0_20, %c0_21, %c0_22], %32 {strides = array<i32>} : memref<8x2x8x4xbf16, #tpu.memory_space<vmem>>, vector<1x2x8x4xbf16>,
    %33 = vector.extract_strided_slice %8 {offsets = [0, 0, 36], sizes = [2, 8, 4], strides = [1, 1, 1]} : vector<2x8x96xf32> to vector<2x8x4xf32>
    %34 = arith.truncf %33 : vector<2x8x4xf32> to vector<2x8x4xbf16>
    %c1_23 = arith.constant 1 : index
    %c0_24 = arith.constant 0 : index
    %c0_25 = arith.constant 0 : index
    %c0_26 = arith.constant 0 : index
    %35 = vector.load %arg12[%c1_23, %c0_24, %c0_25, %c0_26] : memref<8x2x8x4xbf16, #tpu.memory_space<vmem>>, vector<1x2x8x4xbf16>
    %36 = vector.shape_cast %35 : vector<1x2x8x4xbf16> to vector<2x8x4xbf16>
    %37 = vector.shape_cast %34 : vector<2x8x4xbf16> to vector<1x2x8x4xbf16>
    tpu.vector_store %arg12[%c1_23, %c0_24, %c0_25, %c0_26], %37 {strides = array<i32>} : memref<8x2x8x4xbf16, #tpu.memory_space<vmem>>, vector<1x2x8x4xbf16>,
    %38 = vector.extract_strided_slice %8 {offsets = [0, 0, 68], sizes = [2, 8, 4], strides = [1, 1, 1]} : vector<2x8x96xf32> to vector<2x8x4xf32>
    %39 = arith.truncf %38 : vector<2x8x4xf32> to vector<2x8x4xbf16>
    %c1_27 = arith.constant 1 : index
    %c0_28 = arith.constant 0 : index
    %c0_29 = arith.constant 0 : index
    %c0_30 = arith.constant 0 : index
    %40 = vector.load %arg13[%c1_27, %c0_28, %c0_29, %c0_30] : memref<8x2x8x4xbf16, #tpu.memory_space<vmem>>, vector<1x2x8x4xbf16>
    %41 = vector.shape_cast %40 : vector<1x2x8x4xbf16> to vector<2x8x4xbf16>
    %42 = vector.shape_cast %39 : vector<2x8x4xbf16> to vector<1x2x8x4xbf16>
    tpu.vector_store %arg13[%c1_27, %c0_28, %c0_29, %c0_30], %42 {strides = array<i32>} : memref<8x2x8x4xbf16, #tpu.memory_space<vmem>>, vector<1x2x8x4xbf16>,
    %43 = vector.extract_strided_slice %8 {offsets = [0, 0, 8], sizes = [2, 8, 4], strides = [1, 1, 1]} : vector<2x8x96xf32> to vector<2x8x4xf32>
    %cst_31 = arith.constant 0.176776692 : f32
    %44 = vector.broadcast %cst_31 : f32 to vector<2x8x4xf32>
    %45 = arith.mulf %43, %44 : vector<2x8x4xf32>
    %46 = arith.truncf %45 : vector<2x8x4xf32> to vector<2x8x4xbf16>
    %c2 = arith.constant 2 : index
    %c0_32 = arith.constant 0 : index
    %c0_33 = arith.constant 0 : index
    %c0_34 = arith.constant 0 : index
    %47 = vector.load %arg11[%c2, %c0_32, %c0_33, %c0_34] : memref<8x2x8x4xbf16, #tpu.memory_space<vmem>>, vector<1x2x8x4xbf16>
    %48 = vector.shape_cast %47 : vector<1x2x8x4xbf16> to vector<2x8x4xbf16>
    %49 = vector.shape_cast %46 : vector<2x8x4xbf16> to vector<1x2x8x4xbf16>
    tpu.vector_store %arg11[%c2, %c0_32, %c0_33, %c0_34], %49 {strides = array<i32>} : memref<8x2x8x4xbf16, #tpu.memory_space<vmem>>, vector<1x2x8x4xbf16>,
    %50 = vector.extract_strided_slice %8 {offsets = [0, 0, 40], sizes = [2, 8, 4], strides = [1, 1, 1]} : vector<2x8x96xf32> to vector<2x8x4xf32>
    %51 = arith.truncf %50 : vector<2x8x4xf32> to vector<2x8x4xbf16>
    %c2_35 = arith.constant 2 : index
    %c0_36 = arith.constant 0 : index
    %c0_37 = arith.constant 0 : index
    %c0_38 = arith.constant 0 : index
    %52 = vector.load %arg12[%c2_35, %c0_36, %c0_37, %c0_38] : memref<8x2x8x4xbf16, #tpu.memory_space<vmem>>, vector<1x2x8x4xbf16>
    %53 = vector.shape_cast %52 : vector<1x2x8x4xbf16> to vector<2x8x4xbf16>
    %54 = vector.shape_cast %51 : vector<2x8x4xbf16> to vector<1x2x8x4xbf16>
    tpu.vector_store %arg12[%c2_35, %c0_36, %c0_37, %c0_38], %54 {strides = array<i32>} : memref<8x2x8x4xbf16, #tpu.memory_space<vmem>>, vector<1x2x8x4xbf16>,
    %55 = vector.extract_strided_slice %8 {offsets = [0, 0, 72], sizes = [2, 8, 4], strides = [1, 1, 1]} : vector<2x8x96xf32> to vector<2x8x4xf32>
    %56 = arith.truncf %55 : vector<2x8x4xf32> to vector<2x8x4xbf16>
    %c2_39 = arith.constant 2 : index
    %c0_40 = arith.constant 0 : index
    %c0_41 = arith.constant 0 : index
    %c0_42 = arith.constant 0 : index
    %57 = vector.load %arg13[%c2_39, %c0_40, %c0_41, %c0_42] : memref<8x2x8x4xbf16, #tpu.memory_space<vmem>>, vector<1x2x8x4xbf16>
    %58 = vector.shape_cast %57 : vector<1x2x8x4xbf16> to vector<2x8x4xbf16>
    %59 = vector.shape_cast %56 : vector<2x8x4xbf16> to vector<1x2x8x4xbf16>
    tpu.vector_store %arg13[%c2_39, %c0_40, %c0_41, %c0_42], %59 {strides = array<i32>} : memref<8x2x8x4xbf16, #tpu.memory_space<vmem>>, vector<1x2x8x4xbf16>,
    %60 = vector.extract_strided_slice %8 {offsets = [0, 0, 12], sizes = [2, 8, 4], strides = [1, 1, 1]} : vector<2x8x96xf32> to vector<2x8x4xf32>
    %cst_43 = arith.constant 0.176776692 : f32
    %61 = vector.broadcast %cst_43 : f32 to vector<2x8x4xf32>
    %62 = arith.mulf %60, %61 : vector<2x8x4xf32>
    %63 = arith.truncf %62 : vector<2x8x4xf32> to vector<2x8x4xbf16>
    %c3 = arith.constant 3 : index
    %c0_44 = arith.constant 0 : index
    %c0_45 = arith.constant 0 : index
    %c0_46 = arith.constant 0 : index
    %64 = vector.load %arg11[%c3, %c0_44, %c0_45, %c0_46] : memref<8x2x8x4xbf16, #tpu.memory_space<vmem>>, vector<1x2x8x4xbf16>
    %65 = vector.shape_cast %64 : vector<1x2x8x4xbf16> to vector<2x8x4xbf16>
    %66 = vector.shape_cast %63 : vector<2x8x4xbf16> to vector<1x2x8x4xbf16>
    tpu.vector_store %arg11[%c3, %c0_44, %c0_45, %c0_46], %66 {strides = array<i32>} : memref<8x2x8x4xbf16, #tpu.memory_space<vmem>>, vector<1x2x8x4xbf16>,
    %67 = vector.extract_strided_slice %8 {offsets = [0, 0, 44], sizes = [2, 8, 4], strides = [1, 1, 1]} : vector<2x8x96xf32> to vector<2x8x4xf32>
    %68 = arith.truncf %67 : vector<2x8x4xf32> to vector<2x8x4xbf16>
    %c3_47 = arith.constant 3 : index
    %c0_48 = arith.constant 0 : index
    %c0_49 = arith.constant 0 : index
    %c0_50 = arith.constant 0 : index
    %69 = vector.load %arg12[%c3_47, %c0_48, %c0_49, %c0_50] : memref<8x2x8x4xbf16, #tpu.memory_space<vmem>>, vector<1x2x8x4xbf16>
    %70 = vector.shape_cast %69 : vector<1x2x8x4xbf16> to vector<2x8x4xbf16>
    %71 = vector.shape_cast %68 : vector<2x8x4xbf16> to vector<1x2x8x4xbf16>
    tpu.vector_store %arg12[%c3_47, %c0_48, %c0_49, %c0_50], %71 {strides = array<i32>} : memref<8x2x8x4xbf16, #tpu.memory_space<vmem>>, vector<1x2x8x4xbf16>,
    %72 = vector.extract_strided_slice %8 {offsets = [0, 0, 76], sizes = [2, 8, 4], strides = [1, 1, 1]} : vector<2x8x96xf32> to vector<2x8x4xf32>
    %73 = arith.truncf %72 : vector<2x8x4xf32> to vector<2x8x4xbf16>
    %c3_51 = arith.constant 3 : index
    %c0_52 = arith.constant 0 : index
    %c0_53 = arith.constant 0 : index
    %c0_54 = arith.constant 0 : index
    %74 = vector.load %arg13[%c3_51, %c0_52, %c0_53, %c0_54] : memref<8x2x8x4xbf16, #tpu.memory_space<vmem>>, vector<1x2x8x4xbf16>
    %75 = vector.shape_cast %74 : vector<1x2x8x4xbf16> to vector<2x8x4xbf16>
    %76 = vector.shape_cast %73 : vector<2x8x4xbf16> to vector<1x2x8x4xbf16>
    tpu.vector_store %arg13[%c3_51, %c0_52, %c0_53, %c0_54], %76 {strides = array<i32>} : memref<8x2x8x4xbf16, #tpu.memory_space<vmem>>, vector<1x2x8x4xbf16>,
    %77 = vector.extract_strided_slice %8 {offsets = [0, 0, 16], sizes = [2, 8, 4], strides = [1, 1, 1]} : vector<2x8x96xf32> to vector<2x8x4xf32>
    %cst_55 = arith.constant 0.176776692 : f32
    %78 = vector.broadcast %cst_55 : f32 to vector<2x8x4xf32>
    %79 = arith.mulf %77, %78 : vector<2x8x4xf32>
    %80 = arith.truncf %79 : vector<2x8x4xf32> to vector<2x8x4xbf16>
    %c4 = arith.constant 4 : index
    %c0_56 = arith.constant 0 : index
    %c0_57 = arith.constant 0 : index
    %c0_58 = arith.constant 0 : index
    %81 = vector.load %arg11[%c4, %c0_56, %c0_57, %c0_58] : memref<8x2x8x4xbf16, #tpu.memory_space<vmem>>, vector<1x2x8x4xbf16>
    %82 = vector.shape_cast %81 : vector<1x2x8x4xbf16> to vector<2x8x4xbf16>
    %83 = vector.shape_cast %80 : vector<2x8x4xbf16> to vector<1x2x8x4xbf16>
    tpu.vector_store %arg11[%c4, %c0_56, %c0_57, %c0_58], %83 {strides = array<i32>} : memref<8x2x8x4xbf16, #tpu.memory_space<vmem>>, vector<1x2x8x4xbf16>,
    %84 = vector.extract_strided_slice %8 {offsets = [0, 0, 48], sizes = [2, 8, 4], strides = [1, 1, 1]} : vector<2x8x96xf32> to vector<2x8x4xf32>
    %85 = arith.truncf %84 : vector<2x8x4xf32> to vector<2x8x4xbf16>
    %c4_59 = arith.constant 4 : index
    %c0_60 = arith.constant 0 : index
    %c0_61 = arith.constant 0 : index
    %c0_62 = arith.constant 0 : index
    %86 = vector.load %arg12[%c4_59, %c0_60, %c0_61, %c0_62] : memref<8x2x8x4xbf16, #tpu.memory_space<vmem>>, vector<1x2x8x4xbf16>
    %87 = vector.shape_cast %86 : vector<1x2x8x4xbf16> to vector<2x8x4xbf16>
    %88 = vector.shape_cast %85 : vector<2x8x4xbf16> to vector<1x2x8x4xbf16>
    tpu.vector_store %arg12[%c4_59, %c0_60, %c0_61, %c0_62], %88 {strides = array<i32>} : memref<8x2x8x4xbf16, #tpu.memory_space<vmem>>, vector<1x2x8x4xbf16>,
    %89 = vector.extract_strided_slice %8 {offsets = [0, 0, 80], sizes = [2, 8, 4], strides = [1, 1, 1]} : vector<2x8x96xf32> to vector<2x8x4xf32>
    %90 = arith.truncf %89 : vector<2x8x4xf32> to vector<2x8x4xbf16>
    %c4_63 = arith.constant 4 : index
    %c0_64 = arith.constant 0 : index
    %c0_65 = arith.constant 0 : index
    %c0_66 = arith.constant 0 : index
    %91 = vector.load %arg13[%c4_63, %c0_64, %c0_65, %c0_66] : memref<8x2x8x4xbf16, #tpu.memory_space<vmem>>, vector<1x2x8x4xbf16>
    %92 = vector.shape_cast %91 : vector<1x2x8x4xbf16> to vector<2x8x4xbf16>
    %93 = vector.shape_cast %90 : vector<2x8x4xbf16> to vector<1x2x8x4xbf16>
    tpu.vector_store %arg13[%c4_63, %c0_64, %c0_65, %c0_66], %93 {strides = array<i32>} : memref<8x2x8x4xbf16, #tpu.memory_space<vmem>>, vector<1x2x8x4xbf16>,
    %94 = vector.extract_strided_slice %8 {offsets = [0, 0, 20], sizes = [2, 8, 4], strides = [1, 1, 1]} : vector<2x8x96xf32> to vector<2x8x4xf32>
    %cst_67 = arith.constant 0.176776692 : f32
    %95 = vector.broadcast %cst_67 : f32 to vector<2x8x4xf32>
    %96 = arith.mulf %94, %95 : vector<2x8x4xf32>
    %97 = arith.truncf %96 : vector<2x8x4xf32> to vector<2x8x4xbf16>
    %c5 = arith.constant 5 : index
    %c0_68 = arith.constant 0 : index
    %c0_69 = arith.constant 0 : index
    %c0_70 = arith.constant 0 : index
    %98 = vector.load %arg11[%c5, %c0_68, %c0_69, %c0_70] : memref<8x2x8x4xbf16, #tpu.memory_space<vmem>>, vector<1x2x8x4xbf16>
    %99 = vector.shape_cast %98 : vector<1x2x8x4xbf16> to vector<2x8x4xbf16>
    %100 = vector.shape_cast %97 : vector<2x8x4xbf16> to vector<1x2x8x4xbf16>
    tpu.vector_store %arg11[%c5, %c0_68, %c0_69, %c0_70], %100 {strides = array<i32>} : memref<8x2x8x4xbf16, #tpu.memory_space<vmem>>, vector<1x2x8x4xbf16>,
    %101 = vector.extract_strided_slice %8 {offsets = [0, 0, 52], sizes = [2, 8, 4], strides = [1, 1, 1]} : vector<2x8x96xf32> to vector<2x8x4xf32>
    %102 = arith.truncf %101 : vector<2x8x4xf32> to vector<2x8x4xbf16>
    %c5_71 = arith.constant 5 : index
    %c0_72 = arith.constant 0 : index
    %c0_73 = arith.constant 0 : index
    %c0_74 = arith.constant 0 : index
    %103 = vector.load %arg12[%c5_71, %c0_72, %c0_73, %c0_74] : memref<8x2x8x4xbf16, #tpu.memory_space<vmem>>, vector<1x2x8x4xbf16>
    %104 = vector.shape_cast %103 : vector<1x2x8x4xbf16> to vector<2x8x4xbf16>
    %105 = vector.shape_cast %102 : vector<2x8x4xbf16> to vector<1x2x8x4xbf16>
    tpu.vector_store %arg12[%c5_71, %c0_72, %c0_73, %c0_74], %105 {strides = array<i32>} : memref<8x2x8x4xbf16, #tpu.memory_space<vmem>>, vector<1x2x8x4xbf16>,
    %106 = vector.extract_strided_slice %8 {offsets = [0, 0, 84], sizes = [2, 8, 4], strides = [1, 1, 1]} : vector<2x8x96xf32> to vector<2x8x4xf32>
    %107 = arith.truncf %106 : vector<2x8x4xf32> to vector<2x8x4xbf16>
    %c5_75 = arith.constant 5 : index
    %c0_76 = arith.constant 0 : index
    %c0_77 = arith.constant 0 : index
    %c0_78 = arith.constant 0 : index
    %108 = vector.load %arg13[%c5_75, %c0_76, %c0_77, %c0_78] : memref<8x2x8x4xbf16, #tpu.memory_space<vmem>>, vector<1x2x8x4xbf16>
    %109 = vector.shape_cast %108 : vector<1x2x8x4xbf16> to vector<2x8x4xbf16>
    %110 = vector.shape_cast %107 : vector<2x8x4xbf16> to vector<1x2x8x4xbf16>
    tpu.vector_store %arg13[%c5_75, %c0_76, %c0_77, %c0_78], %110 {strides = array<i32>} : memref<8x2x8x4xbf16, #tpu.memory_space<vmem>>, vector<1x2x8x4xbf16>,
    %111 = vector.extract_strided_slice %8 {offsets = [0, 0, 24], sizes = [2, 8, 4], strides = [1, 1, 1]} : vector<2x8x96xf32> to vector<2x8x4xf32>
    %cst_79 = arith.constant 0.176776692 : f32
    %112 = vector.broadcast %cst_79 : f32 to vector<2x8x4xf32>
    %113 = arith.mulf %111, %112 : vector<2x8x4xf32>
    %114 = arith.truncf %113 : vector<2x8x4xf32> to vector<2x8x4xbf16>
    %c6 = arith.constant 6 : index
    %c0_80 = arith.constant 0 : index
    %c0_81 = arith.constant 0 : index
    %c0_82 = arith.constant 0 : index
    %115 = vector.load %arg11[%c6, %c0_80, %c0_81, %c0_82] : memref<8x2x8x4xbf16, #tpu.memory_space<vmem>>, vector<1x2x8x4xbf16>
    %116 = vector.shape_cast %115 : vector<1x2x8x4xbf16> to vector<2x8x4xbf16>
    %117 = vector.shape_cast %114 : vector<2x8x4xbf16> to vector<1x2x8x4xbf16>
    tpu.vector_store %arg11[%c6, %c0_80, %c0_81, %c0_82], %117 {strides = array<i32>} : memref<8x2x8x4xbf16, #tpu.memory_space<vmem>>, vector<1x2x8x4xbf16>,
    %118 = vector.extract_strided_slice %8 {offsets = [0, 0, 56], sizes = [2, 8, 4], strides = [1, 1, 1]} : vector<2x8x96xf32> to vector<2x8x4xf32>
    %119 = arith.truncf %118 : vector<2x8x4xf32> to vector<2x8x4xbf16>
    %c6_83 = arith.constant 6 : index
    %c0_84 = arith.constant 0 : index
    %c0_85 = arith.constant 0 : index
    %c0_86 = arith.constant 0 : index
    %120 = vector.load %arg12[%c6_83, %c0_84, %c0_85, %c0_86] : memref<8x2x8x4xbf16, #tpu.memory_space<vmem>>, vector<1x2x8x4xbf16>
    %121 = vector.shape_cast %120 : vector<1x2x8x4xbf16> to vector<2x8x4xbf16>
    %122 = vector.shape_cast %119 : vector<2x8x4xbf16> to vector<1x2x8x4xbf16>
    tpu.vector_store %arg12[%c6_83, %c0_84, %c0_85, %c0_86], %122 {strides = array<i32>} : memref<8x2x8x4xbf16, #tpu.memory_space<vmem>>, vector<1x2x8x4xbf16>,
    %123 = vector.extract_strided_slice %8 {offsets = [0, 0, 88], sizes = [2, 8, 4], strides = [1, 1, 1]} : vector<2x8x96xf32> to vector<2x8x4xf32>
    %124 = arith.truncf %123 : vector<2x8x4xf32> to vector<2x8x4xbf16>
    %c6_87 = arith.constant 6 : index
    %c0_88 = arith.constant 0 : index
    %c0_89 = arith.constant 0 : index
    %c0_90 = arith.constant 0 : index
    %125 = vector.load %arg13[%c6_87, %c0_88, %c0_89, %c0_90] : memref<8x2x8x4xbf16, #tpu.memory_space<vmem>>, vector<1x2x8x4xbf16>
    %126 = vector.shape_cast %125 : vector<1x2x8x4xbf16> to vector<2x8x4xbf16>
    %127 = vector.shape_cast %124 : vector<2x8x4xbf16> to vector<1x2x8x4xbf16>
    tpu.vector_store %arg13[%c6_87, %c0_88, %c0_89, %c0_90], %127 {strides = array<i32>} : memref<8x2x8x4xbf16, #tpu.memory_space<vmem>>, vector<1x2x8x4xbf16>,
    %128 = vector.extract_strided_slice %8 {offsets = [0, 0, 28], sizes = [2, 8, 4], strides = [1, 1, 1]} : vector<2x8x96xf32> to vector<2x8x4xf32>
    %cst_91 = arith.constant 0.176776692 : f32
    %129 = vector.broadcast %cst_91 : f32 to vector<2x8x4xf32>
    %130 = arith.mulf %128, %129 : vector<2x8x4xf32>
    %131 = arith.truncf %130 : vector<2x8x4xf32> to vector<2x8x4xbf16>
    %c7 = arith.constant 7 : index
    %c0_92 = arith.constant 0 : index
    %c0_93 = arith.constant 0 : index
    %c0_94 = arith.constant 0 : index
    %132 = vector.load %arg11[%c7, %c0_92, %c0_93, %c0_94] : memref<8x2x8x4xbf16, #tpu.memory_space<vmem>>, vector<1x2x8x4xbf16>
    %133 = vector.shape_cast %132 : vector<1x2x8x4xbf16> to vector<2x8x4xbf16>
    %134 = vector.shape_cast %131 : vector<2x8x4xbf16> to vector<1x2x8x4xbf16>
    tpu.vector_store %arg11[%c7, %c0_92, %c0_93, %c0_94], %134 {strides = array<i32>} : memref<8x2x8x4xbf16, #tpu.memory_space<vmem>>, vector<1x2x8x4xbf16>,
    %135 = vector.extract_strided_slice %8 {offsets = [0, 0, 60], sizes = [2, 8, 4], strides = [1, 1, 1]} : vector<2x8x96xf32> to vector<2x8x4xf32>
    %136 = arith.truncf %135 : vector<2x8x4xf32> to vector<2x8x4xbf16>
    %c7_95 = arith.constant 7 : index
    %c0_96 = arith.constant 0 : index
    %c0_97 = arith.constant 0 : index
    %c0_98 = arith.constant 0 : index
    %137 = vector.load %arg12[%c7_95, %c0_96, %c0_97, %c0_98] : memref<8x2x8x4xbf16, #tpu.memory_space<vmem>>, vector<1x2x8x4xbf16>
    %138 = vector.shape_cast %137 : vector<1x2x8x4xbf16> to vector<2x8x4xbf16>
    %139 = vector.shape_cast %136 : vector<2x8x4xbf16> to vector<1x2x8x4xbf16>
    tpu.vector_store %arg12[%c7_95, %c0_96, %c0_97, %c0_98], %139 {strides = array<i32>} : memref<8x2x8x4xbf16, #tpu.memory_space<vmem>>, vector<1x2x8x4xbf16>,
    %140 = vector.extract_strided_slice %8 {offsets = [0, 0, 92], sizes = [2, 8, 4], strides = [1, 1, 1]} : vector<2x8x96xf32> to vector<2x8x4xf32>
    %141 = arith.truncf %140 : vector<2x8x4xf32> to vector<2x8x4xbf16>
    %c7_99 = arith.constant 7 : index
    %c0_100 = arith.constant 0 : index
    %c0_101 = arith.constant 0 : index
    %c0_102 = arith.constant 0 : index
    %142 = vector.load %arg13[%c7_99, %c0_100, %c0_101, %c0_102] : memref<8x2x8x4xbf16, #tpu.memory_space<vmem>>, vector<1x2x8x4xbf16>
    %143 = vector.shape_cast %142 : vector<1x2x8x4xbf16> to vector<2x8x4xbf16>
    %144 = vector.shape_cast %141 : vector<2x8x4xbf16> to vector<1x2x8x4xbf16>
    tpu.vector_store %arg13[%c7_99, %c0_100, %c0_101, %c0_102], %144 {strides = array<i32>} : memref<8x2x8x4xbf16, #tpu.memory_space<vmem>>, vector<1x2x8x4xbf16>,
    %c0_103 = arith.constant 0 : index
    %c0_104 = arith.constant 0 : index
    %c0_105 = arith.constant 0 : index
    %c0_106 = arith.constant 0 : index
    %145 = vector.load %arg11[%c0_103, %c0_104, %c0_105, %c0_106] : memref<8x2x8x4xbf16, #tpu.memory_space<vmem>>, vector<8x2x8x4xbf16>
    %146 = vector.shape_cast %145 : vector<8x2x8x4xbf16> to vector<16x8x4xbf16>
    %c0_107 = arith.constant 0 : index
    %c0_108 = arith.constant 0 : index
    %c0_109 = arith.constant 0 : index
    %c0_110 = arith.constant 0 : index
    %147 = vector.load %arg12[%c0_107, %c0_108, %c0_109, %c0_110] : memref<8x2x8x4xbf16, #tpu.memory_space<vmem>>, vector<8x2x8x4xbf16>
    %148 = vector.shape_cast %147 : vector<8x2x8x4xbf16> to vector<16x8x4xbf16>
    %c0_111 = arith.constant 0 : index
    %c0_112 = arith.constant 0 : index
    %c0_113 = arith.constant 0 : index
    %c0_114 = arith.constant 0 : index
    %149 = vector.load %arg13[%c0_111, %c0_112, %c0_113, %c0_114] : memref<8x2x8x4xbf16, #tpu.memory_space<vmem>>, vector<8x2x8x4xbf16>
    %150 = vector.shape_cast %149 : vector<8x2x8x4xbf16> to vector<16x8x4xbf16>
    "tpu.trace_start"() <{level = 10 : i32, message = "bnd,bmd->bnm"}> : () -> ()
    %cst_115 = arith.constant dense<0.000000e+00> : vector<16x8x8xf32>
    %151 = tpu.matmul %146, %148, %cst_115 {dimension_numbers = #tpu.dot_dimension_numbers<[2], [2], [1], [1], [0, 0, 0, 1, 1, 1], [0], [0]>} : vector<16x8x4xbf16>, vector<16x8x4xbf16>, vector<16x8x8xf32> -> vector<16x8x8xf32>
    "tpu.trace_stop"() : () -> ()
    %cst_116 = arith.constant dense<0xFF800000> : vector<16x8xf32>
    %152 = vector.multi_reduction <maximumf>, %151, %cst_116 [2] : vector<16x8x8xf32> to vector<16x8xf32>
    %153 = vector.shape_cast %152 : vector<16x8xf32> to vector<16x8x1xf32>
    %154 = vector.broadcast %153 : vector<16x8x1xf32> to vector<16x8x8xf32>
    %155 = arith.subf %151, %154 : vector<16x8x8xf32>
    %156 = math.exp %155 : vector<16x8x8xf32>
    %cst_117 = arith.constant dense<0.000000e+00> : vector<16x8xf32>
    %157 = vector.multi_reduction <add>, %156, %cst_117 [2] : vector<16x8x8xf32> to vector<16x8xf32>
    %158 = vector.shape_cast %157 : vector<16x8xf32> to vector<16x8x1xf32>
    %159 = tpu.reciprocal %158 {approx = true} : vector<16x8x1xf32> -> vector<16x8x1xf32>
    %160 = vector.broadcast %159 : vector<16x8x1xf32> to vector<16x8x8xf32>
    %161 = arith.mulf %156, %160 : vector<16x8x8xf32>
    %162 = arith.truncf %161 : vector<16x8x8xf32> to vector<16x8x8xbf16>
    "tpu.trace_start"() <{level = 10 : i32, message = "bnm,bmd->bnd"}> : () -> ()
    %cst_118 = arith.constant dense<0.000000e+00> : vector<16x8x4xf32>
    %163 = tpu.matmul %162, %150, %cst_118 {dimension_numbers = #tpu.dot_dimension_numbers<[2], [1], [1], [2], [0, 0, 0, 1, 1, 2], [0], [0]>} : vector<16x8x8xbf16>, vector<16x8x4xbf16>, vector<16x8x4xf32> -> vector<16x8x4xf32>
    "tpu.trace_stop"() : () -> ()
    %164 = vector.shape_cast %163 : vector<16x8x4xf32> to vector<8x2x8x4xf32>
    %165 = vector.extract_strided_slice %164 {offsets = [0, 0, 0, 0], sizes = [1, 2, 8, 4], strides = [1, 1, 1, 1]} : vector<8x2x8x4xf32> to vector<1x2x8x4xf32>
    %166 = vector.shape_cast %165 : vector<1x2x8x4xf32> to vector<2x8x4xf32>
    %167 = arith.truncf %166 : vector<2x8x4xf32> to vector<2x8x4xbf16>
    %c0_119 = arith.constant 0 : index
    %c0_120 = arith.constant 0 : index
    %c0_121 = arith.constant 0 : index
    %168 = vector.load %arg14[%c0_119, %c0_120, %c0_121] : memref<2x8x32xbf16, #tpu.memory_space<vmem>>, vector<2x8x4xbf16>
    tpu.vector_store %arg14[%c0_119, %c0_120, %c0_121], %167 {strides = array<i32>} : memref<2x8x32xbf16, #tpu.memory_space<vmem>>, vector<2x8x4xbf16>,
    %169 = vector.extract_strided_slice %164 {offsets = [1, 0, 0, 0], sizes = [1, 2, 8, 4], strides = [1, 1, 1, 1]} : vector<8x2x8x4xf32> to vector<1x2x8x4xf32>
    %170 = vector.shape_cast %169 : vector<1x2x8x4xf32> to vector<2x8x4xf32>
    %171 = arith.truncf %170 : vector<2x8x4xf32> to vector<2x8x4xbf16>
    %c0_122 = arith.constant 0 : index
    %c0_123 = arith.constant 0 : index
    %c4_124 = arith.constant 4 : index
    %172 = vector.load %arg14[%c0_122, %c0_123, %c4_124] : memref<2x8x32xbf16, #tpu.memory_space<vmem>>, vector<2x8x4xbf16>
    tpu.vector_store %arg14[%c0_122, %c0_123, %c4_124], %171 {strides = array<i32>} : memref<2x8x32xbf16, #tpu.memory_space<vmem>>, vector<2x8x4xbf16>,
    %173 = vector.extract_strided_slice %164 {offsets = [2, 0, 0, 0], sizes = [1, 2, 8, 4], strides = [1, 1, 1, 1]} : vector<8x2x8x4xf32> to vector<1x2x8x4xf32>
    %174 = vector.shape_cast %173 : vector<1x2x8x4xf32> to vector<2x8x4xf32>
    %175 = arith.truncf %174 : vector<2x8x4xf32> to vector<2x8x4xbf16>
    %c0_125 = arith.constant 0 : index
    %c0_126 = arith.constant 0 : index
    %c8 = arith.constant 8 : index
    %176 = vector.load %arg14[%c0_125, %c0_126, %c8] : memref<2x8x32xbf16, #tpu.memory_space<vmem>>, vector<2x8x4xbf16>
    tpu.vector_store %arg14[%c0_125, %c0_126, %c8], %175 {strides = array<i32>} : memref<2x8x32xbf16, #tpu.memory_space<vmem>>, vector<2x8x4xbf16>,
    %177 = vector.extract_strided_slice %164 {offsets = [3, 0, 0, 0], sizes = [1, 2, 8, 4], strides = [1, 1, 1, 1]} : vector<8x2x8x4xf32> to vector<1x2x8x4xf32>
    %178 = vector.shape_cast %177 : vector<1x2x8x4xf32> to vector<2x8x4xf32>
    %179 = arith.truncf %178 : vector<2x8x4xf32> to vector<2x8x4xbf16>
    %c0_127 = arith.constant 0 : index
    %c0_128 = arith.constant 0 : index
    %c12 = arith.constant 12 : index
    %180 = vector.load %arg14[%c0_127, %c0_128, %c12] : memref<2x8x32xbf16, #tpu.memory_space<vmem>>, vector<2x8x4xbf16>
    tpu.vector_store %arg14[%c0_127, %c0_128, %c12], %179 {strides = array<i32>} : memref<2x8x32xbf16, #tpu.memory_space<vmem>>, vector<2x8x4xbf16>,
    %181 = vector.extract_strided_slice %164 {offsets = [4, 0, 0, 0], sizes = [1, 2, 8, 4], strides = [1, 1, 1, 1]} : vector<8x2x8x4xf32> to vector<1x2x8x4xf32>
    %182 = vector.shape_cast %181 : vector<1x2x8x4xf32> to vector<2x8x4xf32>
    %183 = arith.truncf %182 : vector<2x8x4xf32> to vector<2x8x4xbf16>
    %c0_129 = arith.constant 0 : index
    %c0_130 = arith.constant 0 : index
    %c16 = arith.constant 16 : index
    %184 = vector.load %arg14[%c0_129, %c0_130, %c16] : memref<2x8x32xbf16, #tpu.memory_space<vmem>>, vector<2x8x4xbf16>
    tpu.vector_store %arg14[%c0_129, %c0_130, %c16], %183 {strides = array<i32>} : memref<2x8x32xbf16, #tpu.memory_space<vmem>>, vector<2x8x4xbf16>,
    %185 = vector.extract_strided_slice %164 {offsets = [5, 0, 0, 0], sizes = [1, 2, 8, 4], strides = [1, 1, 1, 1]} : vector<8x2x8x4xf32> to vector<1x2x8x4xf32>
    %186 = vector.shape_cast %185 : vector<1x2x8x4xf32> to vector<2x8x4xf32>
    %187 = arith.truncf %186 : vector<2x8x4xf32> to vector<2x8x4xbf16>
    %c0_131 = arith.constant 0 : index
    %c0_132 = arith.constant 0 : index
    %c20 = arith.constant 20 : index
    %188 = vector.load %arg14[%c0_131, %c0_132, %c20] : memref<2x8x32xbf16, #tpu.memory_space<vmem>>, vector<2x8x4xbf16>
    tpu.vector_store %arg14[%c0_131, %c0_132, %c20], %187 {strides = array<i32>} : memref<2x8x32xbf16, #tpu.memory_space<vmem>>, vector<2x8x4xbf16>,
    %189 = vector.extract_strided_slice %164 {offsets = [6, 0, 0, 0], sizes = [1, 2, 8, 4], strides = [1, 1, 1, 1]} : vector<8x2x8x4xf32> to vector<1x2x8x4xf32>
    %190 = vector.shape_cast %189 : vector<1x2x8x4xf32> to vector<2x8x4xf32>
    %191 = arith.truncf %190 : vector<2x8x4xf32> to vector<2x8x4xbf16>
    %c0_133 = arith.constant 0 : index
    %c0_134 = arith.constant 0 : index
    %c24 = arith.constant 24 : index
    %192 = vector.load %arg14[%c0_133, %c0_134, %c24] : memref<2x8x32xbf16, #tpu.memory_space<vmem>>, vector<2x8x4xbf16>
    tpu.vector_store %arg14[%c0_133, %c0_134, %c24], %191 {strides = array<i32>} : memref<2x8x32xbf16, #tpu.memory_space<vmem>>, vector<2x8x4xbf16>,
    %193 = vector.extract_strided_slice %164 {offsets = [7, 0, 0, 0], sizes = [1, 2, 8, 4], strides = [1, 1, 1, 1]} : vector<8x2x8x4xf32> to vector<1x2x8x4xf32>
    %194 = vector.shape_cast %193 : vector<1x2x8x4xf32> to vector<2x8x4xf32>
    %195 = arith.truncf %194 : vector<2x8x4xf32> to vector<2x8x4xbf16>
    %c0_135 = arith.constant 0 : index
    %c0_136 = arith.constant 0 : index
    %c28 = arith.constant 28 : index
    %196 = vector.load %arg14[%c0_135, %c0_136, %c28] : memref<2x8x32xbf16, #tpu.memory_space<vmem>>, vector<2x8x4xbf16>
    tpu.vector_store %arg14[%c0_135, %c0_136, %c28], %195 {strides = array<i32>} : memref<2x8x32xbf16, #tpu.memory_space<vmem>>, vector<2x8x4xbf16>,
    %c0_137 = arith.constant 0 : index
    %c0_138 = arith.constant 0 : index
    %c0_139 = arith.constant 0 : index
    %197 = vector.load %arg14[%c0_137, %c0_138, %c0_139] : memref<2x8x32xbf16, #tpu.memory_space<vmem>>, vector<2x8x32xbf16>
    %198 = vector.shape_cast %197 : vector<2x8x32xbf16> to vector<16x32xbf16>
    %c0_140 = arith.constant 0 : index
    %c0_141 = arith.constant 0 : index
    %199 = vector.load %arg4[%c0_140, %c0_141] : memref<32x32xbf16, #tpu.memory_space<vmem>>, vector<32x32xbf16>
    %cst_142 = arith.constant dense<0.000000e+00> : vector<16x32xf32>
    %200 = tpu.matmul %198, %199, %cst_142 {dimension_numbers = #tpu.dot_dimension_numbers<[1], [0], [0], [1], [0, 0, 1, 1], [], []>} : vector<16x32xbf16>, vector<32x32xbf16>, vector<16x32xf32> -> vector<16x32xf32>
    %c0_143 = arith.constant 0 : index
    %c0_144 = arith.constant 0 : index
    %201 = vector.load %arg5[%c0_143, %c0_144] : memref<1x32xf32, #tpu.memory_space<vmem>>, vector<1x32xf32>
    %202 = vector.broadcast %201 : vector<1x32xf32> to vector<16x32xf32>
    %203 = arith.addf %200, %202 : vector<16x32xf32>
    %204 = arith.addf %203, %1 : vector<16x32xf32>
    %205 = arith.truncf %204 : vector<16x32xf32> to vector<16x32xbf16>
    %c0_145 = arith.constant 0 : index
    %c0_146 = arith.constant 0 : index
    %206 = vector.load %arg6[%c0_145, %c0_146] : memref<32x64xbf16, #tpu.memory_space<vmem>>, vector<32x64xbf16>
    %cst_147 = arith.constant dense<0.000000e+00> : vector<16x64xf32>
    %207 = tpu.matmul %205, %206, %cst_147 {dimension_numbers = #tpu.dot_dimension_numbers<[1], [0], [0], [1], [0, 0, 1, 1], [], []>} : vector<16x32xbf16>, vector<32x64xbf16>, vector<16x64xf32> -> vector<16x64xf32>
    %c0_148 = arith.constant 0 : index
    %c0_149 = arith.constant 0 : index
    %208 = vector.load %arg7[%c0_148, %c0_149] : memref<1x64xf32, #tpu.memory_space<vmem>>, vector<1x64xf32>
    %209 = vector.broadcast %208 : vector<1x64xf32> to vector<16x64xf32>
    %210 = arith.addf %207, %209 : vector<16x64xf32>
    %cst_150 = arith.constant 5.000000e-01 : f32
    %211 = vector.broadcast %cst_150 : f32 to vector<16x64xf32>
    %212 = arith.mulf %211, %210 : vector<16x64xf32>
    %cst_151 = arith.constant 1.41421354 : f32
    %213 = vector.broadcast %cst_151 : f32 to vector<16x64xf32>
    %214 = arith.divf %210, %213 : vector<16x64xf32>
    %215 = math.erf %214 : vector<16x64xf32>
    %cst_152 = arith.constant 1.000000e+00 : f32
    %216 = vector.broadcast %cst_152 : f32 to vector<16x64xf32>
    %217 = arith.addf %216, %215 : vector<16x64xf32>
    %218 = arith.mulf %212, %217 : vector<16x64xf32>
    %219 = arith.truncf %218 : vector<16x64xf32> to vector<16x64xbf16>
    %c0_153 = arith.constant 0 : index
    %c0_154 = arith.constant 0 : index
    %220 = vector.load %arg8[%c0_153, %c0_154] : memref<64x32xbf16, #tpu.memory_space<vmem>>, vector<64x32xbf16>
    %cst_155 = arith.constant dense<0.000000e+00> : vector<16x32xf32>
    %221 = tpu.matmul %219, %220, %cst_155 {dimension_numbers = #tpu.dot_dimension_numbers<[1], [0], [0], [1], [0, 0, 1, 1], [], []>} : vector<16x64xbf16>, vector<64x32xbf16>, vector<16x32xf32> -> vector<16x32xf32>
    %c0_156 = arith.constant 0 : index
    %c0_157 = arith.constant 0 : index
    %222 = vector.load %arg9[%c0_156, %c0_157] : memref<1x32xf32, #tpu.memory_space<vmem>>, vector<1x32xf32>
    %223 = vector.broadcast %222 : vector<1x32xf32> to vector<16x32xf32>
    %224 = arith.addf %221, %223 : vector<16x32xf32>
    %cst_158 = arith.constant 5.000000e-01 : f32
    %225 = vector.broadcast %cst_158 : f32 to vector<16x32xf32>
    %226 = arith.mulf %225, %224 : vector<16x32xf32>
    %cst_159 = arith.constant 1.41421354 : f32
    %227 = vector.broadcast %cst_159 : f32 to vector<16x32xf32>
    %228 = arith.divf %224, %227 : vector<16x32xf32>
    %229 = math.erf %228 : vector<16x32xf32>
    %cst_160 = arith.constant 1.000000e+00 : f32
    %230 = vector.broadcast %cst_160 : f32 to vector<16x32xf32>
    %231 = arith.addf %230, %229 : vector<16x32xf32>
    %232 = arith.mulf %226, %231 : vector<16x32xf32>
    %233 = arith.addf %232, %204 : vector<16x32xf32>
    %234 = vector.shape_cast %233 : vector<16x32xf32> to vector<2x8x32xf32>
    %c0_161 = arith.constant 0 : index
    %c0_162 = arith.constant 0 : index
    %c0_163 = arith.constant 0 : index
    %235 = vector.load %arg10[%c0_161, %c0_162, %c0_163] : memref<2x8x32xf32, #tpu.memory_space<vmem>>, vector<2x8x32xf32>
    tpu.vector_store %arg10[%c0_161, %c0_162, %c0_163], %234 {strides = array<i32>} : memref<2x8x32xf32, #tpu.memory_space<vmem>>, vector<2x8x32xf32>,
    return
  }
  func.func @transform_0(%arg0: i32) -> (i32, i32, i32) {
    %c0_i32 = arith.constant 0 : i32
    %c0_i32_0 = arith.constant 0 : i32
    %c0_i32_1 = arith.constant 0 : i32
    return %arg0, %c0_i32, %c0_i32_0 : i32, i32, i32
  }
  func.func @transform_1(%arg0: i32) -> (i32, i32) {
    %c0_i32 = arith.constant 0 : i32
    %c0_i32_0 = arith.constant 0 : i32
    %c0_i32_1 = arith.constant 0 : i32
    return %c0_i32, %c0_i32_0 : i32, i32
  }
  func.func @transform_2(%arg0: i32) -> (i32, i32) {
    %c0_i32 = arith.constant 0 : i32
    %c0_i32_0 = arith.constant 0 : i32
    %c0_i32_1 = arith.constant 0 : i32
    return %c0_i32, %c0_i32_0 : i32, i32
  }
  func.func @transform_3(%arg0: i32) -> (i32, i32) {
    %c0_i32 = arith.constant 0 : i32
    %c0_i32_0 = arith.constant 0 : i32
    %c0_i32_1 = arith.constant 0 : i32
    return %c0_i32, %c0_i32_0 : i32, i32
  }
  func.func @transform_4(%arg0: i32) -> (i32, i32) {
    %c0_i32 = arith.constant 0 : i32
    %c0_i32_0 = arith.constant 0 : i32
    %c0_i32_1 = arith.constant 0 : i32
    return %c0_i32, %c0_i32_0 : i32, i32
  }
  func.func @transform_5(%arg0: i32) -> (i32, i32) {
    %c0_i32 = arith.constant 0 : i32
    %c0_i32_0 = arith.constant 0 : i32
    %c0_i32_1 = arith.constant 0 : i32
    return %c0_i32, %c0_i32_0 : i32, i32
  }
  func.func @transform_6(%arg0: i32) -> (i32, i32) {
    %c0_i32 = arith.constant 0 : i32
    %c0_i32_0 = arith.constant 0 : i32
    %c0_i32_1 = arith.constant 0 : i32
    return %c0_i32, %c0_i32_0 : i32, i32
  }
  func.func @transform_7(%arg0: i32) -> (i32, i32) {
    %c0_i32 = arith.constant 0 : i32
    %c0_i32_0 = arith.constant 0 : i32
    %c0_i32_1 = arith.constant 0 : i32
    return %c0_i32, %c0_i32_0 : i32, i32
  }
  func.func @transform_8(%arg0: i32) -> (i32, i32) {
    %c0_i32 = arith.constant 0 : i32
    %c0_i32_0 = arith.constant 0 : i32
    %c0_i32_1 = arith.constant 0 : i32
    return %c0_i32, %c0_i32_0 : i32, i32
  }
  func.func @transform_9(%arg0: i32) -> (i32, i32, i32) {
    %c0_i32 = arith.constant 0 : i32
    %c0_i32_0 = arith.constant 0 : i32
    %c0_i32_1 = arith.constant 0 : i32
    return %arg0, %c0_i32, %c0_i32_0 : i32, i32, i32
  }
}

</mosaic_0001>

<llo_original>
// kernel: tpu_custom_call.1
$region0: #{tpu_custom_call.1}
  #allocation0 [shape = 'u32[]', space=smem, size = 0x4, offset = 0x4, fixed_abs, tag = 'smem constant byte address 0x4 - core index']
  #allocation1 [shape = 'u32[144,128]{1,0:T(1,128)}', space=vmem, size = 0x12000, scoped, tag = 'internal scratch']
  #allocation2 [shape = 'bf16[8,2,8,4]{3,2,1,0:T(8,128)(2,1)}', space=vmem, size = 0x8000, scoped, tag = 'scratch operand']
  #allocation3 [shape = 'bf16[8,2,8,4]{3,2,1,0:T(8,128)(2,1)}', space=vmem, size = 0x8000, scoped, tag = 'scratch operand']
  #allocation4 [shape = 'bf16[8,2,8,4]{3,2,1,0:T(8,128)(2,1)}', space=vmem, size = 0x8000, scoped, tag = 'scratch operand']
  #allocation5 [shape = 'bf16[2,8,32]{2,1,0:T(8,128)(2,1)}', space=vmem, size = 0x1000, scoped, tag = 'scratch operand']
  %s0 = inlined_call_operand.vmem [shape: f32[2,8,32], index: 0, kind: input, shape index: {}]
  %s1 = inlined_call_operand.vmem [shape: bf16[32,96], index: 1, kind: input, shape index: {}]
  %s2 = inlined_call_operand.vmem [shape: f32[1,96], index: 2, kind: input, shape index: {}]
  %s3 = inlined_call_operand.vmem [shape: bf16[32,32], index: 3, kind: input, shape index: {}]
  %s4 = inlined_call_operand.vmem [shape: f32[1,32], index: 4, kind: input, shape index: {}]
  %s5 = inlined_call_operand.hbm [shape: bf16[32,64], index: 5, kind: input, shape index: {}]
  %s6 = inlined_call_operand.vmem [shape: f32[1,64], index: 6, kind: input, shape index: {}]
  %s7 = inlined_call_operand.vmem [shape: bf16[64,32], index: 7, kind: input, shape index: {}]
  %s8 = inlined_call_operand.vmem [shape: f32[1,32], index: 8, kind: input, shape index: {}]
  %s9 = inlined_call_operand.hbm [shape: f32[2,8,32], index: 9, kind: output, shape index: {}]
  %s10 = sld [smem:[#allocation0]]
  $region50: #{tpu_custom_call.1} parent=0
    _
  %s12 = ssub.s32 1, %s10
  %s13 = scalar_select 0, %s12, %s10
  $region1: #{tpu_custom_call.1} parent=0
    #allocation6 [shape = 'u8[8192]{0}', space=vmem, size = 0x2000, scoped, tag = 'input window, operand 5, single buffered']
    #allocation7 [shape = 's32[1]{0}', space=sflag, size = 0x4, scoped, tag = 'scoped memory for tpu_custom_call.1']
    #allocation8 [shape = 's32[1]{0}', space=sflag, size = 0x4, scoped, tag = 'scoped memory for tpu_custom_call.1']
    #allocation9 [shape = 'u8[8192]{0}', space=vmem, size = 0x2000, scoped, tag = 'output window, operand 0, single buffered']
    %14 = vsyncpa [#allocation7], 0
    %15 = vsyncpa [#allocation8], 0
    // Predicated region
    $region2: #{tpu_custom_call.1} parent=1 // pred_check
      _
    $region3: #{tpu_custom_call.1} parent=1 // pred_check_branch
      %17 = sbr.rel (0) target = $region5
    $region4: #{tpu_custom_call.1} parent=1 // pred_region
      _
    $region5: #{tpu_custom_call.1} parent=1 // pred_fallthru
      _
    // Predicated region
    $region6: #{tpu_custom_call.1} parent=1 // pred_check
      _
    $region7: #{tpu_custom_call.1} parent=1 // pred_check_branch
      %19 = sbr.rel (0) target = $region9
    $region8: #{tpu_custom_call.1} parent=1 // pred_region
      _
    $region9: #{tpu_custom_call.1} parent=1 // pred_fallthru
      _
    // Predicated region
    $region10: #{tpu_custom_call.1} parent=1 // pred_check
      _
    $region11: #{tpu_custom_call.1} parent=1 // pred_check_branch
      %21 = sbr.rel (0) target = $region13
    $region12: #{tpu_custom_call.1} parent=1 // pred_region
      _
    $region13: #{tpu_custom_call.1} parent=1 // pred_fallthru
      _
    // Predicated region
    $region14: #{tpu_custom_call.1} parent=1 // pred_check
      _
    $region15: #{tpu_custom_call.1} parent=1 // pred_check_branch
      %23 = sbr.rel (0) target = $region17
    $region16: #{tpu_custom_call.1} parent=1 // pred_region
      _
    $region17: #{tpu_custom_call.1} parent=1 // pred_fallthru
      _
    // Predicated region
    $region18: #{tpu_custom_call.1} parent=1 // pred_check
      _
    $region19: #{tpu_custom_call.1} parent=1 // pred_check_branch
      %25 = sbr.rel (0) target = $region21
    $region20: #{tpu_custom_call.1} parent=1 // pred_region
      _
    $region21: #{tpu_custom_call.1} parent=1 // pred_fallthru
      _
    // Predicated region
    $region22: #{tpu_custom_call.1} parent=1 // pred_check
      _
    $region23: #{tpu_custom_call.1} parent=1 // pred_check_branch
      %27 = sbr.rel (0) target = $region25
    $region24: #{tpu_custom_call.1} parent=1 // pred_region
      %s29 = ssub.s32 256, 256
      %30 = vsyncadd [#allocation7], %s29
      %s31 = sshll.u32 [#allocation6], 4
      %s32 = int_to_ptr.vmem [resolvable:$true] %s31
      %37 = dma.hbm_to_vmem [thread:$0]  %s5, 256, %s32, [#allocation7], 64, 64, 4
    $region25: #{tpu_custom_call.1} parent=1 // pred_fallthru
      _
    // Predicated region
    $region26: #{tpu_custom_call.1} parent=1 // pred_check
      _
    $region27: #{tpu_custom_call.1} parent=1 // pred_check_branch
      %39 = sbr.rel (0) target = $region29
    $region28: #{tpu_custom_call.1} parent=1 // pred_region
      _
    $region29: #{tpu_custom_call.1} parent=1 // pred_fallthru
      _
    // Predicated region
    $region30: #{tpu_custom_call.1} parent=1 // pred_check
      _
    $region31: #{tpu_custom_call.1} parent=1 // pred_check_branch
      %41 = sbr.rel (0) target = $region33
    $region32: #{tpu_custom_call.1} parent=1 // pred_region
      _
    $region33: #{tpu_custom_call.1} parent=1 // pred_fallthru
      _
    // Predicated region
    $region34: #{tpu_custom_call.1} parent=1 // pred_check
      _
    $region35: #{tpu_custom_call.1} parent=1 // pred_check_branch
      %43 = sbr.rel (0) target = $region37
    $region36: #{tpu_custom_call.1} parent=1 // pred_region
      _
    $region37: #{tpu_custom_call.1} parent=1 // pred_fallthru
      _
    // Predicated region
    $region38: #{tpu_custom_call.1} parent=1 // pred_check
      _
    $region39: #{tpu_custom_call.1} parent=1 // pred_check_branch
      %45 = sbr.rel (0) target = $region41
    $region40: #{tpu_custom_call.1} parent=1 // pred_region
      %46 = dma.done [#allocation7], 256
    $region41: #{tpu_custom_call.1} parent=1 // pred_fallthru
      _
    %v48 = vld [vmem:[%s0] sm:$0xff]
    %v49 = vld [vmem:[%s0 + $0x8] sm:$0xff]
    %v50 = vpack.c.bf16 %v49, %v48
    %v51 = vld [vmem:[%s1] sm:$0xf]
    %v52 = vld [vmem:[%s1 + $0x4] sm:$0xf]
    %v53 = vld [vmem:[%s1 + $0x8] sm:$0xf]
    %v54 = vld [vmem:[%s1 + $0xc] sm:$0xf]
    %v55 = vld [vmem:[%s2] sm:$0x1]
    %v57 = vlaneseq
    %v58 = vshrl.u32 %v57, 7
    %v59 = vsub.s32 0, %v58
    %v60 = vrot.slane %v55, %v59
    %v66 = vunpack.c.l.b16 %v51
    %v67 = vunpack.c.l.b16 %v52
    %v68 = vunpack.c.l.b16 %v53
    %v69 = vunpack.c.l.b16 %v54
    %v70 = vpack.c.b16 %v67, %v66
    %v71 = vpack.c.b16 %v69, %v68
    %vm74 = vcmask 261120
    %v76 = vsel %vm74, %v50, 0
    %78 = vmatprep.subr.bf16.mxu0 0
    %79 = vmatpush1.bf16.msra.mxu0 0
    %80 = vmatprep.subr.bf16.mxu0 0
    %81 = vmatpush1.bf16.msra.mxu0 0
    %82 = vmatprep.subr.bf16.mxu0 0
    %83 = vmatpush1.bf16.msra.mxu0 0
    %84 = vmatprep.subr.bf16.mxu0 0
    %85 = vmatpush1.bf16.msra.mxu0 0
    %86 = vmatprep.subr.bf16.mxu0 0
    %87 = vmatpush1.bf16.msra.mxu0 0
    %88 = vmatprep.subr.bf16.mxu0 0
    %89 = vmatpush1.bf16.msra.mxu0 0
    %90 = vmatprep.subr.bf16.mxu0 0
    %91 = vmatpush1.bf16.msra.mxu0 %v71
    %92 = vmatprep.subr.bf16.mxu0 0
    %93 = vmatpush1.bf16.msra.mxu0 %v70
    %94 = vmatprep.subr.bf16.mxu0 0
    %95 = vmatpush2.bf16.msra.mxu0 0
    %96 = vmatprep.subr.bf16.mxu0 0
    %97 = vmatpush2.bf16.msra.mxu0 0
    %98 = vmatprep.subr.bf16.mxu0 0
    %99 = vmatpush2.bf16.msra.mxu0 0
    %100 = vmatprep.subr.bf16.mxu0 0
    %101 = vmatpush2.bf16.msra.mxu0 0
    %102 = vmatprep.subr.bf16.mxu0 0
    %103 = vmatpush2.bf16.msra.mxu0 0
    %104 = vmatprep.subr.bf16.mxu0 0
    %105 = vmatpush2.bf16.msra.mxu0 0
    %106 = vmatprep.subr.bf16.mxu0 0
    %107 = vmatpush2.bf16.msra.mxu0 0
    %108 = vmatprep.subr.bf16.mxu0 0
    %109 = vmatpush2.bf16.msra.mxu0 0
    %110 = vmatprep.mubr.bf16.mxu0 0
    %111 = vmatmul.mubr.bf16.gmra.mxu0 %v76
    %v112 = vpop.f32.mrf.mxu0
    %v113 = vadd.f32 %v60, %v112
    %v114 = vpop.f32.mrf.mxu0
    %v115 = vpop.f32.mrf.mxu0
    %v116 = vadd.f32 %v60, %v115
    %v117 = vpop.f32.mrf.mxu0
    %118 = vdwg.mxu0
    %v119 = vmul.f32 %v113, 0.17677669
    %v120 = vmul.f32 %v116, 0.17677669
    %v121 = vpack.c.bf16 %v119, %v119
    %v122 = vpack.c.bf16 %v120, %v120
    %vm123 = vcmask 27648
    %124 = vst.msk [vmem:[#allocation2] sm:$0xf] %vm123, %v121
    %125 = vst.msk [vmem:[#allocation2 + $0x4] sm:$0xf] %vm123, %v122
    %v126 = vpack.c.bf16 %v113, %v113
    %v127 = vpack.c.bf16 %v116, %v116
    %v130 = vunpack.c.l.b16 %v126
    %v131 = vunpack.c.l.b16 %v127
    %v132 = vpack.c.b16 %v130, %v130
    %v133 = vpack.c.b16 %v131, %v131
    %134 = vrot.lane.b32.xlu0 %v132, 96
    %v135 = vpop.permute.xlu0 %134
    %136 = vrot.lane.b32.xlu0 %v133, 96
    %v137 = vpop.permute.xlu0 %136
    %140 = vst.msk [vmem:[#allocation3] sm:$0xf] %vm123, %v135
    %141 = vst.msk [vmem:[#allocation3 + $0x4] sm:$0xf] %vm123, %v137
    %142 = vrot.lane.b32.xlu0 %v132, 64
    %v143 = vpop.permute.xlu0 %142
    %144 = vrot.lane.b32.xlu0 %v133, 64
    %v145 = vpop.permute.xlu0 %144
    %148 = vst.msk [vmem:[#allocation4] sm:$0xf] %vm123, %v143
    %149 = vst.msk [vmem:[#allocation4 + $0x4] sm:$0xf] %vm123, %v145
    %v152 = vunpack.c.l.b16 %v121
    %v153 = vunpack.c.l.b16 %v122
    %v154 = vpack.c.b16 %v152, %v152
    %v155 = vpack.c.b16 %v153, %v153
    %156 = vrot.lane.b32.xlu0 %v154, 124
    %v157 = vpop.permute.xlu0 %156
    %158 = vrot.lane.b32.xlu0 %v155, 124
    %v159 = vpop.permute.xlu0 %158
    %s162 = scalar_lea.vmem [#allocation2], 8
    %163 = vst.msk [vmem:[%s162] sm:$0xf] %vm123, %v157
    %164 = vst.msk [vmem:[%s162 + $0x4] sm:$0xf] %vm123, %v159
    %165 = vrot.lane.b32.xlu0 %v132, 92
    %v166 = vpop.permute.xlu0 %165
    %167 = vrot.lane.b32.xlu0 %v133, 92
    %v168 = vpop.permute.xlu0 %167
    %s171 = scalar_lea.vmem [#allocation3], 8
    %172 = vst.msk [vmem:[%s171] sm:$0xf] %vm123, %v166
    %173 = vst.msk [vmem:[%s171 + $0x4] sm:$0xf] %vm123, %v168
    %174 = vrot.lane.b32.xlu0 %v132, 60
    %v175 = vpop.permute.xlu0 %174
    %176 = vrot.lane.b32.xlu0 %v133, 60
    %v177 = vpop.permute.xlu0 %176
    %s180 = scalar_lea.vmem [#allocation4], 8
    %181 = vst.msk [vmem:[%s180] sm:$0xf] %vm123, %v175
    %182 = vst.msk [vmem:[%s180 + $0x4] sm:$0xf] %vm123, %v177
    %183 = vrot.lane.b32.xlu0 %v154, 120
    %v184 = vpop.permute.xlu0 %183
    %185 = vrot.lane.b32.xlu0 %v155, 120
    %v186 = vpop.permute.xlu0 %185
    %s189 = scalar_lea.vmem [#allocation2], 16
    %190 = vst.msk [vmem:[%s189] sm:$0xf] %vm123, %v184
    %191 = vst.msk [vmem:[%s189 + $0x4] sm:$0xf] %vm123, %v186
    %192 = vrot.lane.b32.xlu0 %v132, 88
    %v193 = vpop.permute.xlu0 %192
    %194 = vrot.lane.b32.xlu0 %v133, 88
    %v195 = vpop.permute.xlu0 %194
    %s198 = scalar_lea.vmem [#allocation3], 16
    %199 = vst.msk [vmem:[%s198] sm:$0xf] %vm123, %v193
    %200 = vst.msk [vmem:[%s198 + $0x4] sm:$0xf] %vm123, %v195
    %201 = vrot.lane.b32.xlu0 %v132, 56
    %v202 = vpop.permute.xlu0 %201
    %203 = vrot.lane.b32.xlu0 %v133, 56
    %v204 = vpop.permute.xlu0 %203
    %s207 = scalar_lea.vmem [#allocation4], 16
    %208 = vst.msk [vmem:[%s207] sm:$0xf] %vm123, %v202
    %209 = vst.msk [vmem:[%s207 + $0x4] sm:$0xf] %vm123, %v204
    %210 = vrot.lane.b32.xlu0 %v154, 116
    %v211 = vpop.permute.xlu0 %210
    %212 = vrot.lane.b32.xlu0 %v155, 116
    %v213 = vpop.permute.xlu0 %212
    %s216 = scalar_lea.vmem [#allocation2], 24
    %217 = vst.msk [vmem:[%s216] sm:$0xf] %vm123, %v211
    %218 = vst.msk [vmem:[%s216 + $0x4] sm:$0xf] %vm123, %v213
    %219 = vrot.lane.b32.xlu0 %v132, 84
    %v220 = vpop.permute.xlu0 %219
    %221 = vrot.lane.b32.xlu0 %v133, 84
    %v222 = vpop.permute.xlu0 %221
    %s225 = scalar_lea.vmem [#allocation3], 24
    %226 = vst.msk [vmem:[%s225] sm:$0xf] %vm123, %v220
    %227 = vst.msk [vmem:[%s225 + $0x4] sm:$0xf] %vm123, %v222
    %228 = vrot.lane.b32.xlu0 %v132, 52
    %v229 = vpop.permute.xlu0 %228
    %230 = vrot.lane.b32.xlu0 %v133, 52
    %v231 = vpop.permute.xlu0 %230
    %s234 = scalar_lea.vmem [#allocation4], 24
    %235 = vst.msk [vmem:[%s234] sm:$0xf] %vm123, %v229
    %236 = vst.msk [vmem:[%s234 + $0x4] sm:$0xf] %vm123, %v231
    %237 = vrot.lane.b32.xlu0 %v154, 112
    %v238 = vpop.permute.xlu0 %237
    %239 = vrot.lane.b32.xlu0 %v155, 112
    %v240 = vpop.permute.xlu0 %239
    %s243 = scalar_lea.vmem [#allocation2], 32
    %244 = vst.msk [vmem:[%s243] sm:$0xf] %vm123, %v238
    %245 = vst.msk [vmem:[%s243 + $0x4] sm:$0xf] %vm123, %v240
    %246 = vrot.lane.b32.xlu0 %v132, 80
    %v247 = vpop.permute.xlu0 %246
    %248 = vrot.lane.b32.xlu0 %v133, 80
    %v249 = vpop.permute.xlu0 %248
    %s252 = scalar_lea.vmem [#allocation3], 32
    %253 = vst.msk [vmem:[%s252] sm:$0xf] %vm123, %v247
    %254 = vst.msk [vmem:[%s252 + $0x4] sm:$0xf] %vm123, %v249
    %255 = vrot.lane.b32.xlu0 %v132, 48
    %v256 = vpop.permute.xlu0 %255
    %257 = vrot.lane.b32.xlu0 %v133, 48
    %v258 = vpop.permute.xlu0 %257
    %s261 = scalar_lea.vmem [#allocation4], 32
    %262 = vst.msk [vmem:[%s261] sm:$0xf] %vm123, %v256
    %263 = vst.msk [vmem:[%s261 + $0x4] sm:$0xf] %vm123, %v258
    %264 = vrot.lane.b32.xlu0 %v154, 108
    %v265 = vpop.permute.xlu0 %264
    %266 = vrot.lane.b32.xlu0 %v155, 108
    %v267 = vpop.permute.xlu0 %266
    %s270 = scalar_lea.vmem [#allocation2], 40
    %271 = vst.msk [vmem:[%s270] sm:$0xf] %vm123, %v265
    %272 = vst.msk [vmem:[%s270 + $0x4] sm:$0xf] %vm123, %v267
    %273 = vrot.lane.b32.xlu0 %v132, 76
    %v274 = vpop.permute.xlu0 %273
    %275 = vrot.lane.b32.xlu0 %v133, 76
    %v276 = vpop.permute.xlu0 %275
    %s279 = scalar_lea.vmem [#allocation3], 40
    %280 = vst.msk [vmem:[%s279] sm:$0xf] %vm123, %v274
    %281 = vst.msk [vmem:[%s279 + $0x4] sm:$0xf] %vm123, %v276
    %282 = vrot.lane.b32.xlu0 %v132, 44
    %v283 = vpop.permute.xlu0 %282
    %284 = vrot.lane.b32.xlu0 %v133, 44
    %v285 = vpop.permute.xlu0 %284
    %s288 = scalar_lea.vmem [#allocation4], 40
    %289 = vst.msk [vmem:[%s288] sm:$0xf] %vm123, %v283
    %290 = vst.msk [vmem:[%s288 + $0x4] sm:$0xf] %vm123, %v285
    %291 = vrot.lane.b32.xlu0 %v154, 104
    %v292 = vpop.permute.xlu0 %291
    %293 = vrot.lane.b32.xlu0 %v155, 104
    %v294 = vpop.permute.xlu0 %293
    %s297 = scalar_lea.vmem [#allocation2], 48
    %298 = vst.msk [vmem:[%s297] sm:$0xf] %vm123, %v292
    %299 = vst.msk [vmem:[%s297 + $0x4] sm:$0xf] %vm123, %v294
    %300 = vrot.lane.b32.xlu0 %v132, 72
    %v301 = vpop.permute.xlu0 %300
    %302 = vrot.lane.b32.xlu0 %v133, 72
    %v303 = vpop.permute.xlu0 %302
    %s306 = scalar_lea.vmem [#allocation3], 48
    %307 = vst.msk [vmem:[%s306] sm:$0xf] %vm123, %v301
    %308 = vst.msk [vmem:[%s306 + $0x4] sm:$0xf] %vm123, %v303
    %309 = vrot.lane.b32.xlu0 %v132, 40
    %v310 = vpop.permute.xlu0 %309
    %311 = vrot.lane.b32.xlu0 %v133, 40
    %v312 = vpop.permute.xlu0 %311
    %s315 = scalar_lea.vmem [#allocation4], 48
    %316 = vst.msk [vmem:[%s315] sm:$0xf] %vm123, %v310
    %317 = vst.msk [vmem:[%s315 + $0x4] sm:$0xf] %vm123, %v312
    %318 = vrot.lane.b32.xlu0 %v154, 100
    %v319 = vpop.permute.xlu0 %318
    %320 = vrot.lane.b32.xlu0 %v155, 100
    %v321 = vpop.permute.xlu0 %320
    %s324 = scalar_lea.vmem [#allocation2], 56
    %325 = vst.msk [vmem:[%s324] sm:$0xf] %vm123, %v319
    %326 = vst.msk [vmem:[%s324 + $0x4] sm:$0xf] %vm123, %v321
    %327 = vrot.lane.b32.xlu0 %v132, 68
    %v328 = vpop.permute.xlu0 %327
    %329 = vrot.lane.b32.xlu0 %v133, 68
    %v330 = vpop.permute.xlu0 %329
    %s333 = scalar_lea.vmem [#allocation3], 56
    %334 = vst.msk [vmem:[%s333] sm:$0xf] %vm123, %v328
    %335 = vst.msk [vmem:[%s333 + $0x4] sm:$0xf] %vm123, %v330
    %336 = vrot.lane.b32.xlu0 %v132, 36
    %v337 = vpop.permute.xlu0 %336
    %338 = vrot.lane.b32.xlu0 %v133, 36
    %v339 = vpop.permute.xlu0 %338
    %s342 = scalar_lea.vmem [#allocation4], 56
    %343 = vst.msk [vmem:[%s342] sm:$0xf] %vm123, %v337
    %344 = vst.msk [vmem:[%s342 + $0x4] sm:$0xf] %vm123, %v339
    %v345 = vld [vmem:[#allocation2] sm:$0xf]
    %v346 = vld [vmem:[#allocation2 + $0x4] sm:$0xf]
    %v347 = vld [vmem:[#allocation2 + $0x8] sm:$0xf]
    %v348 = vld [vmem:[#allocation2 + $0xc] sm:$0xf]
    %v349 = vld [vmem:[#allocation2 + $0x10] sm:$0xf]
    %v350 = vld [vmem:[#allocation2 + $0x14] sm:$0xf]
    %v351 = vld [vmem:[#allocation2 + $0x18] sm:$0xf]
    %v352 = vld [vmem:[#allocation2 + $0x1c] sm:$0xf]
    %v353 = vld [vmem:[#allocation2 + $0x20] sm:$0xf]
    %v354 = vld [vmem:[#allocation2 + $0x24] sm:$0xf]
    %v355 = vld [vmem:[#allocation2 + $0x28] sm:$0xf]
    %v356 = vld [vmem:[#allocation2 + $0x2c] sm:$0xf]
    %v357 = vld [vmem:[#allocation2 + $0x30] sm:$0xf]
    %v358 = vld [vmem:[#allocation2 + $0x34] sm:$0xf]
    %v359 = vld [vmem:[#allocation2 + $0x38] sm:$0xf]
    %v360 = vld [vmem:[#allocation2 + $0x3c] sm:$0xf]
    %v361 = vld [vmem:[#allocation3] sm:$0xf]
    %v362 = vld [vmem:[#allocation3 + $0x4] sm:$0xf]
    %v363 = vld [vmem:[#allocation3 + $0x8] sm:$0xf]
    %v364 = vld [vmem:[#allocation3 + $0xc] sm:$0xf]
    %v365 = vld [vmem:[#allocation3 + $0x10] sm:$0xf]
    %v366 = vld [vmem:[#allocation3 + $0x14] sm:$0xf]
    %v367 = vld [vmem:[#allocation3 + $0x18] sm:$0xf]
    %v368 = vld [vmem:[#allocation3 + $0x1c] sm:$0xf]
    %v369 = vld [vmem:[#allocation3 + $0x20] sm:$0xf]
    %v370 = vld [vmem:[#allocation3 + $0x24] sm:$0xf]
    %v371 = vld [vmem:[#allocation3 + $0x28] sm:$0xf]
    %v372 = vld [vmem:[#allocation3 + $0x2c] sm:$0xf]
    %v373 = vld [vmem:[#allocation3 + $0x30] sm:$0xf]
    %v374 = vld [vmem:[#allocation3 + $0x34] sm:$0xf]
    %v375 = vld [vmem:[#allocation3 + $0x38] sm:$0xf]
    %v376 = vld [vmem:[#allocation3 + $0x3c] sm:$0xf]
    %v377 = vld [vmem:[#allocation4] sm:$0xf]
    %v378 = vld [vmem:[#allocation4 + $0x4] sm:$0xf]
    %v379 = vld [vmem:[#allocation4 + $0x8] sm:$0xf]
    %v380 = vld [vmem:[#allocation4 + $0xc] sm:$0xf]
    %v381 = vld [vmem:[#allocation4 + $0x10] sm:$0xf]
    %v382 = vld [vmem:[#allocation4 + $0x14] sm:$0xf]
    %v383 = vld [vmem:[#allocation4 + $0x18] sm:$0xf]
    %v384 = vld [vmem:[#allocation4 + $0x1c] sm:$0xf]
    %v385 = vld [vmem:[#allocation4 + $0x20] sm:$0xf]
    %v386 = vld [vmem:[#allocation4 + $0x24] sm:$0xf]
    %v387 = vld [vmem:[#allocation4 + $0x28] sm:$0xf]
    %v388 = vld [vmem:[#allocation4 + $0x2c] sm:$0xf]
    %v389 = vld [vmem:[#allocation4 + $0x30] sm:$0xf]
    %v390 = vld [vmem:[#allocation4 + $0x34] sm:$0xf]
    %v391 = vld [vmem:[#allocation4 + $0x38] sm:$0xf]
    %v392 = vld [vmem:[#allocation4 + $0x3c] sm:$0xf]
    %vm393 = vcmask 31744
    %v395 = vsel %vm393, %v345, 0
    %v398 = vsel %vm393, %v361, 0
    %400 = vmatprep.subr.bf16.mxu0 0
    %401 = vmatpush1.bf16.xpose.msra.mxu0 0
    %402 = vmatprep.subr.bf16.mxu0 0
    %403 = vmatpush1.bf16.xpose.msra.mxu0 0
    %404 = vmatprep.subr.bf16.mxu0 0
    %405 = vmatpush1.bf16.xpose.msra.mxu0 0
    %406 = vmatprep.subr.bf16.mxu0 0
    %407 = vmatpush1.bf16.xpose.msra.mxu0 0
    %408 = vmatprep.subr.bf16.mxu0 0
    %409 = vmatpush1.bf16.xpose.msra.mxu0 0
    %410 = vmatprep.subr.bf16.mxu0 0
    %411 = vmatpush1.bf16.xpose.msra.mxu0 0
    %412 = vmatprep.subr.bf16.mxu0 0
    %413 = vmatpush1.bf16.xpose.msra.mxu0 0
    %414 = vmatprep.subr.bf16.mxu0 0
    %415 = vmatpush1.bf16.xpose.msra.mxu0 %v398
    %416 = vmatprep.subr.bf16.mxu0 0
    %417 = vmatpush2.bf16.xpose.msra.mxu0 0
    %418 = vmatprep.subr.bf16.mxu0 0
    %419 = vmatpush2.bf16.xpose.msra.mxu0 0
    %420 = vmatprep.subr.bf16.mxu0 0
    %421 = vmatpush2.bf16.xpose.msra.mxu0 0
    %422 = vmatprep.subr.bf16.mxu0 0
    %423 = vmatpush2.bf16.xpose.msra.mxu0 0
    %424 = vmatprep.subr.bf16.mxu0 0
    %425 = vmatpush2.bf16.xpose.msra.mxu0 0
    %426 = vmatprep.subr.bf16.mxu0 0
    %427 = vmatpush2.bf16.xpose.msra.mxu0 0
    %428 = vmatprep.subr.bf16.mxu0 0
    %429 = vmatpush2.bf16.xpose.msra.mxu0 0
    %430 = vmatprep.subr.bf16.mxu0 0
    %431 = vmatpush2.bf16.xpose.msra.mxu0 0
    %432 = vmatprep.mubr.bf16.mxu0 0
    %433 = vmatmul.mubr.bf16.gmra.mxu0 %v395
    %v434 = vpop.f32.mrf.mxu0
    %v435 = vadd.f32 0.0, %v434
    %v436 = vpop.f32.mrf.mxu0
    %v437 = vpop.f32.mrf.mxu0
    %v438 = vpop.f32.mrf.mxu0
    %439 = vdwg.mxu0
    %v441 = vsel %vm393, %v346, 0
    %v444 = vsel %vm393, %v362, 0
    %446 = vmatprep.subr.bf16.mxu0 0
    %447 = vmatpush1.bf16.xpose.msra.mxu0 0
    %448 = vmatprep.subr.bf16.mxu0 0
    %449 = vmatpush1.bf16.xpose.msra.mxu0 0
    %450 = vmatprep.subr.bf16.mxu0 0
    %451 = vmatpush1.bf16.xpose.msra.mxu0 0
    %452 = vmatprep.subr.bf16.mxu0 0
    %453 = vmatpush1.bf16.xpose.msra.mxu0 0
    %454 = vmatprep.subr.bf16.mxu0 0
    %455 = vmatpush1.bf16.xpose.msra.mxu0 0
    %456 = vmatprep.subr.bf16.mxu0 0
    %457 = vmatpush1.bf16.xpose.msra.mxu0 0
    %458 = vmatprep.subr.bf16.mxu0 0
    %459 = vmatpush1.bf16.xpose.msra.mxu0 0
    %460 = vmatprep.subr.bf16.mxu0 0
    %461 = vmatpush1.bf16.xpose.msra.mxu0 %v444
    %462 = vmatprep.subr.bf16.mxu0 0
    %463 = vmatpush2.bf16.xpose.msra.mxu0 0
    %464 = vmatprep.subr.bf16.mxu0 0
    %465 = vmatpush2.bf16.xpose.msra.mxu0 0
    %466 = vmatprep.subr.bf16.mxu0 0
    %467 = vmatpush2.bf16.xpose.msra.mxu0 0
    %468 = vmatprep.subr.bf16.mxu0 0
    %469 = vmatpush2.bf16.xpose.msra.mxu0 0
    %470 = vmatprep.subr.bf16.mxu0 0
    %471 = vmatpush2.bf16.xpose.msra.mxu0 0
    %472 = vmatprep.subr.bf16.mxu0 0
    %473 = vmatpush2.bf16.xpose.msra.mxu0 0
    %474 = vmatprep.subr.bf16.mxu0 0
    %475 = vmatpush2.bf16.xpose.msra.mxu0 0
    %476 = vmatprep.subr.bf16.mxu0 0
    %477 = vmatpush2.bf16.xpose.msra.mxu0 0
    %478 = vmatprep.mubr.bf16.mxu0 0
    %479 = vmatmul.mubr.bf16.gmra.mxu0 %v441
    %v480 = vpop.f32.mrf.mxu0
    %v481 = vadd.f32 0.0, %v480
    %v482 = vpop.f32.mrf.mxu0
    %v483 = vpop.f32.mrf.mxu0
    %v484 = vpop.f32.mrf.mxu0
    %485 = vdwg.mxu0
    %v487 = vsel %vm393, %v347, 0
    %v490 = vsel %vm393, %v363, 0
    %492 = vmatprep.subr.bf16.mxu0 0
    %493 = vmatpush1.bf16.xpose.msra.mxu0 0
    %494 = vmatprep.subr.bf16.mxu0 0
    %495 = vmatpush1.bf16.xpose.msra.mxu0 0
    %496 = vmatprep.subr.bf16.mxu0 0
    %497 = vmatpush1.bf16.xpose.msra.mxu0 0
    %498 = vmatprep.subr.bf16.mxu0 0
    %499 = vmatpush1.bf16.xpose.msra.mxu0 0
    %500 = vmatprep.subr.bf16.mxu0 0
    %501 = vmatpush1.bf16.xpose.msra.mxu0 0
    %502 = vmatprep.subr.bf16.mxu0 0
    %503 = vmatpush1.bf16.xpose.msra.mxu0 0
    %504 = vmatprep.subr.bf16.mxu0 0
    %505 = vmatpush1.bf16.xpose.msra.mxu0 0
    %506 = vmatprep.subr.bf16.mxu0 0
    %507 = vmatpush1.bf16.xpose.msra.mxu0 %v490
    %508 = vmatprep.subr.bf16.mxu0 0
    %509 = vmatpush2.bf16.xpose.msra.mxu0 0
    %510 = vmatprep.subr.bf16.mxu0 0
    %511 = vmatpush2.bf16.xpose.msra.mxu0 0
    %512 = vmatprep.subr.bf16.mxu0 0
    %513 = vmatpush2.bf16.xpose.msra.mxu0 0
    %514 = vmatprep.subr.bf16.mxu0 0
    %515 = vmatpush2.bf16.xpose.msra.mxu0 0
    %516 = vmatprep.subr.bf16.mxu0 0
    %517 = vmatpush2.bf16.xpose.msra.mxu0 0
    %518 = vmatprep.subr.bf16.mxu0 0
    %519 = vmatpush2.bf16.xpose.msra.mxu0 0
    %520 = vmatprep.subr.bf16.mxu0 0
    %521 = vmatpush2.bf16.xpose.msra.mxu0 0
    %522 = vmatprep.subr.bf16.mxu0 0
    %523 = vmatpush2.bf16.xpose.msra.mxu0 0
    %524 = vmatprep.mubr.bf16.mxu0 0
    %525 = vmatmul.mubr.bf16.gmra.mxu0 %v487
    %v526 = vpop.f32.mrf.mxu0
    %v527 = vadd.f32 0.0, %v526
    %v528 = vpop.f32.mrf.mxu0
    %v529 = vpop.f32.mrf.mxu0
    %v530 = vpop.f32.mrf.mxu0
    %531 = vdwg.mxu0
    %v533 = vsel %vm393, %v348, 0
    %v536 = vsel %vm393, %v364, 0
    %538 = vmatprep.subr.bf16.mxu0 0
    %539 = vmatpush1.bf16.xpose.msra.mxu0 0
    %540 = vmatprep.subr.bf16.mxu0 0
    %541 = vmatpush1.bf16.xpose.msra.mxu0 0
    %542 = vmatprep.subr.bf16.mxu0 0
    %543 = vmatpush1.bf16.xpose.msra.mxu0 0
    %544 = vmatprep.subr.bf16.mxu0 0
    %545 = vmatpush1.bf16.xpose.msra.mxu0 0
    %546 = vmatprep.subr.bf16.mxu0 0
    %547 = vmatpush1.bf16.xpose.msra.mxu0 0
    %548 = vmatprep.subr.bf16.mxu0 0
    %549 = vmatpush1.bf16.xpose.msra.mxu0 0
    %550 = vmatprep.subr.bf16.mxu0 0
    %551 = vmatpush1.bf16.xpose.msra.mxu0 0
    %552 = vmatprep.subr.bf16.mxu0 0
    %553 = vmatpush1.bf16.xpose.msra.mxu0 %v536
    %554 = vmatprep.subr.bf16.mxu0 0
    %555 = vmatpush2.bf16.xpose.msra.mxu0 0
    %556 = vmatprep.subr.bf16.mxu0 0
    %557 = vmatpush2.bf16.xpose.msra.mxu0 0
    %558 = vmatprep.subr.bf16.mxu0 0
    %559 = vmatpush2.bf16.xpose.msra.mxu0 0
    %560 = vmatprep.subr.bf16.mxu0 0
    %561 = vmatpush2.bf16.xpose.msra.mxu0 0
    %562 = vmatprep.subr.bf16.mxu0 0
    %563 = vmatpush2.bf16.xpose.msra.mxu0 0
    %564 = vmatprep.subr.bf16.mxu0 0
    %565 = vmatpush2.bf16.xpose.msra.mxu0 0
    %566 = vmatprep.subr.bf16.mxu0 0
    %567 = vmatpush2.bf16.xpose.msra.mxu0 0
    %568 = vmatprep.subr.bf16.mxu0 0
    %569 = vmatpush2.bf16.xpose.msra.mxu0 0
    %570 = vmatprep.mubr.bf16.mxu0 0
    %571 = vmatmul.mubr.bf16.gmra.mxu0 %v533
    %v572 = vpop.f32.mrf.mxu0
    %v573 = vadd.f32 0.0, %v572
    %v574 = vpop.f32.mrf.mxu0
    %v575 = vpop.f32.mrf.mxu0
    %v576 = vpop.f32.mrf.mxu0
    %577 = vdwg.mxu0
    %v579 = vsel %vm393, %v349, 0
    %v582 = vsel %vm393, %v365, 0
    %584 = vmatprep.subr.bf16.mxu0 0
    %585 = vmatpush1.bf16.xpose.msra.mxu0 0
    %586 = vmatprep.subr.bf16.mxu0 0
    %587 = vmatpush1.bf16.xpose.msra.mxu0 0
    %588 = vmatprep.subr.bf16.mxu0 0
    %589 = vmatpush1.bf16.xpose.msra.mxu0 0
    %590 = vmatprep.subr.bf16.mxu0 0
    %591 = vmatpush1.bf16.xpose.msra.mxu0 0
    %592 = vmatprep.subr.bf16.mxu0 0
    %593 = vmatpush1.bf16.xpose.msra.mxu0 0
    %594 = vmatprep.subr.bf16.mxu0 0
    %595 = vmatpush1.bf16.xpose.msra.mxu0 0
    %596 = vmatprep.subr.bf16.mxu0 0
    %597 = vmatpush1.bf16.xpose.msra.mxu0 0
    %598 = vmatprep.subr.bf16.mxu0 0
    %599 = vmatpush1.bf16.xpose.msra.mxu0 %v582
    %600 = vmatprep.subr.bf16.mxu0 0
    %601 = vmatpush2.bf16.xpose.msra.mxu0 0
    %602 = vmatprep.subr.bf16.mxu0 0
    %603 = vmatpush2.bf16.xpose.msra.mxu0 0
    %604 = vmatprep.subr.bf16.mxu0 0
    %605 = vmatpush2.bf16.xpose.msra.mxu0 0
    %606 = vmatprep.subr.bf16.mxu0 0
    %607 = vmatpush2.bf16.xpose.msra.mxu0 0
    %608 = vmatprep.subr.bf16.mxu0 0
    %609 = vmatpush2.bf16.xpose.msra.mxu0 0
    %610 = vmatprep.subr.bf16.mxu0 0
    %611 = vmatpush2.bf16.xpose.msra.mxu0 0
    %612 = vmatprep.subr.bf16.mxu0 0
    %613 = vmatpush2.bf16.xpose.msra.mxu0 0
    %614 = vmatprep.subr.bf16.mxu0 0
    %615 = vmatpush2.bf16.xpose.msra.mxu0 0
    %616 = vmatprep.mubr.bf16.mxu0 0
    %617 = vmatmul.mubr.bf16.gmra.mxu0 %v579
    %v618 = vpop.f32.mrf.mxu0
    %v619 = vadd.f32 0.0, %v618
    %v620 = vpop.f32.mrf.mxu0
    %v621 = vpop.f32.mrf.mxu0
    %v622 = vpop.f32.mrf.mxu0
    %623 = vdwg.mxu0
    %v625 = vsel %vm393, %v350, 0
    %v628 = vsel %vm393, %v366, 0
    %630 = vmatprep.subr.bf16.mxu0 0
    %631 = vmatpush1.bf16.xpose.msra.mxu0 0
    %632 = vmatprep.subr.bf16.mxu0 0
    %633 = vmatpush1.bf16.xpose.msra.mxu0 0
    %634 = vmatprep.subr.bf16.mxu0 0
    %635 = vmatpush1.bf16.xpose.msra.mxu0 0
    %636 = vmatprep.subr.bf16.mxu0 0
    %637 = vmatpush1.bf16.xpose.msra.mxu0 0
    %638 = vmatprep.subr.bf16.mxu0 0
    %639 = vmatpush1.bf16.xpose.msra.mxu0 0
    %640 = vmatprep.subr.bf16.mxu0 0
    %641 = vmatpush1.bf16.xpose.msra.mxu0 0
    %642 = vmatprep.subr.bf16.mxu0 0
    %643 = vmatpush1.bf16.xpose.msra.mxu0 0
    %644 = vmatprep.subr.bf16.mxu0 0
    %645 = vmatpush1.bf16.xpose.msra.mxu0 %v628
    %646 = vmatprep.subr.bf16.mxu0 0
    %647 = vmatpush2.bf16.xpose.msra.mxu0 0
    %648 = vmatprep.subr.bf16.mxu0 0
    %649 = vmatpush2.bf16.xpose.msra.mxu0 0
    %650 = vmatprep.subr.bf16.mxu0 0
    %651 = vmatpush2.bf16.xpose.msra.mxu0 0
    %652 = vmatprep.subr.bf16.mxu0 0
    %653 = vmatpush2.bf16.xpose.msra.mxu0 0
    %654 = vmatprep.subr.bf16.mxu0 0
    %655 = vmatpush2.bf16.xpose.msra.mxu0 0
    %656 = vmatprep.subr.bf16.mxu0 0
    %657 = vmatpush2.bf16.xpose.msra.mxu0 0
    %658 = vmatprep.subr.bf16.mxu0 0
    %659 = vmatpush2.bf16.xpose.msra.mxu0 0
    %660 = vmatprep.subr.bf16.mxu0 0
    %661 = vmatpush2.bf16.xpose.msra.mxu0 0
    %662 = vmatprep.mubr.bf16.mxu0 0
    %663 = vmatmul.mubr.bf16.gmra.mxu0 %v625
    %v664 = vpop.f32.mrf.mxu0
    %v665 = vadd.f32 0.0, %v664
    %v666 = vpop.f32.mrf.mxu0
    %v667 = vpop.f32.mrf.mxu0
    %v668 = vpop.f32.mrf.mxu0
    %669 = vdwg.mxu0
    %v671 = vsel %vm393, %v351, 0
    %v674 = vsel %vm393, %v367, 0
    %676 = vmatprep.subr.bf16.mxu0 0
    %677 = vmatpush1.bf16.xpose.msra.mxu0 0
    %678 = vmatprep.subr.bf16.mxu0 0
    %679 = vmatpush1.bf16.xpose.msra.mxu0 0
    %680 = vmatprep.subr.bf16.mxu0 0
    %681 = vmatpush1.bf16.xpose.msra.mxu0 0
    %682 = vmatprep.subr.bf16.mxu0 0
    %683 = vmatpush1.bf16.xpose.msra.mxu0 0
    %684 = vmatprep.subr.bf16.mxu0 0
    %685 = vmatpush1.bf16.xpose.msra.mxu0 0
    %686 = vmatprep.subr.bf16.mxu0 0
    %687 = vmatpush1.bf16.xpose.msra.mxu0 0
    %688 = vmatprep.subr.bf16.mxu0 0
    %689 = vmatpush1.bf16.xpose.msra.mxu0 0
    %690 = vmatprep.subr.bf16.mxu0 0
    %691 = vmatpush1.bf16.xpose.msra.mxu0 %v674
    %692 = vmatprep.subr.bf16.mxu0 0
    %693 = vmatpush2.bf16.xpose.msra.mxu0 0
    %694 = vmatprep.subr.bf16.mxu0 0
    %695 = vmatpush2.bf16.xpose.msra.mxu0 0
    %696 = vmatprep.subr.bf16.mxu0 0
    %697 = vmatpush2.bf16.xpose.msra.mxu0 0
    %698 = vmatprep.subr.bf16.mxu0 0
    %699 = vmatpush2.bf16.xpose.msra.mxu0 0
    %700 = vmatprep.subr.bf16.mxu0 0
    %701 = vmatpush2.bf16.xpose.msra.mxu0 0
    %702 = vmatprep.subr.bf16.mxu0 0
    %703 = vmatpush2.bf16.xpose.msra.mxu0 0
    %704 = vmatprep.subr.bf16.mxu0 0
    %705 = vmatpush2.bf16.xpose.msra.mxu0 0
    %706 = vmatprep.subr.bf16.mxu0 0
    %707 = vmatpush2.bf16.xpose.msra.mxu0 0
    %708 = vmatprep.mubr.bf16.mxu0 0
    %709 = vmatmul.mubr.bf16.gmra.mxu0 %v671
    %v710 = vpop.f32.mrf.mxu0
    %v711 = vadd.f32 0.0, %v710
    %v712 = vpop.f32.mrf.mxu0
    %v713 = vpop.f32.mrf.mxu0
    %v714 = vpop.f32.mrf.mxu0
    %715 = vdwg.mxu0
    %v717 = vsel %vm393, %v352, 0
    %v720 = vsel %vm393, %v368, 0
    %722 = vmatprep.subr.bf16.mxu0 0
    %723 = vmatpush1.bf16.xpose.msra.mxu0 0
    %724 = vmatprep.subr.bf16.mxu0 0
    %725 = vmatpush1.bf16.xpose.msra.mxu0 0
    %726 = vmatprep.subr.bf16.mxu0 0
    %727 = vmatpush1.bf16.xpose.msra.mxu0 0
    %728 = vmatprep.subr.bf16.mxu0 0
    %729 = vmatpush1.bf16.xpose.msra.mxu0 0
    %730 = vmatprep.subr.bf16.mxu0 0
    %731 = vmatpush1.bf16.xpose.msra.mxu0 0
    %732 = vmatprep.subr.bf16.mxu0 0
    %733 = vmatpush1.bf16.xpose.msra.mxu0 0
    %734 = vmatprep.subr.bf16.mxu0 0
    %735 = vmatpush1.bf16.xpose.msra.mxu0 0
    %736 = vmatprep.subr.bf16.mxu0 0
    %737 = vmatpush1.bf16.xpose.msra.mxu0 %v720
    %738 = vmatprep.subr.bf16.mxu0 0
    %739 = vmatpush2.bf16.xpose.msra.mxu0 0
    %740 = vmatprep.subr.bf16.mxu0 0
    %741 = vmatpush2.bf16.xpose.msra.mxu0 0
    %742 = vmatprep.subr.bf16.mxu0 0
    %743 = vmatpush2.bf16.xpose.msra.mxu0 0
    %744 = vmatprep.subr.bf16.mxu0 0
    %745 = vmatpush2.bf16.xpose.msra.mxu0 0
    %746 = vmatprep.subr.bf16.mxu0 0
    %747 = vmatpush2.bf16.xpose.msra.mxu0 0
    %748 = vmatprep.subr.bf16.mxu0 0
    %749 = vmatpush2.bf16.xpose.msra.mxu0 0
    %750 = vmatprep.subr.bf16.mxu0 0
    %751 = vmatpush2.bf16.xpose.msra.mxu0 0
    %752 = vmatprep.subr.bf16.mxu0 0
    %753 = vmatpush2.bf16.xpose.msra.mxu0 0
    %754 = vmatprep.mubr.bf16.mxu0 0
    %755 = vmatmul.mubr.bf16.gmra.mxu0 %v717
    %v756 = vpop.f32.mrf.mxu0
    %v757 = vadd.f32 0.0, %v756
    %v758 = vpop.f32.mrf.mxu0
    %v759 = vpop.f32.mrf.mxu0
    %v760 = vpop.f32.mrf.mxu0
    %761 = vdwg.mxu0
    %v763 = vsel %vm393, %v353, 0
    %v766 = vsel %vm393, %v369, 0
    %768 = vmatprep.subr.bf16.mxu0 0
    %769 = vmatpush1.bf16.xpose.msra.mxu0 0
    %770 = vmatprep.subr.bf16.mxu0 0
    %771 = vmatpush1.bf16.xpose.msra.mxu0 0
    %772 = vmatprep.subr.bf16.mxu0 0
    %773 = vmatpush1.bf16.xpose.msra.mxu0 0
    %774 = vmatprep.subr.bf16.mxu0 0
    %775 = vmatpush1.bf16.xpose.msra.mxu0 0
    %776 = vmatprep.subr.bf16.mxu0 0
    %777 = vmatpush1.bf16.xpose.msra.mxu0 0
    %778 = vmatprep.subr.bf16.mxu0 0
    %779 = vmatpush1.bf16.xpose.msra.mxu0 0
    %780 = vmatprep.subr.bf16.mxu0 0
    %781 = vmatpush1.bf16.xpose.msra.mxu0 0
    %782 = vmatprep.subr.bf16.mxu0 0
    %783 = vmatpush1.bf16.xpose.msra.mxu0 %v766
    %784 = vmatprep.subr.bf16.mxu0 0
    %785 = vmatpush2.bf16.xpose.msra.mxu0 0
    %786 = vmatprep.subr.bf16.mxu0 0
    %787 = vmatpush2.bf16.xpose.msra.mxu0 0
    %788 = vmatprep.subr.bf16.mxu0 0
    %789 = vmatpush2.bf16.xpose.msra.mxu0 0
    %790 = vmatprep.subr.bf16.mxu0 0
    %791 = vmatpush2.bf16.xpose.msra.mxu0 0
    %792 = vmatprep.subr.bf16.mxu0 0
    %793 = vmatpush2.bf16.xpose.msra.mxu0 0
    %794 = vmatprep.subr.bf16.mxu0 0
    %795 = vmatpush2.bf16.xpose.msra.mxu0 0
    %796 = vmatprep.subr.bf16.mxu0 0
    %797 = vmatpush2.bf16.xpose.msra.mxu0 0
    %798 = vmatprep.subr.bf16.mxu0 0
    %799 = vmatpush2.bf16.xpose.msra.mxu0 0
    %800 = vmatprep.mubr.bf16.mxu0 0
    %801 = vmatmul.mubr.bf16.gmra.mxu0 %v763
    %v802 = vpop.f32.mrf.mxu0
    %v803 = vadd.f32 0.0, %v802
    %v804 = vpop.f32.mrf.mxu0
    %v805 = vpop.f32.mrf.mxu0
    %v806 = vpop.f32.mrf.mxu0
    %807 = vdwg.mxu0
    %v809 = vsel %vm393, %v354, 0
    %v812 = vsel %vm393, %v370, 0
    %814 = vmatprep.subr.bf16.mxu0 0
    %815 = vmatpush1.bf16.xpose.msra.mxu0 0
    %816 = vmatprep.subr.bf16.mxu0 0
    %817 = vmatpush1.bf16.xpose.msra.mxu0 0
    %818 = vmatprep.subr.bf16.mxu0 0
    %819 = vmatpush1.bf16.xpose.msra.mxu0 0
    %820 = vmatprep.subr.bf16.mxu0 0
    %821 = vmatpush1.bf16.xpose.msra.mxu0 0
    %822 = vmatprep.subr.bf16.mxu0 0
    %823 = vmatpush1.bf16.xpose.msra.mxu0 0
    %824 = vmatprep.subr.bf16.mxu0 0
    %825 = vmatpush1.bf16.xpose.msra.mxu0 0
    %826 = vmatprep.subr.bf16.mxu0 0
    %827 = vmatpush1.bf16.xpose.msra.mxu0 0
    %828 = vmatprep.subr.bf16.mxu0 0
    %829 = vmatpush1.bf16.xpose.msra.mxu0 %v812
    %830 = vmatprep.subr.bf16.mxu0 0
    %831 = vmatpush2.bf16.xpose.msra.mxu0 0
    %832 = vmatprep.subr.bf16.mxu0 0
    %833 = vmatpush2.bf16.xpose.msra.mxu0 0
    %834 = vmatprep.subr.bf16.mxu0 0
    %835 = vmatpush2.bf16.xpose.msra.mxu0 0
    %836 = vmatprep.subr.bf16.mxu0 0
    %837 = vmatpush2.bf16.xpose.msra.mxu0 0
    %838 = vmatprep.subr.bf16.mxu0 0
    %839 = vmatpush2.bf16.xpose.msra.mxu0 0
    %840 = vmatprep.subr.bf16.mxu0 0
    %841 = vmatpush2.bf16.xpose.msra.mxu0 0
    %842 = vmatprep.subr.bf16.mxu0 0
    %843 = vmatpush2.bf16.xpose.msra.mxu0 0
    %844 = vmatprep.subr.bf16.mxu0 0
    %845 = vmatpush2.bf16.xpose.msra.mxu0 0
    %846 = vmatprep.mubr.bf16.mxu0 0
    %847 = vmatmul.mubr.bf16.gmra.mxu0 %v809
    %v848 = vpop.f32.mrf.mxu0
    %v849 = vadd.f32 0.0, %v848
    %v850 = vpop.f32.mrf.mxu0
    %v851 = vpop.f32.mrf.mxu0
    %v852 = vpop.f32.mrf.mxu0
    %853 = vdwg.mxu0
    %v855 = vsel %vm393, %v355, 0
    %v858 = vsel %vm393, %v371, 0
    %860 = vmatprep.subr.bf16.mxu0 0
    %861 = vmatpush1.bf16.xpose.msra.mxu0 0
    %862 = vmatprep.subr.bf16.mxu0 0
    %863 = vmatpush1.bf16.xpose.msra.mxu0 0
    %864 = vmatprep.subr.bf16.mxu0 0
    %865 = vmatpush1.bf16.xpose.msra.mxu0 0
    %866 = vmatprep.subr.bf16.mxu0 0
    %867 = vmatpush1.bf16.xpose.msra.mxu0 0
    %868 = vmatprep.subr.bf16.mxu0 0
    %869 = vmatpush1.bf16.xpose.msra.mxu0 0
    %870 = vmatprep.subr.bf16.mxu0 0
    %871 = vmatpush1.bf16.xpose.msra.mxu0 0
    %872 = vmatprep.subr.bf16.mxu0 0
    %873 = vmatpush1.bf16.xpose.msra.mxu0 0
    %874 = vmatprep.subr.bf16.mxu0 0
    %875 = vmatpush1.bf16.xpose.msra.mxu0 %v858
    %876 = vmatprep.subr.bf16.mxu0 0
    %877 = vmatpush2.bf16.xpose.msra.mxu0 0
    %878 = vmatprep.subr.bf16.mxu0 0
    %879 = vmatpush2.bf16.xpose.msra.mxu0 0
    %880 = vmatprep.subr.bf16.mxu0 0
    %881 = vmatpush2.bf16.xpose.msra.mxu0 0
    %882 = vmatprep.subr.bf16.mxu0 0
    %883 = vmatpush2.bf16.xpose.msra.mxu0 0
    %884 = vmatprep.subr.bf16.mxu0 0
    %885 = vmatpush2.bf16.xpose.msra.mxu0 0
    %886 = vmatprep.subr.bf16.mxu0 0
    %887 = vmatpush2.bf16.xpose.msra.mxu0 0
    %888 = vmatprep.subr.bf16.mxu0 0
    %889 = vmatpush2.bf16.xpose.msra.mxu0 0
    %890 = vmatprep.subr.bf16.mxu0 0
    %891 = vmatpush2.bf16.xpose.msra.mxu0 0
    %892 = vmatprep.mubr.bf16.mxu0 0
    %893 = vmatmul.mubr.bf16.gmra.mxu0 %v855
    %v894 = vpop.f32.mrf.mxu0
    %v895 = vadd.f32 0.0, %v894
    %v896 = vpop.f32.mrf.mxu0
    %v897 = vpop.f32.mrf.mxu0
    %v898 = vpop.f32.mrf.mxu0
    %899 = vdwg.mxu0
    %v901 = vsel %vm393, %v356, 0
    %v904 = vsel %vm393, %v372, 0
    %906 = vmatprep.subr.bf16.mxu0 0
    %907 = vmatpush1.bf16.xpose.msra.mxu0 0
    %908 = vmatprep.subr.bf16.mxu0 0
    %909 = vmatpush1.bf16.xpose.msra.mxu0 0
    %910 = vmatprep.subr.bf16.mxu0 0
    %911 = vmatpush1.bf16.xpose.msra.mxu0 0
    %912 = vmatprep.subr.bf16.mxu0 0
    %913 = vmatpush1.bf16.xpose.msra.mxu0 0
    %914 = vmatprep.subr.bf16.mxu0 0
    %915 = vmatpush1.bf16.xpose.msra.mxu0 0
    %916 = vmatprep.subr.bf16.mxu0 0
    %917 = vmatpush1.bf16.xpose.msra.mxu0 0
    %918 = vmatprep.subr.bf16.mxu0 0
    %919 = vmatpush1.bf16.xpose.msra.mxu0 0
    %920 = vmatprep.subr.bf16.mxu0 0
    %921 = vmatpush1.bf16.xpose.msra.mxu0 %v904
    %922 = vmatprep.subr.bf16.mxu0 0
    %923 = vmatpush2.bf16.xpose.msra.mxu0 0
    %924 = vmatprep.subr.bf16.mxu0 0
    %925 = vmatpush2.bf16.xpose.msra.mxu0 0
    %926 = vmatprep.subr.bf16.mxu0 0
    %927 = vmatpush2.bf16.xpose.msra.mxu0 0
    %928 = vmatprep.subr.bf16.mxu0 0
    %929 = vmatpush2.bf16.xpose.msra.mxu0 0
    %930 = vmatprep.subr.bf16.mxu0 0
    %931 = vmatpush2.bf16.xpose.msra.mxu0 0
    %932 = vmatprep.subr.bf16.mxu0 0
    %933 = vmatpush2.bf16.xpose.msra.mxu0 0
    %934 = vmatprep.subr.bf16.mxu0 0
    %935 = vmatpush2.bf16.xpose.msra.mxu0 0
    %936 = vmatprep.subr.bf16.mxu0 0
    %937 = vmatpush2.bf16.xpose.msra.mxu0 0
    %938 = vmatprep.mubr.bf16.mxu0 0
    %939 = vmatmul.mubr.bf16.gmra.mxu0 %v901
    %v940 = vpop.f32.mrf.mxu0
    %v941 = vadd.f32 0.0, %v940
    %v942 = vpop.f32.mrf.mxu0
    %v943 = vpop.f32.mrf.mxu0
    %v944 = vpop.f32.mrf.mxu0
    %945 = vdwg.mxu0
    %v947 = vsel %vm393, %v357, 0
    %v950 = vsel %vm393, %v373, 0
    %952 = vmatprep.subr.bf16.mxu0 0
    %953 = vmatpush1.bf16.xpose.msra.mxu0 0
    %954 = vmatprep.subr.bf16.mxu0 0
    %955 = vmatpush1.bf16.xpose.msra.mxu0 0
    %956 = vmatprep.subr.bf16.mxu0 0
    %957 = vmatpush1.bf16.xpose.msra.mxu0 0
    %958 = vmatprep.subr.bf16.mxu0 0
    %959 = vmatpush1.bf16.xpose.msra.mxu0 0
    %960 = vmatprep.subr.bf16.mxu0 0
    %961 = vmatpush1.bf16.xpose.msra.mxu0 0
    %962 = vmatprep.subr.bf16.mxu0 0
    %963 = vmatpush1.bf16.xpose.msra.mxu0 0
    %964 = vmatprep.subr.bf16.mxu0 0
    %965 = vmatpush1.bf16.xpose.msra.mxu0 0
    %966 = vmatprep.subr.bf16.mxu0 0
    %967 = vmatpush1.bf16.xpose.msra.mxu0 %v950
    %968 = vmatprep.subr.bf16.mxu0 0
    %969 = vmatpush2.bf16.xpose.msra.mxu0 0
    %970 = vmatprep.subr.bf16.mxu0 0
    %971 = vmatpush2.bf16.xpose.msra.mxu0 0
    %972 = vmatprep.subr.bf16.mxu0 0
    %973 = vmatpush2.bf16.xpose.msra.mxu0 0
    %974 = vmatprep.subr.bf16.mxu0 0
    %975 = vmatpush2.bf16.xpose.msra.mxu0 0
    %976 = vmatprep.subr.bf16.mxu0 0
    %977 = vmatpush2.bf16.xpose.msra.mxu0 0
    %978 = vmatprep.subr.bf16.mxu0 0
    %979 = vmatpush2.bf16.xpose.msra.mxu0 0
    %980 = vmatprep.subr.bf16.mxu0 0
    %981 = vmatpush2.bf16.xpose.msra.mxu0 0
    %982 = vmatprep.subr.bf16.mxu0 0
    %983 = vmatpush2.bf16.xpose.msra.mxu0 0
    %984 = vmatprep.mubr.bf16.mxu0 0
    %985 = vmatmul.mubr.bf16.gmra.mxu0 %v947
    %v986 = vpop.f32.mrf.mxu0
    %v987 = vadd.f32 0.0, %v986
    %v988 = vpop.f32.mrf.mxu0
    %v989 = vpop.f32.mrf.mxu0
    %v990 = vpop.f32.mrf.mxu0
    %991 = vdwg.mxu0
    %v993 = vsel %vm393, %v358, 0
    %v996 = vsel %vm393, %v374, 0
    %998 = vmatprep.subr.bf16.mxu0 0
    %999 = vmatpush1.bf16.xpose.msra.mxu0 0
    %1000 = vmatprep.subr.bf16.mxu0 0
    %1001 = vmatpush1.bf16.xpose.msra.mxu0 0
    %1002 = vmatprep.subr.bf16.mxu0 0
    %1003 = vmatpush1.bf16.xpose.msra.mxu0 0
    %1004 = vmatprep.subr.bf16.mxu0 0
    %1005 = vmatpush1.bf16.xpose.msra.mxu0 0
    %1006 = vmatprep.subr.bf16.mxu0 0
    %1007 = vmatpush1.bf16.xpose.msra.mxu0 0
    %1008 = vmatprep.subr.bf16.mxu0 0
    %1009 = vmatpush1.bf16.xpose.msra.mxu0 0
    %1010 = vmatprep.subr.bf16.mxu0 0
    %1011 = vmatpush1.bf16.xpose.msra.mxu0 0
    %1012 = vmatprep.subr.bf16.mxu0 0
    %1013 = vmatpush1.bf16.xpose.msra.mxu0 %v996
    %1014 = vmatprep.subr.bf16.mxu0 0
    %1015 = vmatpush2.bf16.xpose.msra.mxu0 0
    %1016 = vmatprep.subr.bf16.mxu0 0
    %1017 = vmatpush2.bf16.xpose.msra.mxu0 0
    %1018 = vmatprep.subr.bf16.mxu0 0
    %1019 = vmatpush2.bf16.xpose.msra.mxu0 0
    %1020 = vmatprep.subr.bf16.mxu0 0
    %1021 = vmatpush2.bf16.xpose.msra.mxu0 0
    %1022 = vmatprep.subr.bf16.mxu0 0
    %1023 = vmatpush2.bf16.xpose.msra.mxu0 0
    %1024 = vmatprep.subr.bf16.mxu0 0
    %1025 = vmatpush2.bf16.xpose.msra.mxu0 0
    %1026 = vmatprep.subr.bf16.mxu0 0
    %1027 = vmatpush2.bf16.xpose.msra.mxu0 0
    %1028 = vmatprep.subr.bf16.mxu0 0
    %1029 = vmatpush2.bf16.xpose.msra.mxu0 0
    %1030 = vmatprep.mubr.bf16.mxu0 0
    %1031 = vmatmul.mubr.bf16.gmra.mxu0 %v993
    %v1032 = vpop.f32.mrf.mxu0
    %v1033 = vadd.f32 0.0, %v1032
    %v1034 = vpop.f32.mrf.mxu0
    %v1035 = vpop.f32.mrf.mxu0
    %v1036 = vpop.f32.mrf.mxu0
    %1037 = vdwg.mxu0
    %v1039 = vsel %vm393, %v359, 0
    %v1042 = vsel %vm393, %v375, 0
    %1044 = vmatprep.subr.bf16.mxu0 0
    %1045 = vmatpush1.bf16.xpose.msra.mxu0 0
    %1046 = vmatprep.subr.bf16.mxu0 0
    %1047 = vmatpush1.bf16.xpose.msra.mxu0 0
    %1048 = vmatprep.subr.bf16.mxu0 0
    %1049 = vmatpush1.bf16.xpose.msra.mxu0 0
    %1050 = vmatprep.subr.bf16.mxu0 0
    %1051 = vmatpush1.bf16.xpose.msra.mxu0 0
    %1052 = vmatprep.subr.bf16.mxu0 0
    %1053 = vmatpush1.bf16.xpose.msra.mxu0 0
    %1054 = vmatprep.subr.bf16.mxu0 0
    %1055 = vmatpush1.bf16.xpose.msra.mxu0 0
    %1056 = vmatprep.subr.bf16.mxu0 0
    %1057 = vmatpush1.bf16.xpose.msra.mxu0 0
    %1058 = vmatprep.subr.bf16.mxu0 0
    %1059 = vmatpush1.bf16.xpose.msra.mxu0 %v1042
    %1060 = vmatprep.subr.bf16.mxu0 0
    %1061 = vmatpush2.bf16.xpose.msra.mxu0 0
    %1062 = vmatprep.subr.bf16.mxu0 0
    %1063 = vmatpush2.bf16.xpose.msra.mxu0 0
    %1064 = vmatprep.subr.bf16.mxu0 0
    %1065 = vmatpush2.bf16.xpose.msra.mxu0 0
    %1066 = vmatprep.subr.bf16.mxu0 0
    %1067 = vmatpush2.bf16.xpose.msra.mxu0 0
    %1068 = vmatprep.subr.bf16.mxu0 0
    %1069 = vmatpush2.bf16.xpose.msra.mxu0 0
    %1070 = vmatprep.subr.bf16.mxu0 0
    %1071 = vmatpush2.bf16.xpose.msra.mxu0 0
    %1072 = vmatprep.subr.bf16.mxu0 0
    %1073 = vmatpush2.bf16.xpose.msra.mxu0 0
    %1074 = vmatprep.subr.bf16.mxu0 0
    %1075 = vmatpush2.bf16.xpose.msra.mxu0 0
    %1076 = vmatprep.mubr.bf16.mxu0 0
    %1077 = vmatmul.mubr.bf16.gmra.mxu0 %v1039
    %v1078 = vpop.f32.mrf.mxu0
    %v1079 = vadd.f32 0.0, %v1078
    %v1080 = vpop.f32.mrf.mxu0
    %v1081 = vpop.f32.mrf.mxu0
    %v1082 = vpop.f32.mrf.mxu0
    %1083 = vdwg.mxu0
    %v1085 = vsel %vm393, %v360, 0
    %v1088 = vsel %vm393, %v376, 0
    %1090 = vmatprep.subr.bf16.mxu0 0
    %1091 = vmatpush1.bf16.xpose.msra.mxu0 0
    %1092 = vmatprep.subr.bf16.mxu0 0
    %1093 = vmatpush1.bf16.xpose.msra.mxu0 0
    %1094 = vmatprep.subr.bf16.mxu0 0
    %1095 = vmatpush1.bf16.xpose.msra.mxu0 0
    %1096 = vmatprep.subr.bf16.mxu0 0
    %1097 = vmatpush1.bf16.xpose.msra.mxu0 0
    %1098 = vmatprep.subr.bf16.mxu0 0
    %1099 = vmatpush1.bf16.xpose.msra.mxu0 0
    %1100 = vmatprep.subr.bf16.mxu0 0
    %1101 = vmatpush1.bf16.xpose.msra.mxu0 0
    %1102 = vmatprep.subr.bf16.mxu0 0
    %1103 = vmatpush1.bf16.xpose.msra.mxu0 0
    %1104 = vmatprep.subr.bf16.mxu0 0
    %1105 = vmatpush1.bf16.xpose.msra.mxu0 %v1088
    %1106 = vmatprep.subr.bf16.mxu0 0
    %1107 = vmatpush2.bf16.xpose.msra.mxu0 0
    %1108 = vmatprep.subr.bf16.mxu0 0
    %1109 = vmatpush2.bf16.xpose.msra.mxu0 0
    %1110 = vmatprep.subr.bf16.mxu0 0
    %1111 = vmatpush2.bf16.xpose.msra.mxu0 0
    %1112 = vmatprep.subr.bf16.mxu0 0
    %1113 = vmatpush2.bf16.xpose.msra.mxu0 0
    %1114 = vmatprep.subr.bf16.mxu0 0
    %1115 = vmatpush2.bf16.xpose.msra.mxu0 0
    %1116 = vmatprep.subr.bf16.mxu0 0
    %1117 = vmatpush2.bf16.xpose.msra.mxu0 0
    %1118 = vmatprep.subr.bf16.mxu0 0
    %1119 = vmatpush2.bf16.xpose.msra.mxu0 0
    %1120 = vmatprep.subr.bf16.mxu0 0
    %1121 = vmatpush2.bf16.xpose.msra.mxu0 0
    %1122 = vmatprep.mubr.bf16.mxu0 0
    %1123 = vmatmul.mubr.bf16.gmra.mxu0 %v1085
    %v1124 = vpop.f32.mrf.mxu0
    %v1125 = vadd.f32 0.0, %v1124
    %v1126 = vpop.f32.mrf.mxu0
    %v1127 = vpop.f32.mrf.mxu0
    %v1128 = vpop.f32.mrf.mxu0
    %1129 = vdwg.mxu0
    %vm1130 = vcmask 64512
    %v1131 = vsel %vm1130, %v435, -inf
    %1132 = vmax.xlane.f32.xlu0 %v1131
    %v1133 = vpop.xlane.xlu0 %1132
    %v1134 = vsel %vm1130, %v481, -inf
    %1135 = vmax.xlane.f32.xlu0 %v1134
    %v1136 = vpop.xlane.xlu0 %1135
    %v1137 = vsel %vm1130, %v527, -inf
    %1138 = vmax.xlane.f32.xlu0 %v1137
    %v1139 = vpop.xlane.xlu0 %1138
    %v1140 = vsel %vm1130, %v573, -inf
    %1141 = vmax.xlane.f32.xlu0 %v1140
    %v1142 = vpop.xlane.xlu0 %1141
    %v1143 = vsel %vm1130, %v619, -inf
    %1144 = vmax.xlane.f32.xlu0 %v1143
    %v1145 = vpop.xlane.xlu0 %1144
    %v1146 = vsel %vm1130, %v665, -inf
    %1147 = vmax.xlane.f32.xlu0 %v1146
    %v1148 = vpop.xlane.xlu0 %1147
    %v1149 = vsel %vm1130, %v711, -inf
    %1150 = vmax.xlane.f32.xlu0 %v1149
    %v1151 = vpop.xlane.xlu0 %1150
    %v1152 = vsel %vm1130, %v757, -inf
    %1153 = vmax.xlane.f32.xlu0 %v1152
    %v1154 = vpop.xlane.xlu0 %1153
    %v1155 = vsel %vm1130, %v803, -inf
    %1156 = vmax.xlane.f32.xlu0 %v1155
    %v1157 = vpop.xlane.xlu0 %1156
    %v1158 = vsel %vm1130, %v849, -inf
    %1159 = vmax.xlane.f32.xlu0 %v1158
    %v1160 = vpop.xlane.xlu0 %1159
    %v1161 = vsel %vm1130, %v895, -inf
    %1162 = vmax.xlane.f32.xlu0 %v1161
    %v1163 = vpop.xlane.xlu0 %1162
    %v1164 = vsel %vm1130, %v941, -inf
    %1165 = vmax.xlane.f32.xlu0 %v1164
    %v1166 = vpop.xlane.xlu0 %1165
    %v1167 = vsel %vm1130, %v987, -inf
    %1168 = vmax.xlane.f32.xlu0 %v1167
    %v1169 = vpop.xlane.xlu0 %1168
    %v1170 = vsel %vm1130, %v1033, -inf
    %1171 = vmax.xlane.f32.xlu0 %v1170
    %v1172 = vpop.xlane.xlu0 %1171
    %v1173 = vsel %vm1130, %v1079, -inf
    %1174 = vmax.xlane.f32.xlu0 %v1173
    %v1175 = vpop.xlane.xlu0 %1174
    %v1176 = vsel %vm1130, %v1125, -inf
    %1177 = vmax.xlane.f32.xlu0 %v1176
    %v1178 = vpop.xlane.xlu0 %1177
    %v1179 = vsub.f32 %v435, %v1133
    %v1180 = vsub.f32 %v481, %v1136
    %v1181 = vsub.f32 %v527, %v1139
    %v1182 = vsub.f32 %v573, %v1142
    %v1183 = vsub.f32 %v619, %v1145
    %v1184 = vsub.f32 %v665, %v1148
    %v1185 = vsub.f32 %v711, %v1151
    %v1186 = vsub.f32 %v757, %v1154
    %v1187 = vsub.f32 %v803, %v1157
    %v1188 = vsub.f32 %v849, %v1160
    %v1189 = vsub.f32 %v895, %v1163
    %v1190 = vsub.f32 %v941, %v1166
    %v1191 = vsub.f32 %v987, %v1169
    %v1192 = vsub.f32 %v1033, %v1172
    %v1193 = vsub.f32 %v1079, %v1175
    %v1194 = vsub.f32 %v1125, %v1178
    %v1195 = vmul.f32 %v1179, 1.442695
    %v1196 = vpow.pop %v1195
    %v1197 = vmul.f32 %v1180, 1.442695
    %v1198 = vpow.pop %v1197
    %v1199 = vmul.f32 %v1181, 1.442695
    %v1200 = vpow.pop %v1199
    %v1201 = vmul.f32 %v1182, 1.442695
    %v1202 = vpow.pop %v1201
    %v1203 = vmul.f32 %v1183, 1.442695
    %v1204 = vpow.pop %v1203
    %v1205 = vmul.f32 %v1184, 1.442695
    %v1206 = vpow.pop %v1205
    %v1207 = vmul.f32 %v1185, 1.442695
    %v1208 = vpow.pop %v1207
    %v1209 = vmul.f32 %v1186, 1.442695
    %v1210 = vpow.pop %v1209
    %v1211 = vmul.f32 %v1187, 1.442695
    %v1212 = vpow.pop %v1211
    %v1213 = vmul.f32 %v1188, 1.442695
    %v1214 = vpow.pop %v1213
    %v1215 = vmul.f32 %v1189, 1.442695
    %v1216 = vpow.pop %v1215
    %v1217 = vmul.f32 %v1190, 1.442695
    %v1218 = vpow.pop %v1217
    %v1219 = vmul.f32 %v1191, 1.442695
    %v1220 = vpow.pop %v1219
    %v1221 = vmul.f32 %v1192, 1.442695
    %v1222 = vpow.pop %v1221
    %v1223 = vmul.f32 %v1193, 1.442695
    %v1224 = vpow.pop %v1223
    %v1225 = vmul.f32 %v1194, 1.442695
    %v1226 = vpow.pop %v1225
    %v1227 = vsel %vm1130, %v1196, 0.0
    %1228 = vadd.xlane.f32.xlu0 %v1227
    %v1229 = vpop.xlane.xlu0 %1228
    %v1230 = vsel %vm1130, %v1198, 0.0
    %1231 = vadd.xlane.f32.xlu0 %v1230
    %v1232 = vpop.xlane.xlu0 %1231
    %v1233 = vsel %vm1130, %v1200, 0.0
    %1234 = vadd.xlane.f32.xlu0 %v1233
    %v1235 = vpop.xlane.xlu0 %1234
    %v1236 = vsel %vm1130, %v1202, 0.0
    %1237 = vadd.xlane.f32.xlu0 %v1236
    %v1238 = vpop.xlane.xlu0 %1237
    %v1239 = vsel %vm1130, %v1204, 0.0
    %1240 = vadd.xlane.f32.xlu0 %v1239
    %v1241 = vpop.xlane.xlu0 %1240
    %v1242 = vsel %vm1130, %v1206, 0.0
    %1243 = vadd.xlane.f32.xlu0 %v1242
    %v1244 = vpop.xlane.xlu0 %1243
    %v1245 = vsel %vm1130, %v1208, 0.0
    %1246 = vadd.xlane.f32.xlu0 %v1245
    %v1247 = vpop.xlane.xlu0 %1246
    %v1248 = vsel %vm1130, %v1210, 0.0
    %1249 = vadd.xlane.f32.xlu0 %v1248
    %v1250 = vpop.xlane.xlu0 %1249
    %v1251 = vsel %vm1130, %v1212, 0.0
    %1252 = vadd.xlane.f32.xlu0 %v1251
    %v1253 = vpop.xlane.xlu0 %1252
    %v1254 = vsel %vm1130, %v1214, 0.0
    %1255 = vadd.xlane.f32.xlu0 %v1254
    %v1256 = vpop.xlane.xlu0 %1255
    %v1257 = vsel %vm1130, %v1216, 0.0
    %1258 = vadd.xlane.f32.xlu0 %v1257
    %v1259 = vpop.xlane.xlu0 %1258
    %v1260 = vsel %vm1130, %v1218, 0.0
    %1261 = vadd.xlane.f32.xlu0 %v1260
    %v1262 = vpop.xlane.xlu0 %1261
    %v1263 = vsel %vm1130, %v1220, 0.0
    %1264 = vadd.xlane.f32.xlu0 %v1263
    %v1265 = vpop.xlane.xlu0 %1264
    %v1266 = vsel %vm1130, %v1222, 0.0
    %1267 = vadd.xlane.f32.xlu0 %v1266
    %v1268 = vpop.xlane.xlu0 %1267
    %v1269 = vsel %vm1130, %v1224, 0.0
    %1270 = vadd.xlane.f32.xlu0 %v1269
    %v1271 = vpop.xlane.xlu0 %1270
    %v1272 = vsel %vm1130, %v1226, 0.0
    %1273 = vadd.xlane.f32.xlu0 %v1272
    %v1274 = vpop.xlane.xlu0 %1273
    %v1275 = vrcp.pop %v1229
    %v1276 = vrcp.pop %v1232
    %v1277 = vrcp.pop %v1235
    %v1278 = vrcp.pop %v1238
    %v1279 = vrcp.pop %v1241
    %v1280 = vrcp.pop %v1244
    %v1281 = vrcp.pop %v1247
    %v1282 = vrcp.pop %v1250
    %v1283 = vrcp.pop %v1253
    %v1284 = vrcp.pop %v1256
    %v1285 = vrcp.pop %v1259
    %v1286 = vrcp.pop %v1262
    %v1287 = vrcp.pop %v1265
    %v1288 = vrcp.pop %v1268
    %v1289 = vrcp.pop %v1271
    %v1290 = vrcp.pop %v1274
    %v1291 = vmul.f32 %v1196, %v1275
    %v1292 = vmul.f32 %v1198, %v1276
    %v1293 = vmul.f32 %v1200, %v1277
    %v1294 = vmul.f32 %v1202, %v1278
    %v1295 = vmul.f32 %v1204, %v1279
    %v1296 = vmul.f32 %v1206, %v1280
    %v1297 = vmul.f32 %v1208, %v1281
    %v1298 = vmul.f32 %v1210, %v1282
    %v1299 = vmul.f32 %v1212, %v1283
    %v1300 = vmul.f32 %v1214, %v1284
    %v1301 = vmul.f32 %v1216, %v1285
    %v1302 = vmul.f32 %v1218, %v1286
    %v1303 = vmul.f32 %v1220, %v1287
    %v1304 = vmul.f32 %v1222, %v1288
    %v1305 = vmul.f32 %v1224, %v1289
    %v1306 = vmul.f32 %v1226, %v1290
    %v1307 = vpack.c.bf16 %v1291, %v1291
    %v1308 = vpack.c.bf16 %v1292, %v1292
    %v1309 = vpack.c.bf16 %v1293, %v1293
    %v1310 = vpack.c.bf16 %v1294, %v1294
    %v1311 = vpack.c.bf16 %v1295, %v1295
    %v1312 = vpack.c.bf16 %v1296, %v1296
    %v1313 = vpack.c.bf16 %v1297, %v1297
    %v1314 = vpack.c.bf16 %v1298, %v1298
    %v1315 = vpack.c.bf16 %v1299, %v1299
    %v1316 = vpack.c.bf16 %v1300, %v1300
    %v1317 = vpack.c.bf16 %v1301, %v1301
    %v1318 = vpack.c.bf16 %v1302, %v1302
    %v1319 = vpack.c.bf16 %v1303, %v1303
    %v1320 = vpack.c.bf16 %v1304, %v1304
    %v1321 = vpack.c.bf16 %v1305, %v1305
    %v1322 = vpack.c.bf16 %v1306, %v1306
    %v1324 = vsel %vm1130, %v1307, 0
    %vm1326 = vcmask 1043456
    %v1328 = vsel %vm1326, %v377, 0
    %1330 = vmatprep.subr.bf16.mxu0 0
    %1331 = vmatpush1.bf16.msra.mxu0 0
    %1332 = vmatprep.subr.bf16.mxu0 0
    %1333 = vmatpush1.bf16.msra.mxu0 0
    %1334 = vmatprep.subr.bf16.mxu0 0
    %1335 = vmatpush1.bf16.msra.mxu0 0
    %1336 = vmatprep.subr.bf16.mxu0 0
    %1337 = vmatpush1.bf16.msra.mxu0 0
    %1338 = vmatprep.subr.bf16.mxu0 0
    %1339 = vmatpush1.bf16.msra.mxu0 0
    %1340 = vmatprep.subr.bf16.mxu0 0
    %1341 = vmatpush1.bf16.msra.mxu0 0
    %1342 = vmatprep.subr.bf16.mxu0 0
    %1343 = vmatpush1.bf16.msra.mxu0 0
    %1344 = vmatprep.subr.bf16.mxu0 0
    %1345 = vmatpush1.bf16.msra.mxu0 %v1328
    %1346 = vmatprep.subr.bf16.mxu0 0
    %1347 = vmatpush2.bf16.msra.mxu0 0
    %1348 = vmatprep.subr.bf16.mxu0 0
    %1349 = vmatpush2.bf16.msra.mxu0 0
    %1350 = vmatprep.subr.bf16.mxu0 0
    %1351 = vmatpush2.bf16.msra.mxu0 0
    %1352 = vmatprep.subr.bf16.mxu0 0
    %1353 = vmatpush2.bf16.msra.mxu0 0
    %1354 = vmatprep.subr.bf16.mxu0 0
    %1355 = vmatpush2.bf16.msra.mxu0 0
    %1356 = vmatprep.subr.bf16.mxu0 0
    %1357 = vmatpush2.bf16.msra.mxu0 0
    %1358 = vmatprep.subr.bf16.mxu0 0
    %1359 = vmatpush2.bf16.msra.mxu0 0
    %1360 = vmatprep.subr.bf16.mxu0 0
    %1361 = vmatpush2.bf16.msra.mxu0 0
    %1362 = vmatprep.mubr.bf16.mxu0 0
    %1363 = vmatmul.mubr.bf16.gmra.mxu0 %v1324
    %v1364 = vpop.f32.mrf.mxu0
    %v1365 = vadd.f32 0.0, %v1364
    %v1366 = vpop.f32.mrf.mxu0
    %v1367 = vpop.f32.mrf.mxu0
    %v1368 = vpop.f32.mrf.mxu0
    %1369 = vdwg.mxu0
    %v1371 = vsel %vm1130, %v1308, 0
    %v1374 = vsel %vm1326, %v378, 0
    %1376 = vmatprep.subr.bf16.mxu0 0
    %1377 = vmatpush1.bf16.msra.mxu0 0
    %1378 = vmatprep.subr.bf16.mxu0 0
    %1379 = vmatpush1.bf16.msra.mxu0 0
    %1380 = vmatprep.subr.bf16.mxu0 0
    %1381 = vmatpush1.bf16.msra.mxu0 0
    %1382 = vmatprep.subr.bf16.mxu0 0
    %1383 = vmatpush1.bf16.msra.mxu0 0
    %1384 = vmatprep.subr.bf16.mxu0 0
    %1385 = vmatpush1.bf16.msra.mxu0 0
    %1386 = vmatprep.subr.bf16.mxu0 0
    %1387 = vmatpush1.bf16.msra.mxu0 0
    %1388 = vmatprep.subr.bf16.mxu0 0
    %1389 = vmatpush1.bf16.msra.mxu0 0
    %1390 = vmatprep.subr.bf16.mxu0 0
    %1391 = vmatpush1.bf16.msra.mxu0 %v1374
    %1392 = vmatprep.subr.bf16.mxu0 0
    %1393 = vmatpush2.bf16.msra.mxu0 0
    %1394 = vmatprep.subr.bf16.mxu0 0
    %1395 = vmatpush2.bf16.msra.mxu0 0
    %1396 = vmatprep.subr.bf16.mxu0 0
    %1397 = vmatpush2.bf16.msra.mxu0 0
    %1398 = vmatprep.subr.bf16.mxu0 0
    %1399 = vmatpush2.bf16.msra.mxu0 0
    %1400 = vmatprep.subr.bf16.mxu0 0
    %1401 = vmatpush2.bf16.msra.mxu0 0
    %1402 = vmatprep.subr.bf16.mxu0 0
    %1403 = vmatpush2.bf16.msra.mxu0 0
    %1404 = vmatprep.subr.bf16.mxu0 0
    %1405 = vmatpush2.bf16.msra.mxu0 0
    %1406 = vmatprep.subr.bf16.mxu0 0
    %1407 = vmatpush2.bf16.msra.mxu0 0
    %1408 = vmatprep.mubr.bf16.mxu0 0
    %1409 = vmatmul.mubr.bf16.gmra.mxu0 %v1371
    %v1410 = vpop.f32.mrf.mxu0
    %v1411 = vadd.f32 0.0, %v1410
    %v1412 = vpop.f32.mrf.mxu0
    %v1413 = vpop.f32.mrf.mxu0
    %v1414 = vpop.f32.mrf.mxu0
    %1415 = vdwg.mxu0
    %v1417 = vsel %vm1130, %v1309, 0
    %v1420 = vsel %vm1326, %v379, 0
    %1422 = vmatprep.subr.bf16.mxu0 0
    %1423 = vmatpush1.bf16.msra.mxu0 0
    %1424 = vmatprep.subr.bf16.mxu0 0
    %1425 = vmatpush1.bf16.msra.mxu0 0
    %1426 = vmatprep.subr.bf16.mxu0 0
    %1427 = vmatpush1.bf16.msra.mxu0 0
    %1428 = vmatprep.subr.bf16.mxu0 0
    %1429 = vmatpush1.bf16.msra.mxu0 0
    %1430 = vmatprep.subr.bf16.mxu0 0
    %1431 = vmatpush1.bf16.msra.mxu0 0
    %1432 = vmatprep.subr.bf16.mxu0 0
    %1433 = vmatpush1.bf16.msra.mxu0 0
    %1434 = vmatprep.subr.bf16.mxu0 0
    %1435 = vmatpush1.bf16.msra.mxu0 0
    %1436 = vmatprep.subr.bf16.mxu0 0
    %1437 = vmatpush1.bf16.msra.mxu0 %v1420
    %1438 = vmatprep.subr.bf16.mxu0 0
    %1439 = vmatpush2.bf16.msra.mxu0 0
    %1440 = vmatprep.subr.bf16.mxu0 0
    %1441 = vmatpush2.bf16.msra.mxu0 0
    %1442 = vmatprep.subr.bf16.mxu0 0
    %1443 = vmatpush2.bf16.msra.mxu0 0
    %1444 = vmatprep.subr.bf16.mxu0 0
    %1445 = vmatpush2.bf16.msra.mxu0 0
    %1446 = vmatprep.subr.bf16.mxu0 0
    %1447 = vmatpush2.bf16.msra.mxu0 0
    %1448 = vmatprep.subr.bf16.mxu0 0
    %1449 = vmatpush2.bf16.msra.mxu0 0
    %1450 = vmatprep.subr.bf16.mxu0 0
    %1451 = vmatpush2.bf16.msra.mxu0 0
    %1452 = vmatprep.subr.bf16.mxu0 0
    %1453 = vmatpush2.bf16.msra.mxu0 0
    %1454 = vmatprep.mubr.bf16.mxu0 0
    %1455 = vmatmul.mubr.bf16.gmra.mxu0 %v1417
    %v1456 = vpop.f32.mrf.mxu0
    %v1457 = vadd.f32 0.0, %v1456
    %v1458 = vpop.f32.mrf.mxu0
    %v1459 = vpop.f32.mrf.mxu0
    %v1460 = vpop.f32.mrf.mxu0
    %1461 = vdwg.mxu0
    %v1463 = vsel %vm1130, %v1310, 0
    %v1466 = vsel %vm1326, %v380, 0
    %1468 = vmatprep.subr.bf16.mxu0 0
    %1469 = vmatpush1.bf16.msra.mxu0 0
    %1470 = vmatprep.subr.bf16.mxu0 0
    %1471 = vmatpush1.bf16.msra.mxu0 0
    %1472 = vmatprep.subr.bf16.mxu0 0
    %1473 = vmatpush1.bf16.msra.mxu0 0
    %1474 = vmatprep.subr.bf16.mxu0 0
    %1475 = vmatpush1.bf16.msra.mxu0 0
    %1476 = vmatprep.subr.bf16.mxu0 0
    %1477 = vmatpush1.bf16.msra.mxu0 0
    %1478 = vmatprep.subr.bf16.mxu0 0
    %1479 = vmatpush1.bf16.msra.mxu0 0
    %1480 = vmatprep.subr.bf16.mxu0 0
    %1481 = vmatpush1.bf16.msra.mxu0 0
    %1482 = vmatprep.subr.bf16.mxu0 0
    %1483 = vmatpush1.bf16.msra.mxu0 %v1466
    %1484 = vmatprep.subr.bf16.mxu0 0
    %1485 = vmatpush2.bf16.msra.mxu0 0
    %1486 = vmatprep.subr.bf16.mxu0 0
    %1487 = vmatpush2.bf16.msra.mxu0 0
    %1488 = vmatprep.subr.bf16.mxu0 0
    %1489 = vmatpush2.bf16.msra.mxu0 0
    %1490 = vmatprep.subr.bf16.mxu0 0
    %1491 = vmatpush2.bf16.msra.mxu0 0
    %1492 = vmatprep.subr.bf16.mxu0 0
    %1493 = vmatpush2.bf16.msra.mxu0 0
    %1494 = vmatprep.subr.bf16.mxu0 0
    %1495 = vmatpush2.bf16.msra.mxu0 0
    %1496 = vmatprep.subr.bf16.mxu0 0
    %1497 = vmatpush2.bf16.msra.mxu0 0
    %1498 = vmatprep.subr.bf16.mxu0 0
    %1499 = vmatpush2.bf16.msra.mxu0 0
    %1500 = vmatprep.mubr.bf16.mxu0 0
    %1501 = vmatmul.mubr.bf16.gmra.mxu0 %v1463
    %v1502 = vpop.f32.mrf.mxu0
    %v1503 = vadd.f32 0.0, %v1502
    %v1504 = vpop.f32.mrf.mxu0
    %v1505 = vpop.f32.mrf.mxu0
    %v1506 = vpop.f32.mrf.mxu0
    %1507 = vdwg.mxu0
    %v1509 = vsel %vm1130, %v1311, 0
    %v1512 = vsel %vm1326, %v381, 0
    %1514 = vmatprep.subr.bf16.mxu0 0
    %1515 = vmatpush1.bf16.msra.mxu0 0
    %1516 = vmatprep.subr.bf16.mxu0 0
    %1517 = vmatpush1.bf16.msra.mxu0 0
    %1518 = vmatprep.subr.bf16.mxu0 0
    %1519 = vmatpush1.bf16.msra.mxu0 0
    %1520 = vmatprep.subr.bf16.mxu0 0
    %1521 = vmatpush1.bf16.msra.mxu0 0
    %1522 = vmatprep.subr.bf16.mxu0 0
    %1523 = vmatpush1.bf16.msra.mxu0 0
    %1524 = vmatprep.subr.bf16.mxu0 0
    %1525 = vmatpush1.bf16.msra.mxu0 0
    %1526 = vmatprep.subr.bf16.mxu0 0
    %1527 = vmatpush1.bf16.msra.mxu0 0
    %1528 = vmatprep.subr.bf16.mxu0 0
    %1529 = vmatpush1.bf16.msra.mxu0 %v1512
    %1530 = vmatprep.subr.bf16.mxu0 0
    %1531 = vmatpush2.bf16.msra.mxu0 0
    %1532 = vmatprep.subr.bf16.mxu0 0
    %1533 = vmatpush2.bf16.msra.mxu0 0
    %1534 = vmatprep.subr.bf16.mxu0 0
    %1535 = vmatpush2.bf16.msra.mxu0 0
    %1536 = vmatprep.subr.bf16.mxu0 0
    %1537 = vmatpush2.bf16.msra.mxu0 0
    %1538 = vmatprep.subr.bf16.mxu0 0
    %1539 = vmatpush2.bf16.msra.mxu0 0
    %1540 = vmatprep.subr.bf16.mxu0 0
    %1541 = vmatpush2.bf16.msra.mxu0 0
    %1542 = vmatprep.subr.bf16.mxu0 0
    %1543 = vmatpush2.bf16.msra.mxu0 0
    %1544 = vmatprep.subr.bf16.mxu0 0
    %1545 = vmatpush2.bf16.msra.mxu0 0
    %1546 = vmatprep.mubr.bf16.mxu0 0
    %1547 = vmatmul.mubr.bf16.gmra.mxu0 %v1509
    %v1548 = vpop.f32.mrf.mxu0
    %v1549 = vadd.f32 0.0, %v1548
    %v1550 = vpop.f32.mrf.mxu0
    %v1551 = vpop.f32.mrf.mxu0
    %v1552 = vpop.f32.mrf.mxu0
    %1553 = vdwg.mxu0
    %v1555 = vsel %vm1130, %v1312, 0
    %v1558 = vsel %vm1326, %v382, 0
    %1560 = vmatprep.subr.bf16.mxu0 0
    %1561 = vmatpush1.bf16.msra.mxu0 0
    %1562 = vmatprep.subr.bf16.mxu0 0
    %1563 = vmatpush1.bf16.msra.mxu0 0
    %1564 = vmatprep.subr.bf16.mxu0 0
    %1565 = vmatpush1.bf16.msra.mxu0 0
    %1566 = vmatprep.subr.bf16.mxu0 0
    %1567 = vmatpush1.bf16.msra.mxu0 0
    %1568 = vmatprep.subr.bf16.mxu0 0
    %1569 = vmatpush1.bf16.msra.mxu0 0
    %1570 = vmatprep.subr.bf16.mxu0 0
    %1571 = vmatpush1.bf16.msra.mxu0 0
    %1572 = vmatprep.subr.bf16.mxu0 0
    %1573 = vmatpush1.bf16.msra.mxu0 0
    %1574 = vmatprep.subr.bf16.mxu0 0
    %1575 = vmatpush1.bf16.msra.mxu0 %v1558
    %1576 = vmatprep.subr.bf16.mxu0 0
    %1577 = vmatpush2.bf16.msra.mxu0 0
    %1578 = vmatprep.subr.bf16.mxu0 0
    %1579 = vmatpush2.bf16.msra.mxu0 0
    %1580 = vmatprep.subr.bf16.mxu0 0
    %1581 = vmatpush2.bf16.msra.mxu0 0
    %1582 = vmatprep.subr.bf16.mxu0 0
    %1583 = vmatpush2.bf16.msra.mxu0 0
    %1584 = vmatprep.subr.bf16.mxu0 0
    %1585 = vmatpush2.bf16.msra.mxu0 0
    %1586 = vmatprep.subr.bf16.mxu0 0
    %1587 = vmatpush2.bf16.msra.mxu0 0
    %1588 = vmatprep.subr.bf16.mxu0 0
    %1589 = vmatpush2.bf16.msra.mxu0 0
    %1590 = vmatprep.subr.bf16.mxu0 0
    %1591 = vmatpush2.bf16.msra.mxu0 0
    %1592 = vmatprep.mubr.bf16.mxu0 0
    %1593 = vmatmul.mubr.bf16.gmra.mxu0 %v1555
    %v1594 = vpop.f32.mrf.mxu0
    %v1595 = vadd.f32 0.0, %v1594
    %v1596 = vpop.f32.mrf.mxu0
    %v1597 = vpop.f32.mrf.mxu0
    %v1598 = vpop.f32.mrf.mxu0
    %1599 = vdwg.mxu0
    %v1601 = vsel %vm1130, %v1313, 0
    %v1604 = vsel %vm1326, %v383, 0
    %1606 = vmatprep.subr.bf16.mxu0 0
    %1607 = vmatpush1.bf16.msra.mxu0 0
    %1608 = vmatprep.subr.bf16.mxu0 0
    %1609 = vmatpush1.bf16.msra.mxu0 0
    %1610 = vmatprep.subr.bf16.mxu0 0
    %1611 = vmatpush1.bf16.msra.mxu0 0
    %1612 = vmatprep.subr.bf16.mxu0 0
    %1613 = vmatpush1.bf16.msra.mxu0 0
    %1614 = vmatprep.subr.bf16.mxu0 0
    %1615 = vmatpush1.bf16.msra.mxu0 0
    %1616 = vmatprep.subr.bf16.mxu0 0
    %1617 = vmatpush1.bf16.msra.mxu0 0
    %1618 = vmatprep.subr.bf16.mxu0 0
    %1619 = vmatpush1.bf16.msra.mxu0 0
    %1620 = vmatprep.subr.bf16.mxu0 0
    %1621 = vmatpush1.bf16.msra.mxu0 %v1604
    %1622 = vmatprep.subr.bf16.mxu0 0
    %1623 = vmatpush2.bf16.msra.mxu0 0
    %1624 = vmatprep.subr.bf16.mxu0 0
    %1625 = vmatpush2.bf16.msra.mxu0 0
    %1626 = vmatprep.subr.bf16.mxu0 0
    %1627 = vmatpush2.bf16.msra.mxu0 0
    %1628 = vmatprep.subr.bf16.mxu0 0
    %1629 = vmatpush2.bf16.msra.mxu0 0
    %1630 = vmatprep.subr.bf16.mxu0 0
    %1631 = vmatpush2.bf16.msra.mxu0 0
    %1632 = vmatprep.subr.bf16.mxu0 0
    %1633 = vmatpush2.bf16.msra.mxu0 0
    %1634 = vmatprep.subr.bf16.mxu0 0
    %1635 = vmatpush2.bf16.msra.mxu0 0
    %1636 = vmatprep.subr.bf16.mxu0 0
    %1637 = vmatpush2.bf16.msra.mxu0 0
    %1638 = vmatprep.mubr.bf16.mxu0 0
    %1639 = vmatmul.mubr.bf16.gmra.mxu0 %v1601
    %v1640 = vpop.f32.mrf.mxu0
    %v1641 = vadd.f32 0.0, %v1640
    %v1642 = vpop.f32.mrf.mxu0
    %v1643 = vpop.f32.mrf.mxu0
    %v1644 = vpop.f32.mrf.mxu0
    %1645 = vdwg.mxu0
    %v1647 = vsel %vm1130, %v1314, 0
    %v1650 = vsel %vm1326, %v384, 0
    %1652 = vmatprep.subr.bf16.mxu0 0
    %1653 = vmatpush1.bf16.msra.mxu0 0
    %1654 = vmatprep.subr.bf16.mxu0 0
    %1655 = vmatpush1.bf16.msra.mxu0 0
    %1656 = vmatprep.subr.bf16.mxu0 0
    %1657 = vmatpush1.bf16.msra.mxu0 0
    %1658 = vmatprep.subr.bf16.mxu0 0
    %1659 = vmatpush1.bf16.msra.mxu0 0
    %1660 = vmatprep.subr.bf16.mxu0 0
    %1661 = vmatpush1.bf16.msra.mxu0 0
    %1662 = vmatprep.subr.bf16.mxu0 0
    %1663 = vmatpush1.bf16.msra.mxu0 0
    %1664 = vmatprep.subr.bf16.mxu0 0
    %1665 = vmatpush1.bf16.msra.mxu0 0
    %1666 = vmatprep.subr.bf16.mxu0 0
    %1667 = vmatpush1.bf16.msra.mxu0 %v1650
    %1668 = vmatprep.subr.bf16.mxu0 0
    %1669 = vmatpush2.bf16.msra.mxu0 0
    %1670 = vmatprep.subr.bf16.mxu0 0
    %1671 = vmatpush2.bf16.msra.mxu0 0
    %1672 = vmatprep.subr.bf16.mxu0 0
    %1673 = vmatpush2.bf16.msra.mxu0 0
    %1674 = vmatprep.subr.bf16.mxu0 0
    %1675 = vmatpush2.bf16.msra.mxu0 0
    %1676 = vmatprep.subr.bf16.mxu0 0
    %1677 = vmatpush2.bf16.msra.mxu0 0
    %1678 = vmatprep.subr.bf16.mxu0 0
    %1679 = vmatpush2.bf16.msra.mxu0 0
    %1680 = vmatprep.subr.bf16.mxu0 0
    %1681 = vmatpush2.bf16.msra.mxu0 0
    %1682 = vmatprep.subr.bf16.mxu0 0
    %1683 = vmatpush2.bf16.msra.mxu0 0
    %1684 = vmatprep.mubr.bf16.mxu0 0
    %1685 = vmatmul.mubr.bf16.gmra.mxu0 %v1647
    %v1686 = vpop.f32.mrf.mxu0
    %v1687 = vadd.f32 0.0, %v1686
    %v1688 = vpop.f32.mrf.mxu0
    %v1689 = vpop.f32.mrf.mxu0
    %v1690 = vpop.f32.mrf.mxu0
    %1691 = vdwg.mxu0
    %v1693 = vsel %vm1130, %v1315, 0
    %v1696 = vsel %vm1326, %v385, 0
    %1698 = vmatprep.subr.bf16.mxu0 0
    %1699 = vmatpush1.bf16.msra.mxu0 0
    %1700 = vmatprep.subr.bf16.mxu0 0
    %1701 = vmatpush1.bf16.msra.mxu0 0
    %1702 = vmatprep.subr.bf16.mxu0 0
    %1703 = vmatpush1.bf16.msra.mxu0 0
    %1704 = vmatprep.subr.bf16.mxu0 0
    %1705 = vmatpush1.bf16.msra.mxu0 0
    %1706 = vmatprep.subr.bf16.mxu0 0
    %1707 = vmatpush1.bf16.msra.mxu0 0
    %1708 = vmatprep.subr.bf16.mxu0 0
    %1709 = vmatpush1.bf16.msra.mxu0 0
    %1710 = vmatprep.subr.bf16.mxu0 0
    %1711 = vmatpush1.bf16.msra.mxu0 0
    %1712 = vmatprep.subr.bf16.mxu0 0
    %1713 = vmatpush1.bf16.msra.mxu0 %v1696
    %1714 = vmatprep.subr.bf16.mxu0 0
    %1715 = vmatpush2.bf16.msra.mxu0 0
    %1716 = vmatprep.subr.bf16.mxu0 0
    %1717 = vmatpush2.bf16.msra.mxu0 0
    %1718 = vmatprep.subr.bf16.mxu0 0
    %1719 = vmatpush2.bf16.msra.mxu0 0
    %1720 = vmatprep.subr.bf16.mxu0 0
    %1721 = vmatpush2.bf16.msra.mxu0 0
    %1722 = vmatprep.subr.bf16.mxu0 0
    %1723 = vmatpush2.bf16.msra.mxu0 0
    %1724 = vmatprep.subr.bf16.mxu0 0
    %1725 = vmatpush2.bf16.msra.mxu0 0
    %1726 = vmatprep.subr.bf16.mxu0 0
    %1727 = vmatpush2.bf16.msra.mxu0 0
    %1728 = vmatprep.subr.bf16.mxu0 0
    %1729 = vmatpush2.bf16.msra.mxu0 0
    %1730 = vmatprep.mubr.bf16.mxu0 0
    %1731 = vmatmul.mubr.bf16.gmra.mxu0 %v1693
    %v1732 = vpop.f32.mrf.mxu0
    %v1733 = vadd.f32 0.0, %v1732
    %v1734 = vpop.f32.mrf.mxu0
    %v1735 = vpop.f32.mrf.mxu0
    %v1736 = vpop.f32.mrf.mxu0
    %1737 = vdwg.mxu0
    %v1739 = vsel %vm1130, %v1316, 0
    %v1742 = vsel %vm1326, %v386, 0
    %1744 = vmatprep.subr.bf16.mxu0 0
    %1745 = vmatpush1.bf16.msra.mxu0 0
    %1746 = vmatprep.subr.bf16.mxu0 0
    %1747 = vmatpush1.bf16.msra.mxu0 0
    %1748 = vmatprep.subr.bf16.mxu0 0
    %1749 = vmatpush1.bf16.msra.mxu0 0
    %1750 = vmatprep.subr.bf16.mxu0 0
    %1751 = vmatpush1.bf16.msra.mxu0 0
    %1752 = vmatprep.subr.bf16.mxu0 0
    %1753 = vmatpush1.bf16.msra.mxu0 0
    %1754 = vmatprep.subr.bf16.mxu0 0
    %1755 = vmatpush1.bf16.msra.mxu0 0
    %1756 = vmatprep.subr.bf16.mxu0 0
    %1757 = vmatpush1.bf16.msra.mxu0 0
    %1758 = vmatprep.subr.bf16.mxu0 0
    %1759 = vmatpush1.bf16.msra.mxu0 %v1742
    %1760 = vmatprep.subr.bf16.mxu0 0
    %1761 = vmatpush2.bf16.msra.mxu0 0
    %1762 = vmatprep.subr.bf16.mxu0 0
    %1763 = vmatpush2.bf16.msra.mxu0 0
    %1764 = vmatprep.subr.bf16.mxu0 0
    %1765 = vmatpush2.bf16.msra.mxu0 0
    %1766 = vmatprep.subr.bf16.mxu0 0
    %1767 = vmatpush2.bf16.msra.mxu0 0
    %1768 = vmatprep.subr.bf16.mxu0 0
    %1769 = vmatpush2.bf16.msra.mxu0 0
    %1770 = vmatprep.subr.bf16.mxu0 0
    %1771 = vmatpush2.bf16.msra.mxu0 0
    %1772 = vmatprep.subr.bf16.mxu0 0
    %1773 = vmatpush2.bf16.msra.mxu0 0
    %1774 = vmatprep.subr.bf16.mxu0 0
    %1775 = vmatpush2.bf16.msra.mxu0 0
    %1776 = vmatprep.mubr.bf16.mxu0 0
    %1777 = vmatmul.mubr.bf16.gmra.mxu0 %v1739
    %v1778 = vpop.f32.mrf.mxu0
    %v1779 = vadd.f32 0.0, %v1778
    %v1780 = vpop.f32.mrf.mxu0
    %v1781 = vpop.f32.mrf.mxu0
    %v1782 = vpop.f32.mrf.mxu0
    %1783 = vdwg.mxu0
    %v1785 = vsel %vm1130, %v1317, 0
    %v1788 = vsel %vm1326, %v387, 0
    %1790 = vmatprep.subr.bf16.mxu0 0
    %1791 = vmatpush1.bf16.msra.mxu0 0
    %1792 = vmatprep.subr.bf16.mxu0 0
    %1793 = vmatpush1.bf16.msra.mxu0 0
    %1794 = vmatprep.subr.bf16.mxu0 0
    %1795 = vmatpush1.bf16.msra.mxu0 0
    %1796 = vmatprep.subr.bf16.mxu0 0
    %1797 = vmatpush1.bf16.msra.mxu0 0
    %1798 = vmatprep.subr.bf16.mxu0 0
    %1799 = vmatpush1.bf16.msra.mxu0 0
    %1800 = vmatprep.subr.bf16.mxu0 0
    %1801 = vmatpush1.bf16.msra.mxu0 0
    %1802 = vmatprep.subr.bf16.mxu0 0
    %1803 = vmatpush1.bf16.msra.mxu0 0
    %1804 = vmatprep.subr.bf16.mxu0 0
    %1805 = vmatpush1.bf16.msra.mxu0 %v1788
    %1806 = vmatprep.subr.bf16.mxu0 0
    %1807 = vmatpush2.bf16.msra.mxu0 0
    %1808 = vmatprep.subr.bf16.mxu0 0
    %1809 = vmatpush2.bf16.msra.mxu0 0
    %1810 = vmatprep.subr.bf16.mxu0 0
    %1811 = vmatpush2.bf16.msra.mxu0 0
    %1812 = vmatprep.subr.bf16.mxu0 0
    %1813 = vmatpush2.bf16.msra.mxu0 0
    %1814 = vmatprep.subr.bf16.mxu0 0
    %1815 = vmatpush2.bf16.msra.mxu0 0
    %1816 = vmatprep.subr.bf16.mxu0 0
    %1817 = vmatpush2.bf16.msra.mxu0 0
    %1818 = vmatprep.subr.bf16.mxu0 0
    %1819 = vmatpush2.bf16.msra.mxu0 0
    %1820 = vmatprep.subr.bf16.mxu0 0
    %1821 = vmatpush2.bf16.msra.mxu0 0
    %1822 = vmatprep.mubr.bf16.mxu0 0
    %1823 = vmatmul.mubr.bf16.gmra.mxu0 %v1785
    %v1824 = vpop.f32.mrf.mxu0
    %v1825 = vadd.f32 0.0, %v1824
    %v1826 = vpop.f32.mrf.mxu0
    %v1827 = vpop.f32.mrf.mxu0
    %v1828 = vpop.f32.mrf.mxu0
    %1829 = vdwg.mxu0
    %v1831 = vsel %vm1130, %v1318, 0
    %v1834 = vsel %vm1326, %v388, 0
    %1836 = vmatprep.subr.bf16.mxu0 0
    %1837 = vmatpush1.bf16.msra.mxu0 0
    %1838 = vmatprep.subr.bf16.mxu0 0
    %1839 = vmatpush1.bf16.msra.mxu0 0
    %1840 = vmatprep.subr.bf16.mxu0 0
    %1841 = vmatpush1.bf16.msra.mxu0 0
    %1842 = vmatprep.subr.bf16.mxu0 0
    %1843 = vmatpush1.bf16.msra.mxu0 0
    %1844 = vmatprep.subr.bf16.mxu0 0
    %1845 = vmatpush1.bf16.msra.mxu0 0
    %1846 = vmatprep.subr.bf16.mxu0 0
    %1847 = vmatpush1.bf16.msra.mxu0 0
    %1848 = vmatprep.subr.bf16.mxu0 0
    %1849 = vmatpush1.bf16.msra.mxu0 0
    %1850 = vmatprep.subr.bf16.mxu0 0
    %1851 = vmatpush1.bf16.msra.mxu0 %v1834
    %1852 = vmatprep.subr.bf16.mxu0 0
    %1853 = vmatpush2.bf16.msra.mxu0 0
    %1854 = vmatprep.subr.bf16.mxu0 0
    %1855 = vmatpush2.bf16.msra.mxu0 0
    %1856 = vmatprep.subr.bf16.mxu0 0
    %1857 = vmatpush2.bf16.msra.mxu0 0
    %1858 = vmatprep.subr.bf16.mxu0 0
    %1859 = vmatpush2.bf16.msra.mxu0 0
    %1860 = vmatprep.subr.bf16.mxu0 0
    %1861 = vmatpush2.bf16.msra.mxu0 0
    %1862 = vmatprep.subr.bf16.mxu0 0
    %1863 = vmatpush2.bf16.msra.mxu0 0
    %1864 = vmatprep.subr.bf16.mxu0 0
    %1865 = vmatpush2.bf16.msra.mxu0 0
    %1866 = vmatprep.subr.bf16.mxu0 0
    %1867 = vmatpush2.bf16.msra.mxu0 0
    %1868 = vmatprep.mubr.bf16.mxu0 0
    %1869 = vmatmul.mubr.bf16.gmra.mxu0 %v1831
    %v1870 = vpop.f32.mrf.mxu0
    %v1871 = vadd.f32 0.0, %v1870
    %v1872 = vpop.f32.mrf.mxu0
    %v1873 = vpop.f32.mrf.mxu0
    %v1874 = vpop.f32.mrf.mxu0
    %1875 = vdwg.mxu0
    %v1877 = vsel %vm1130, %v1319, 0
    %v1880 = vsel %vm1326, %v389, 0
    %1882 = vmatprep.subr.bf16.mxu0 0
    %1883 = vmatpush1.bf16.msra.mxu0 0
    %1884 = vmatprep.subr.bf16.mxu0 0
    %1885 = vmatpush1.bf16.msra.mxu0 0
    %1886 = vmatprep.subr.bf16.mxu0 0
    %1887 = vmatpush1.bf16.msra.mxu0 0
    %1888 = vmatprep.subr.bf16.mxu0 0
    %1889 = vmatpush1.bf16.msra.mxu0 0
    %1890 = vmatprep.subr.bf16.mxu0 0
    %1891 = vmatpush1.bf16.msra.mxu0 0
    %1892 = vmatprep.subr.bf16.mxu0 0
    %1893 = vmatpush1.bf16.msra.mxu0 0
    %1894 = vmatprep.subr.bf16.mxu0 0
    %1895 = vmatpush1.bf16.msra.mxu0 0
    %1896 = vmatprep.subr.bf16.mxu0 0
    %1897 = vmatpush1.bf16.msra.mxu0 %v1880
    %1898 = vmatprep.subr.bf16.mxu0 0
    %1899 = vmatpush2.bf16.msra.mxu0 0
    %1900 = vmatprep.subr.bf16.mxu0 0
    %1901 = vmatpush2.bf16.msra.mxu0 0
    %1902 = vmatprep.subr.bf16.mxu0 0
    %1903 = vmatpush2.bf16.msra.mxu0 0
    %1904 = vmatprep.subr.bf16.mxu0 0
    %1905 = vmatpush2.bf16.msra.mxu0 0
    %1906 = vmatprep.subr.bf16.mxu0 0
    %1907 = vmatpush2.bf16.msra.mxu0 0
    %1908 = vmatprep.subr.bf16.mxu0 0
    %1909 = vmatpush2.bf16.msra.mxu0 0
    %1910 = vmatprep.subr.bf16.mxu0 0
    %1911 = vmatpush2.bf16.msra.mxu0 0
    %1912 = vmatprep.subr.bf16.mxu0 0
    %1913 = vmatpush2.bf16.msra.mxu0 0
    %1914 = vmatprep.mubr.bf16.mxu0 0
    %1915 = vmatmul.mubr.bf16.gmra.mxu0 %v1877
    %v1916 = vpop.f32.mrf.mxu0
    %v1917 = vadd.f32 0.0, %v1916
    %v1918 = vpop.f32.mrf.mxu0
    %v1919 = vpop.f32.mrf.mxu0
    %v1920 = vpop.f32.mrf.mxu0
    %1921 = vdwg.mxu0
    %v1923 = vsel %vm1130, %v1320, 0
    %v1926 = vsel %vm1326, %v390, 0
    %1928 = vmatprep.subr.bf16.mxu0 0
    %1929 = vmatpush1.bf16.msra.mxu0 0
    %1930 = vmatprep.subr.bf16.mxu0 0
    %1931 = vmatpush1.bf16.msra.mxu0 0
    %1932 = vmatprep.subr.bf16.mxu0 0
    %1933 = vmatpush1.bf16.msra.mxu0 0
    %1934 = vmatprep.subr.bf16.mxu0 0
    %1935 = vmatpush1.bf16.msra.mxu0 0
    %1936 = vmatprep.subr.bf16.mxu0 0
    %1937 = vmatpush1.bf16.msra.mxu0 0
    %1938 = vmatprep.subr.bf16.mxu0 0
    %1939 = vmatpush1.bf16.msra.mxu0 0
    %1940 = vmatprep.subr.bf16.mxu0 0
    %1941 = vmatpush1.bf16.msra.mxu0 0
    %1942 = vmatprep.subr.bf16.mxu0 0
    %1943 = vmatpush1.bf16.msra.mxu0 %v1926
    %1944 = vmatprep.subr.bf16.mxu0 0
    %1945 = vmatpush2.bf16.msra.mxu0 0
    %1946 = vmatprep.subr.bf16.mxu0 0
    %1947 = vmatpush2.bf16.msra.mxu0 0
    %1948 = vmatprep.subr.bf16.mxu0 0
    %1949 = vmatpush2.bf16.msra.mxu0 0
    %1950 = vmatprep.subr.bf16.mxu0 0
    %1951 = vmatpush2.bf16.msra.mxu0 0
    %1952 = vmatprep.subr.bf16.mxu0 0
    %1953 = vmatpush2.bf16.msra.mxu0 0
    %1954 = vmatprep.subr.bf16.mxu0 0
    %1955 = vmatpush2.bf16.msra.mxu0 0
    %1956 = vmatprep.subr.bf16.mxu0 0
    %1957 = vmatpush2.bf16.msra.mxu0 0
    %1958 = vmatprep.subr.bf16.mxu0 0
    %1959 = vmatpush2.bf16.msra.mxu0 0
    %1960 = vmatprep.mubr.bf16.mxu0 0
    %1961 = vmatmul.mubr.bf16.gmra.mxu0 %v1923
    %v1962 = vpop.f32.mrf.mxu0
    %v1963 = vadd.f32 0.0, %v1962
    %v1964 = vpop.f32.mrf.mxu0
    %v1965 = vpop.f32.mrf.mxu0
    %v1966 = vpop.f32.mrf.mxu0
    %1967 = vdwg.mxu0
    %v1969 = vsel %vm1130, %v1321, 0
    %v1972 = vsel %vm1326, %v391, 0
    %1974 = vmatprep.subr.bf16.mxu0 0
    %1975 = vmatpush1.bf16.msra.mxu0 0
    %1976 = vmatprep.subr.bf16.mxu0 0
    %1977 = vmatpush1.bf16.msra.mxu0 0
    %1978 = vmatprep.subr.bf16.mxu0 0
    %1979 = vmatpush1.bf16.msra.mxu0 0
    %1980 = vmatprep.subr.bf16.mxu0 0
    %1981 = vmatpush1.bf16.msra.mxu0 0
    %1982 = vmatprep.subr.bf16.mxu0 0
    %1983 = vmatpush1.bf16.msra.mxu0 0
    %1984 = vmatprep.subr.bf16.mxu0 0
    %1985 = vmatpush1.bf16.msra.mxu0 0
    %1986 = vmatprep.subr.bf16.mxu0 0
    %1987 = vmatpush1.bf16.msra.mxu0 0
    %1988 = vmatprep.subr.bf16.mxu0 0
    %1989 = vmatpush1.bf16.msra.mxu0 %v1972
    %1990 = vmatprep.subr.bf16.mxu0 0
    %1991 = vmatpush2.bf16.msra.mxu0 0
    %1992 = vmatprep.subr.bf16.mxu0 0
    %1993 = vmatpush2.bf16.msra.mxu0 0
    %1994 = vmatprep.subr.bf16.mxu0 0
    %1995 = vmatpush2.bf16.msra.mxu0 0
    %1996 = vmatprep.subr.bf16.mxu0 0
    %1997 = vmatpush2.bf16.msra.mxu0 0
    %1998 = vmatprep.subr.bf16.mxu0 0
    %1999 = vmatpush2.bf16.msra.mxu0 0
    %2000 = vmatprep.subr.bf16.mxu0 0
    %2001 = vmatpush2.bf16.msra.mxu0 0
    %2002 = vmatprep.subr.bf16.mxu0 0
    %2003 = vmatpush2.bf16.msra.mxu0 0
    %2004 = vmatprep.subr.bf16.mxu0 0
    %2005 = vmatpush2.bf16.msra.mxu0 0
    %2006 = vmatprep.mubr.bf16.mxu0 0
    %2007 = vmatmul.mubr.bf16.gmra.mxu0 %v1969
    %v2008 = vpop.f32.mrf.mxu0
    %v2009 = vadd.f32 0.0, %v2008
    %v2010 = vpop.f32.mrf.mxu0
    %v2011 = vpop.f32.mrf.mxu0
    %v2012 = vpop.f32.mrf.mxu0
    %2013 = vdwg.mxu0
    %v2015 = vsel %vm1130, %v1322, 0
    %v2018 = vsel %vm1326, %v392, 0
    %2020 = vmatprep.subr.bf16.mxu0 0
    %2021 = vmatpush1.bf16.msra.mxu0 0
    %2022 = vmatprep.subr.bf16.mxu0 0
    %2023 = vmatpush1.bf16.msra.mxu0 0
    %2024 = vmatprep.subr.bf16.mxu0 0
    %2025 = vmatpush1.bf16.msra.mxu0 0
    %2026 = vmatprep.subr.bf16.mxu0 0
    %2027 = vmatpush1.bf16.msra.mxu0 0
    %2028 = vmatprep.subr.bf16.mxu0 0
    %2029 = vmatpush1.bf16.msra.mxu0 0
    %2030 = vmatprep.subr.bf16.mxu0 0
    %2031 = vmatpush1.bf16.msra.mxu0 0
    %2032 = vmatprep.subr.bf16.mxu0 0
    %2033 = vmatpush1.bf16.msra.mxu0 0
    %2034 = vmatprep.subr.bf16.mxu0 0
    %2035 = vmatpush1.bf16.msra.mxu0 %v2018
    %2036 = vmatprep.subr.bf16.mxu0 0
    %2037 = vmatpush2.bf16.msra.mxu0 0
    %2038 = vmatprep.subr.bf16.mxu0 0
    %2039 = vmatpush2.bf16.msra.mxu0 0
    %2040 = vmatprep.subr.bf16.mxu0 0
    %2041 = vmatpush2.bf16.msra.mxu0 0
    %2042 = vmatprep.subr.bf16.mxu0 0
    %2043 = vmatpush2.bf16.msra.mxu0 0
    %2044 = vmatprep.subr.bf16.mxu0 0
    %2045 = vmatpush2.bf16.msra.mxu0 0
    %2046 = vmatprep.subr.bf16.mxu0 0
    %2047 = vmatpush2.bf16.msra.mxu0 0
    %2048 = vmatprep.subr.bf16.mxu0 0
    %2049 = vmatpush2.bf16.msra.mxu0 0
    %2050 = vmatprep.subr.bf16.mxu0 0
    %2051 = vmatpush2.bf16.msra.mxu0 0
    %2052 = vmatprep.mubr.bf16.mxu0 0
    %2053 = vmatmul.mubr.bf16.gmra.mxu0 %v2015
    %v2054 = vpop.f32.mrf.mxu0
    %v2055 = vadd.f32 0.0, %v2054
    %v2056 = vpop.f32.mrf.mxu0
    %v2057 = vpop.f32.mrf.mxu0
    %v2058 = vpop.f32.mrf.mxu0
    %2059 = vdwg.mxu0
    %v2060 = vpack.c.bf16 %v1365, %v1365
    %v2061 = vpack.c.bf16 %v1411, %v1411
    %2062 = vst.msk [vmem:[#allocation5] sm:$0xf] %vm123, %v2060
    %2063 = vst.msk [vmem:[#allocation5 + $0x4] sm:$0xf] %vm123, %v2061
    %v2064 = vpack.c.bf16 %v1457, %v1457
    %v2065 = vpack.c.bf16 %v1503, %v1503
    %v2068 = vunpack.c.l.b16 %v2064
    %v2069 = vunpack.c.l.b16 %v2065
    %v2070 = vpack.c.b16 %v2068, %v2068
    %v2071 = vpack.c.b16 %v2069, %v2069
    %2072 = vrot.lane.b32.xlu0 %v2070, 4
    %v2073 = vpop.permute.xlu0 %2072
    %2074 = vrot.lane.b32.xlu0 %v2071, 4
    %v2075 = vpop.permute.xlu0 %2074
    %vm2078 = vcmask 60448
    %2079 = vst.msk [vmem:[#allocation5] sm:$0xf] %vm2078, %v2073
    %2080 = vst.msk [vmem:[#allocation5 + $0x4] sm:$0xf] %vm2078, %v2075
    %v2081 = vpack.c.bf16 %v1549, %v1549
    %v2082 = vpack.c.bf16 %v1595, %v1595
    %v2085 = vunpack.c.l.b16 %v2081
    %v2086 = vunpack.c.l.b16 %v2082
    %v2087 = vpack.c.b16 %v2085, %v2085
    %v2088 = vpack.c.b16 %v2086, %v2086
    %2089 = vrot.lane.b32.xlu0 %v2087, 8
    %v2090 = vpop.permute.xlu0 %2089
    %2091 = vrot.lane.b32.xlu0 %v2088, 8
    %v2092 = vpop.permute.xlu0 %2091
    %vm2095 = vcmask 93248
    %2096 = vst.msk [vmem:[#allocation5] sm:$0xf] %vm2095, %v2090
    %2097 = vst.msk [vmem:[#allocation5 + $0x4] sm:$0xf] %vm2095, %v2092
    %v2098 = vpack.c.bf16 %v1641, %v1641
    %v2099 = vpack.c.bf16 %v1687, %v1687
    %v2102 = vunpack.c.l.b16 %v2098
    %v2103 = vunpack.c.l.b16 %v2099
    %v2104 = vpack.c.b16 %v2102, %v2102
    %v2105 = vpack.c.b16 %v2103, %v2103
    %2106 = vrot.lane.b32.xlu0 %v2104, 12
    %v2107 = vpop.permute.xlu0 %2106
    %2108 = vrot.lane.b32.xlu0 %v2105, 12
    %v2109 = vpop.permute.xlu0 %2108
    %vm2112 = vcmask 126048
    %2113 = vst.msk [vmem:[#allocation5] sm:$0xf] %vm2112, %v2107
    %2114 = vst.msk [vmem:[#allocation5 + $0x4] sm:$0xf] %vm2112, %v2109
    %v2115 = vpack.c.bf16 %v1733, %v1733
    %v2116 = vpack.c.bf16 %v1779, %v1779
    %v2119 = vunpack.c.l.b16 %v2115
    %v2120 = vunpack.c.l.b16 %v2116
    %v2121 = vpack.c.b16 %v2119, %v2119
    %v2122 = vpack.c.b16 %v2120, %v2120
    %2123 = vrot.lane.b32.xlu0 %v2121, 16
    %v2124 = vpop.permute.xlu0 %2123
    %2125 = vrot.lane.b32.xlu0 %v2122, 16
    %v2126 = vpop.permute.xlu0 %2125
    %vm2129 = vcmask 158848
    %2130 = vst.msk [vmem:[#allocation5] sm:$0xf] %vm2129, %v2124
    %2131 = vst.msk [vmem:[#allocation5 + $0x4] sm:$0xf] %vm2129, %v2126
    %v2132 = vpack.c.bf16 %v1825, %v1825
    %v2133 = vpack.c.bf16 %v1871, %v1871
    %v2136 = vunpack.c.l.b16 %v2132
    %v2137 = vunpack.c.l.b16 %v2133
    %v2138 = vpack.c.b16 %v2136, %v2136
    %v2139 = vpack.c.b16 %v2137, %v2137
    %2140 = vrot.lane.b32.xlu0 %v2138, 20
    %v2141 = vpop.permute.xlu0 %2140
    %2142 = vrot.lane.b32.xlu0 %v2139, 20
    %v2143 = vpop.permute.xlu0 %2142
    %vm2146 = vcmask 191648
    %2147 = vst.msk [vmem:[#allocation5] sm:$0xf] %vm2146, %v2141
    %2148 = vst.msk [vmem:[#allocation5 + $0x4] sm:$0xf] %vm2146, %v2143
    %v2149 = vpack.c.bf16 %v1917, %v1917
    %v2150 = vpack.c.bf16 %v1963, %v1963
    %v2153 = vunpack.c.l.b16 %v2149
    %v2154 = vunpack.c.l.b16 %v2150
    %v2155 = vpack.c.b16 %v2153, %v2153
    %v2156 = vpack.c.b16 %v2154, %v2154
    %2157 = vrot.lane.b32.xlu0 %v2155, 24
    %v2158 = vpop.permute.xlu0 %2157
    %2159 = vrot.lane.b32.xlu0 %v2156, 24
    %v2160 = vpop.permute.xlu0 %2159
    %vm2163 = vcmask 224448
    %2164 = vst.msk [vmem:[#allocation5] sm:$0xf] %vm2163, %v2158
    %2165 = vst.msk [vmem:[#allocation5 + $0x4] sm:$0xf] %vm2163, %v2160
    %v2166 = vpack.c.bf16 %v2009, %v2009
    %v2167 = vpack.c.bf16 %v2055, %v2055
    %v2170 = vunpack.c.l.b16 %v2166
    %v2171 = vunpack.c.l.b16 %v2167
    %v2172 = vpack.c.b16 %v2170, %v2170
    %v2173 = vpack.c.b16 %v2171, %v2171
    %2174 = vrot.lane.b32.xlu0 %v2172, 28
    %v2175 = vpop.permute.xlu0 %2174
    %2176 = vrot.lane.b32.xlu0 %v2173, 28
    %v2177 = vpop.permute.xlu0 %2176
    %vm2180 = vcmask 257248
    %2181 = vst.msk [vmem:[#allocation5] sm:$0xf] %vm2180, %v2175
    %2182 = vst.msk [vmem:[#allocation5 + $0x4] sm:$0xf] %vm2180, %v2177
    %v2183 = vld [vmem:[#allocation5] sm:$0xf]
    %v2184 = vld [vmem:[#allocation5 + $0x4] sm:$0xf]
    %v2185 = vld [vmem:[%s3] sm:$0xf]
    %v2186 = vld [vmem:[%s3 + $0x4] sm:$0xf]
    %v2187 = vld [vmem:[%s3 + $0x8] sm:$0xf]
    %v2188 = vld [vmem:[%s3 + $0xc] sm:$0xf]
    %v2189 = vld [vmem:[%s4] sm:$0x1]
    %v2191 = vlaneseq
    %v2192 = vshrl.u32 %v2191, 7
    %v2193 = vsub.s32 0, %v2192
    %v2194 = vrot.slane %v2189, %v2193
    %v2198 = vunpack.c.l.b16 %v2183
    %v2199 = vunpack.c.l.b16 %v2184
    %v2200 = vpack.c.b16 %v2199, %v2198
    %v2205 = vunpack.c.l.b16 %v2185
    %v2206 = vunpack.c.l.b16 %v2186
    %v2207 = vunpack.c.l.b16 %v2187
    %v2208 = vunpack.c.l.b16 %v2188
    %v2209 = vpack.c.b16 %v2206, %v2205
    %v2210 = vpack.c.b16 %v2208, %v2207
    %v2214 = vsel %vm74, %v2200, 0
    %2216 = vmatprep.subr.bf16.mxu0 0
    %2217 = vmatpush1.bf16.msra.mxu0 0
    %2218 = vmatprep.subr.bf16.mxu0 0
    %2219 = vmatpush1.bf16.msra.mxu0 0
    %2220 = vmatprep.subr.bf16.mxu0 0
    %2221 = vmatpush1.bf16.msra.mxu0 0
    %2222 = vmatprep.subr.bf16.mxu0 0
    %2223 = vmatpush1.bf16.msra.mxu0 0
    %2224 = vmatprep.subr.bf16.mxu0 0
    %2225 = vmatpush1.bf16.msra.mxu0 0
    %2226 = vmatprep.subr.bf16.mxu0 0
    %2227 = vmatpush1.bf16.msra.mxu0 0
    %2228 = vmatprep.subr.bf16.mxu0 0
    %2229 = vmatpush1.bf16.msra.mxu0 %v2210
    %2230 = vmatprep.subr.bf16.mxu0 0
    %2231 = vmatpush1.bf16.msra.mxu0 %v2209
    %2232 = vmatprep.subr.bf16.mxu0 0
    %2233 = vmatpush2.bf16.msra.mxu0 0
    %2234 = vmatprep.subr.bf16.mxu0 0
    %2235 = vmatpush2.bf16.msra.mxu0 0
    %2236 = vmatprep.subr.bf16.mxu0 0
    %2237 = vmatpush2.bf16.msra.mxu0 0
    %2238 = vmatprep.subr.bf16.mxu0 0
    %2239 = vmatpush2.bf16.msra.mxu0 0
    %2240 = vmatprep.subr.bf16.mxu0 0
    %2241 = vmatpush2.bf16.msra.mxu0 0
    %2242 = vmatprep.subr.bf16.mxu0 0
    %2243 = vmatpush2.bf16.msra.mxu0 0
    %2244 = vmatprep.subr.bf16.mxu0 0
    %2245 = vmatpush2.bf16.msra.mxu0 0
    %2246 = vmatprep.subr.bf16.mxu0 0
    %2247 = vmatpush2.bf16.msra.mxu0 0
    %2248 = vmatprep.mubr.bf16.mxu0 0
    %2249 = vmatmul.mubr.bf16.gmra.mxu0 %v2214
    %v2250 = vpop.f32.mrf.mxu0
    %v2251 = vadd.f32 %v2194, %v2250
    %v2252 = vpop.f32.mrf.mxu0
    %v2253 = vpop.f32.mrf.mxu0
    %v2254 = vadd.f32 %v2194, %v2253
    %v2255 = vpop.f32.mrf.mxu0
    %2256 = vdwg.mxu0
    %v2257 = vadd.f32 %v2251, %v48
    %v2258 = vadd.f32 %v2254, %v49
    %v2259 = vpack.c.bf16 %v2258, %v2257
    %v2260 = vld [vmem:[#allocation6] sm:$0xf]
    %v2261 = vld [vmem:[#allocation6 + $0x4] sm:$0xf]
    %v2262 = vld [vmem:[#allocation6 + $0x8] sm:$0xf]
    %v2263 = vld [vmem:[#allocation6 + $0xc] sm:$0xf]
    %v2264 = vld [vmem:[%s6] sm:$0x1]
    %v2266 = vlaneseq
    %v2267 = vshrl.u32 %v2266, 7
    %v2268 = vsub.s32 0, %v2267
    %v2269 = vrot.slane %v2264, %v2268
    %v2275 = vunpack.c.l.b16 %v2260
    %v2276 = vunpack.c.l.b16 %v2261
    %v2277 = vunpack.c.l.b16 %v2262
    %v2278 = vunpack.c.l.b16 %v2263
    %v2279 = vpack.c.b16 %v2276, %v2275
    %v2280 = vpack.c.b16 %v2278, %v2277
    %v2284 = vsel %vm74, %v2259, 0
    %2286 = vmatprep.subr.bf16.mxu0 0
    %2287 = vmatpush1.bf16.msra.mxu0 0
    %2288 = vmatprep.subr.bf16.mxu0 0
    %2289 = vmatpush1.bf16.msra.mxu0 0
    %2290 = vmatprep.subr.bf16.mxu0 0
    %2291 = vmatpush1.bf16.msra.mxu0 0
    %2292 = vmatprep.subr.bf16.mxu0 0
    %2293 = vmatpush1.bf16.msra.mxu0 0
    %2294 = vmatprep.subr.bf16.mxu0 0
    %2295 = vmatpush1.bf16.msra.mxu0 0
    %2296 = vmatprep.subr.bf16.mxu0 0
    %2297 = vmatpush1.bf16.msra.mxu0 0
    %2298 = vmatprep.subr.bf16.mxu0 0
    %2299 = vmatpush1.bf16.msra.mxu0 %v2280
    %2300 = vmatprep.subr.bf16.mxu0 0
    %2301 = vmatpush1.bf16.msra.mxu0 %v2279
    %2302 = vmatprep.subr.bf16.mxu0 0
    %2303 = vmatpush2.bf16.msra.mxu0 0
    %2304 = vmatprep.subr.bf16.mxu0 0
    %2305 = vmatpush2.bf16.msra.mxu0 0
    %2306 = vmatprep.subr.bf16.mxu0 0
    %2307 = vmatpush2.bf16.msra.mxu0 0
    %2308 = vmatprep.subr.bf16.mxu0 0
    %2309 = vmatpush2.bf16.msra.mxu0 0
    %2310 = vmatprep.subr.bf16.mxu0 0
    %2311 = vmatpush2.bf16.msra.mxu0 0
    %2312 = vmatprep.subr.bf16.mxu0 0
    %2313 = vmatpush2.bf16.msra.mxu0 0
    %2314 = vmatprep.subr.bf16.mxu0 0
    %2315 = vmatpush2.bf16.msra.mxu0 0
    %2316 = vmatprep.subr.bf16.mxu0 0
    %2317 = vmatpush2.bf16.msra.mxu0 0
    %2318 = vmatprep.mubr.bf16.mxu0 0
    %2319 = vmatmul.mubr.bf16.gmra.mxu0 %v2284
    %v2320 = vpop.f32.mrf.mxu0
    %v2321 = vadd.f32 %v2269, %v2320
    %v2322 = vpop.f32.mrf.mxu0
    %v2323 = vpop.f32.mrf.mxu0
    %v2324 = vadd.f32 %v2269, %v2323
    %v2325 = vpop.f32.mrf.mxu0
    %2326 = vdwg.mxu0
    %v2327 = vmul.f32 %v2321, 0.5
    %v2328 = vmul.f32 %v2324, 0.5
    %v2329 = vrcp.pop 1.4142135
    %v2330 = vmul.f32 %v2321, %v2329
    %v2331 = vmul.f32 %v2324, %v2329
    %v2332 = verf.f32.pop %v2330
    %v2333 = verf.f32.pop %v2331
    %v2334 = vadd.f32 %v2332, 1.0
    %v2335 = vadd.f32 %v2333, 1.0
    %v2336 = vmul.f32 %v2327, %v2334
    %v2337 = vmul.f32 %v2328, %v2335
    %v2338 = vpack.c.bf16 %v2337, %v2336
    %v2339 = vld [vmem:[%s7] sm:$0xf]
    %v2340 = vld [vmem:[%s7 + $0x4] sm:$0xf]
    %v2341 = vld [vmem:[%s7 + $0x8] sm:$0xf]
    %v2342 = vld [vmem:[%s7 + $0xc] sm:$0xf]
    %v2343 = vld [vmem:[%s7 + $0x10] sm:$0xf]
    %v2344 = vld [vmem:[%s7 + $0x14] sm:$0xf]
    %v2345 = vld [vmem:[%s7 + $0x18] sm:$0xf]
    %v2346 = vld [vmem:[%s7 + $0x1c] sm:$0xf]
    %v2347 = vld [vmem:[%s8] sm:$0x1]
    %v2349 = vlaneseq
    %v2350 = vshrl.u32 %v2349, 7
    %v2351 = vsub.s32 0, %v2350
    %v2352 = vrot.slane %v2347, %v2351
    %v2362 = vunpack.c.l.b16 %v2339
    %v2363 = vunpack.c.l.b16 %v2340
    %v2364 = vunpack.c.l.b16 %v2341
    %v2365 = vunpack.c.l.b16 %v2342
    %v2366 = vunpack.c.l.b16 %v2343
    %v2367 = vunpack.c.l.b16 %v2344
    %v2368 = vunpack.c.l.b16 %v2345
    %v2369 = vunpack.c.l.b16 %v2346
    %v2370 = vpack.c.b16 %v2363, %v2362
    %v2371 = vpack.c.b16 %v2365, %v2364
    %v2372 = vpack.c.b16 %v2367, %v2366
    %v2373 = vpack.c.b16 %v2369, %v2368
    %vm2378 = vcmask 523264
    %v2380 = vsel %vm2378, %v2338, 0
    %2382 = vmatprep.subr.bf16.mxu0 0
    %2383 = vmatpush1.bf16.msra.mxu0 0
    %2384 = vmatprep.subr.bf16.mxu0 0
    %2385 = vmatpush1.bf16.msra.mxu0 0
    %2386 = vmatprep.subr.bf16.mxu0 0
    %2387 = vmatpush1.bf16.msra.mxu0 0
    %2388 = vmatprep.subr.bf16.mxu0 0
    %2389 = vmatpush1.bf16.msra.mxu0 0
    %2390 = vmatprep.subr.bf16.mxu0 0
    %2391 = vmatpush1.bf16.msra.mxu0 %v2373
    %2392 = vmatprep.subr.bf16.mxu0 0
    %2393 = vmatpush1.bf16.msra.mxu0 %v2372
    %2394 = vmatprep.subr.bf16.mxu0 0
    %2395 = vmatpush1.bf16.msra.mxu0 %v2371
    %2396 = vmatprep.subr.bf16.mxu0 0
    %2397 = vmatpush1.bf16.msra.mxu0 %v2370
    %2398 = vmatprep.subr.bf16.mxu0 0
    %2399 = vmatpush2.bf16.msra.mxu0 0
    %2400 = vmatprep.subr.bf16.mxu0 0
    %2401 = vmatpush2.bf16.msra.mxu0 0
    %2402 = vmatprep.subr.bf16.mxu0 0
    %2403 = vmatpush2.bf16.msra.mxu0 0
    %2404 = vmatprep.subr.bf16.mxu0 0
    %2405 = vmatpush2.bf16.msra.mxu0 0
    %2406 = vmatprep.subr.bf16.mxu0 0
    %2407 = vmatpush2.bf16.msra.mxu0 0
    %2408 = vmatprep.subr.bf16.mxu0 0
    %2409 = vmatpush2.bf16.msra.mxu0 0
    %2410 = vmatprep.subr.bf16.mxu0 0
    %2411 = vmatpush2.bf16.msra.mxu0 0
    %2412 = vmatprep.subr.bf16.mxu0 0
    %2413 = vmatpush2.bf16.msra.mxu0 0
    %2414 = vmatprep.mubr.bf16.mxu0 0
    %2415 = vmatmul.mubr.bf16.gmra.mxu0 %v2380
    %v2416 = vpop.f32.mrf.mxu0
    %v2417 = vadd.f32 %v2352, %v2416
    %v2418 = vpop.f32.mrf.mxu0
    %v2419 = vpop.f32.mrf.mxu0
    %v2420 = vadd.f32 %v2352, %v2419
    %v2421 = vpop.f32.mrf.mxu0
    %2422 = vdwg.mxu0
    %v2423 = vmul.f32 %v2417, 0.5
    %v2424 = vmul.f32 %v2420, 0.5
    %v2425 = vmul.f32 %v2417, %v2329
    %v2426 = vmul.f32 %v2420, %v2329
    %v2427 = verf.f32.pop %v2425
    %v2428 = verf.f32.pop %v2426
    %v2429 = vadd.f32 %v2427, 1.0
    %v2430 = vadd.f32 %v2428, 1.0
    %v2431 = vmul.f32 %v2423, %v2429
    %v2432 = vmul.f32 %v2424, %v2430
    %v2433 = vadd.f32 %v2431, %v2257
    %v2434 = vadd.f32 %v2432, %v2258
    %2435 = vst.msk [vmem:[#allocation9] sm:$0xff] %vm74, %v2433
    %2436 = vst.msk [vmem:[#allocation9 + $0x8] sm:$0xff] %vm74, %v2434
    // Predicated region
    $region42: #{tpu_custom_call.1} parent=1 // pred_check
      _
    $region43: #{tpu_custom_call.1} parent=1 // pred_check_branch
      %2438 = sbr.rel (0) target = $region45
    $region44: #{tpu_custom_call.1} parent=1 // pred_region
      %s2440 = ssub.s32 256, 256
      %2441 = vsyncadd [#allocation8], %s2440
      %s2442 = sshll.u32 [#allocation9], 4
      %s2443 = int_to_ptr.vmem [resolvable:$true] %s2442
      %2448 = dma.vmem_to_hbm [thread:$0]  %s2443, 256, %s9, [#allocation8], 128, 128, 8
    $region45: #{tpu_custom_call.1} parent=1 // pred_fallthru
      _
    // Predicated region
    $region46: #{tpu_custom_call.1} parent=1 // pred_check
      _
    $region47: #{tpu_custom_call.1} parent=1 // pred_check_branch
      %2450 = sbr.rel (0) target = $region49
    $region48: #{tpu_custom_call.1} parent=1 // pred_region
      %2451 = dma.done [#allocation8], 256
    $region49: #{tpu_custom_call.1} parent=1 // pred_fallthru
      _
    %2452 = vsyncpa [#allocation7], 1
    %2453 = vsyncpa [#allocation8], 1

</llo_original>
